<compile_context>
chip_gen: v6e
topology: v6e:2x2x1
jax: 0.10.0
libtpu: 0.0.40
codegen_flags: <defaults>
</compile_context>

<pallas_src>
import jax
import jax.numpy as jnp
from jax import lax
from jax.experimental import pallas as pl
from jax.experimental.pallas import tpu as pltpu


def _sigmoid(x):
    return 1.0 / (1.0 + jnp.exp(-x))


def _make_kernel(H, W, c_nn, c_co, layout, affine_eps, bt):
    """layout: list of (row_offset, cout, width=K+1, is_3x3) for the packed
    weight matrix, in order [fn_w1, fn_w2, fn_w3, f_w1, f_w2, f_w3]."""
    HW = H * W
    taps = [(t // 3 - 1, t % 3 - 1) for t in range(9)]

    def kernel(z_ref, ft_ref, w_ref, m_ref, out_ref, ld_ref):
        # Hoisted constants (reused across the bt samples of this grid step).
        masks = [m_ref[t:t + 1, :] for t in range(9)]                # (1, HW)
        wmats = [w_ref[r0:r0 + co, :wd] for (r0, co, wd, _) in layout]

        def tap_inputs(x):
            """The 9 masked, lane-rolled copies of a (cin, HW) slab."""
            outs = []
            for t, (dy, dx) in enumerate(taps):
                off = dy * W + dx
                if off == 0:
                    outs.append(x)                    # center tap: no roll/mask
                else:
                    r = pltpu.roll(x, shift=(-off) % HW, axis=1)
                    outs.append(r * masks[t])
            return outs

        def conv(x, idx):
            """'same' conv of a (cin, HW) slab -> (cout, HW); bias included."""
            is3 = layout[idx][3]
            w = wmats[idx]
            cin = x.shape[0]
            k = 9 * cin if is3 else cin
            if not is3:                               # 1x1 conv == matmul
                acc = jnp.dot(w[:, :cin], x,
                              preferred_element_type=jnp.float32)
            elif cin % 8 == 0:
                # im2col: 9 sublane-aligned pieces -> one MXU matmul.
                slab = jnp.concatenate(tap_inputs(x), axis=0)
                acc = jnp.dot(w[:, :k], slab,
                              preferred_element_type=jnp.float32)
            else:
                # cin not sublane-aligned (e.g. 2-channel z1): per-tap chain.
                acc = None
                for t, xt in enumerate(tap_inputs(x)):
                    d = jnp.dot(w[:, t * cin:(t + 1) * cin], xt,
                                preferred_element_type=jnp.float32)
                    acc = d if acc is None else acc + d
            return acc + w[:, k:k + 1]                # lane-broadcast bias add

        for s in range(bt):                           # static, python-unrolled
            ft = ft_ref[s]                            # (c_rrdb, HW)
            zs = z_ref[s]                             # (c_in,  HW)
            z1 = zs[:c_nn]
            z2 = zs[c_nn:]

            # fNorm(ft): conv3x3 -> ReLU -> conv1x1 -> ReLU -> Conv2dZeros
            # (ActNorm / Zeros scaling pre-folded, rows pre-permuted even|odd).
            h = jnp.maximum(conv(ft, 0), 0.0)
            h = jnp.maximum(conv(h, 1), 0.0)
            h = conv(h, 2)
            shift_ft = h[:c_nn]
            scale_ft = _sigmoid(h[c_nn:] + 2.0) + affine_eps
            z1m = (z1 + shift_ft) * scale_ft

            # f(z1'): conv3x3 -> ReLU -> conv(k_hidden) -> ReLU -> Conv2dZeros
            g = jnp.maximum(conv(z1m, 3), 0.0)
            g = jnp.maximum(conv(g, 4), 0.0)
            g = conv(g, 5)
            shift = g[:c_co]
            scale = _sigmoid(g[c_co:] + 2.0) + affine_eps

            # Coupling (forward): only the transformed half leaves the kernel.
            out_ref[s] = (z2 + shift) * scale
            # Partial logdet: channel reduce here, lane reduce in the wrapper.
            ld_ref[s] = jnp.sum(jnp.log(scale), axis=0, keepdims=True)

    return kernel


def _tap_masks(H, W):
    """(9, H*W) validity masks for the 9 conv taps in the flat-HW layout."""
    idx = jnp.arange(H * W, dtype=jnp.int32)
    yy, xx = idx // W, idx % W
    rows = []
    for t in range(9):
        dy, dx = t // 3 - 1, t % 3 - 1
        ok = ((yy + dy >= 0) & (yy + dy < H) & (xx + dx >= 0) & (xx + dx < W))
        rows.append(ok.astype(jnp.float32))
    return jnp.stack(rows, axis=0)


def _prep_params(params, c_nn, c_co):
    """Fold ActNorm / Conv2dZeros scaling into weights+biases, apply the
    'cross' permutation to the final conv of each net, reshape each conv to a
    (cout, 9*cin|cin [+1 bias col]) matrix, and pack everything into one
    constant (rows, lanes) tensor."""

    def fold(wk, bk, lk, zeros=False):
        w, b, l = params[wk], params[bk], params[lk]
        s = jnp.exp(l[0] * (3.0 if zeros else 1.0))   # (cout,)
        return w * s, b[0] * s

    def cross_perm(n2):
        return jnp.concatenate([jnp.arange(0, n2, 2), jnp.arange(1, n2, 2)])

    def to_mat(w, b):
        kh, kw, cin, cout = w.shape
        assert (kh, kw) in ((1, 1), (3, 3)), "only 1x1 / 3x3 convs supported"
        # Columns ordered tap-major then input channel (t*cin + c), matching
        # the kernel's im2col slab; bias appended as the last column.
        w2 = jnp.transpose(w.reshape(kh * kw, cin, cout),
                           (2, 0, 1)).reshape(cout, kh * kw * cin)
        return jnp.concatenate([w2, b[:, None]], axis=1), kh == 3

    convs = [('fn_w1', 'fn_b1', 'fn_l1', False, False),
             ('fn_w2', 'fn_b2', 'fn_l2', False, False),
             ('fn_w3', 'fn_b3', 'fn_l3', True, True),
             ('f_w1', 'f_b1', 'f_l1', False, False),
             ('f_w2', 'f_b2', 'f_l2', False, False),
             ('f_w3', 'f_b3', 'f_l3', True, True)]
    mats, flags = [], []
    for wk, bk, lk, zeros, cross in convs:
        w, b = fold(wk, bk, lk, zeros)
        if cross:                       # 'cross' split -> contiguous halves
            p = cross_perm(w.shape[-1])
            w, b = w[..., p], b[p]
        m, is3 = to_mat(w, b)
        mats.append(m.astype(jnp.float32))
        flags.append(is3)

    width = -(-max(m.shape[1] for m in mats) // 128) * 128
    layout, r = [], 0
    for m, is3 in zip(mats, flags):
        layout.append((r, m.shape[0], m.shape[1], is3))
        r += -(-m.shape[0] // 8) * 8    # keep row offsets sublane-aligned
    rows = -(-r // 8) * 8
    wpack = jnp.zeros((rows, width), jnp.float32)
    for (r0, co, wd, _), m in zip(layout, mats):
        wpack = wpack.at[r0:r0 + co, :wd].set(m)
    return wpack, layout


def _samples_per_step(B):
    """Generation-aware batch fusion: single-TC chips (v5e/v6e) fuse the whole
    batch into one grid step; dual-TC chips (v7x, megacore v4/v5p) keep >=2
    'parallel' grid steps so both TensorCores stay busy."""
    try:
        kind = jax.devices()[0].device_kind.lower()
    except Exception:
        kind = ""
    dual_tc = any(tag in kind for tag in ("v7", "v4", "v5p"))
    if dual_tc:
        return B // 2 if (B % 2 == 0 and B >= 2) else 1
    return B


def cond_norm_affine_coupling_forward(z_nchw, ft_nchw, logdet, params,
                                      affine_eps=1e-4):
    z = z_nchw.astype(jnp.float32)
    ft = ft_nchw.astype(jnp.float32)
    B, c_in, H, W = z.shape
    c_rrdb = ft.shape[1]
    c_nn = c_in // 2
    c_co = c_in - c_nn
    HW = H * W

    wpack, layout = _prep_params(params, c_nn, c_co)
    masks = _tap_masks(H, W)

    bt = _samples_per_step(B)
    G = B // bt
    assert G * bt == B

    # Channels on sublanes, flattened HW on lanes: pure reshapes, no transpose.
    z_flat = z.reshape(B, c_in, HW)
    ft_flat = ft.reshape(B, c_rrdb, HW)

    kernel = _make_kernel(H, W, c_nn, c_co, layout, affine_eps, bt)

    in_specs = [
        pl.BlockSpec((bt, c_in, HW), lambda g: (g, 0, 0)),
        pl.BlockSpec((bt, c_rrdb, HW), lambda g: (g, 0, 0)),
        pl.BlockSpec(wpack.shape, lambda g: (0, 0)),   # constant, DMA'd once
        pl.BlockSpec(masks.shape, lambda g: (0, 0)),   # constant, DMA'd once
    ]
    out_specs = [
        pl.BlockSpec((bt, c_co, HW), lambda g: (g, 0, 0)),
        pl.BlockSpec((bt, 1, HW), lambda g: (g, 0, 0)),
    ]

    z2n, ld_part = pl.pallas_call(
        kernel,
        out_shape=(jax.ShapeDtypeStruct((B, c_co, HW), jnp.float32),
                   jax.ShapeDtypeStruct((B, 1, HW), jnp.float32)),
        grid_spec=pltpu.PrefetchScalarGridSpec(
            num_scalar_prefetch=0,
            grid=(G,),
            in_specs=in_specs,
            out_specs=out_specs,
        ),
        compiler_params=pltpu.CompilerParams(
            dimension_semantics=("parallel",)),
    )(z_flat, ft_flat, wpack, masks)

    # Reattach the untouched z1 half; finish the logdet lane reduction.
    out_nchw = jnp.concatenate(
        [z[:, :c_nn], z2n.reshape(B, c_co, H, W)], axis=1)
    logdet_out = jnp.sum(ld_part.reshape(B, HW), axis=-1) + logdet
    return out_nchw, logdet_out


def init_params(key, c_in, c_rrdb, c_hidden, kernel_hidden=1):
    c_nn = c_in // 2
    c_co = c_in - c_nn
    ks = jax.random.split(key, 18)

    def w(k, shape, std=0.05):
        return jax.random.normal(k, shape, jnp.float32) * std

    def v(k, c, std=0.1):
        return jax.random.normal(k, (1, c), jnp.float32) * std

    return dict(
        # fNorm: Conv2d(rrdb->rrdb,3x3)+ActNorm, Conv2d(rrdb->rrdb,1x1)+ActNorm,
        #        Conv2dZeros(rrdb->2*c_nn,3x3)
        fn_w1=w(ks[0], (3, 3, c_rrdb, c_rrdb)), fn_b1=v(ks[1], c_rrdb), fn_l1=v(ks[2], c_rrdb),
        fn_w2=w(ks[3], (1, 1, c_rrdb, c_rrdb)), fn_b2=v(ks[4], c_rrdb), fn_l2=v(ks[5], c_rrdb),
        fn_w3=w(ks[6], (3, 3, c_rrdb, 2 * c_nn)), fn_b3=v(ks[7], 2 * c_nn), fn_l3=v(ks[8], 2 * c_nn),
        # f: Conv2d(c_nn->hidden,3x3)+ActNorm, Conv2d(hidden->hidden,kh x kh)+ActNorm,
        #    Conv2dZeros(hidden->2*c_co,3x3)
        f_w1=w(ks[9], (3, 3, c_nn, c_hidden)), f_b1=v(ks[10], c_hidden), f_l1=v(ks[11], c_hidden),
        f_w2=w(ks[12], (kernel_hidden, kernel_hidden, c_hidden, c_hidden)),
        f_b2=v(ks[13], c_hidden), f_l2=v(ks[14], c_hidden),
        f_w3=w(ks[15], (3, 3, c_hidden, 2 * c_co)), f_b3=v(ks[16], 2 * c_co), f_l3=v(ks[17], 2 * c_co),
    )


def reference_forward(z_nchw, ft_nchw, logdet, params, affine_eps=1e-4):
    """Pure-JAX reference mirroring the PyTorch module (NCHW in/out)."""
    def conv(x, w):
        return lax.conv_general_dilated(
            x, w, (1, 1), 'SAME',
            dimension_numbers=('NHWC', 'HWIO', 'NHWC'),
            precision=lax.Precision.HIGHEST)

    def actnorm(y, b, l):
        return (y + b.reshape(1, 1, 1, -1)) * jnp.exp(l.reshape(1, 1, 1, -1))

    def czeros(y, b, l):
        return (y + b.reshape(1, 1, 1, -1)) * jnp.exp(l.reshape(1, 1, 1, -1) * 3.0)

    z = jnp.transpose(z_nchw, (0, 2, 3, 1))
    ft = jnp.transpose(ft_nchw, (0, 2, 3, 1))
    c_in = z.shape[-1]
    c_nn = c_in // 2
    z1, z2 = z[..., :c_nn], z[..., c_nn:]

    h = jax.nn.relu(actnorm(conv(ft, params['fn_w1']), params['fn_b1'], params['fn_l1']))
    h = jax.nn.relu(actnorm(conv(h, params['fn_w2']), params['fn_b2'], params['fn_l2']))
    h = czeros(conv(h, params['fn_w3']), params['fn_b3'], params['fn_l3'])
    shift_ft, scale_ft = h[..., 0::2], h[..., 1::2]          # 'cross' split
    scale_ft = _sigmoid(scale_ft + 2.0) + affine_eps
    z1m = (z1 + shift_ft) * scale_ft

    g = jax.nn.relu(actnorm(conv(z1m, params['f_w1']), params['f_b1'], params['f_l1']))
    g = jax.nn.relu(actnorm(conv(g, params['f_w2']), params['f_b2'], params['f_l2']))
    g = czeros(conv(g, params['f_w3']), params['f_b3'], params['f_l3'])
    shift, scale = g[..., 0::2], g[..., 1::2]
    scale = _sigmoid(scale + 2.0) + affine_eps

    z2n = (z2 + shift) * scale
    ld = jnp.sum(jnp.log(scale), axis=(1, 2, 3)) + logdet
    out = jnp.concatenate([z1, z2n], axis=-1)
    return jnp.transpose(out, (0, 3, 1, 2)), ld


if __name__ == "__main__":
    B, C_IN, H, W = 2, 4, 16, 16
    C_RRDB, C_HIDDEN = 8, 32
    AFFINE_EPS = 1e-4

    key = jax.random.PRNGKey(0)
    kp, kz, kf = jax.random.split(key, 3)
    params = init_params(kp, C_IN, C_RRDB, C_HIDDEN, kernel_hidden=1)
    z = jax.random.normal(kz, (B, C_IN, H, W), jnp.float32)
    ft = jax.random.normal(kf, (B, C_RRDB, H, W), jnp.float32)
    logdet0 = jnp.zeros((B,), jnp.float32)

    out, ld = cond_norm_affine_coupling_forward(z, ft, logdet0, params,
                                                affine_eps=AFFINE_EPS)
    jax.block_until_ready((out, ld))

    ref_out, ref_ld = reference_forward(z, ft, logdet0, params,
                                        affine_eps=AFFINE_EPS)
    assert out.shape == (B, C_IN, H, W) and ld.shape == (B,)
    assert jnp.allclose(out, ref_out, atol=2e-3, rtol=2e-3), "output mismatch"
    assert jnp.allclose(ld, ref_ld, atol=2e-3, rtol=2e-3), "logdet mismatch"
    print("KERNEL_OK")
</pallas_src>

<mosaic_0001>
module attributes {stable_mosaic.version = 11 : i64} {
  func.func @kernel(%arg0: i32, %arg1: memref<2x4x256xf32, #tpu.memory_space<vmem>>, %arg2: memref<2x8x256xf32, #tpu.memory_space<vmem>>, %arg3: memref<96x384xf32, #tpu.memory_space<vmem>>, %arg4: memref<9x256xf32, #tpu.memory_space<vmem>>, %arg5: memref<2x2x256xf32, #tpu.memory_space<vmem>>, %arg6: memref<2x1x256xf32, #tpu.memory_space<vmem>>) attributes {dimension_semantics = [#tpu.dimension_semantics<parallel>], iteration_bounds = array<i64: 1>, scalar_prefetch = 0 : i64, scratch_operands = 0 : i64, tpu.core_type = #tpu.core_type<tc>, window_params = [{transform_indices = @transform_0, window_bounds = array<i64: 2, 4, 256>}, {transform_indices = @transform_1, window_bounds = array<i64: 2, 8, 256>}, {pipeline_mode = #tpu.pipeline_mode<synchronous>, transform_indices = @transform_2, window_bounds = array<i64: 96, 384>}, {pipeline_mode = #tpu.pipeline_mode<synchronous>, transform_indices = @transform_3, window_bounds = array<i64: 9, 256>}, {transform_indices = @transform_4, window_bounds = array<i64: 2, 2, 256>}, {transform_indices = @transform_5, window_bounds = array<i64: 2, 1, 256>}]} {
    %c0 = arith.constant 0 : index
    %c0_0 = arith.constant 0 : index
    %0 = vector.load %arg4[%c0, %c0_0] : memref<9x256xf32, #tpu.memory_space<vmem>>, vector<1x256xf32>
    %c1 = arith.constant 1 : index
    %c0_1 = arith.constant 0 : index
    %1 = vector.load %arg4[%c1, %c0_1] : memref<9x256xf32, #tpu.memory_space<vmem>>, vector<1x256xf32>
    %c2 = arith.constant 2 : index
    %c0_2 = arith.constant 0 : index
    %2 = vector.load %arg4[%c2, %c0_2] : memref<9x256xf32, #tpu.memory_space<vmem>>, vector<1x256xf32>
    %c3 = arith.constant 3 : index
    %c0_3 = arith.constant 0 : index
    %3 = vector.load %arg4[%c3, %c0_3] : memref<9x256xf32, #tpu.memory_space<vmem>>, vector<1x256xf32>
    %c5 = arith.constant 5 : index
    %c0_4 = arith.constant 0 : index
    %4 = vector.load %arg4[%c5, %c0_4] : memref<9x256xf32, #tpu.memory_space<vmem>>, vector<1x256xf32>
    %c6 = arith.constant 6 : index
    %c0_5 = arith.constant 0 : index
    %5 = vector.load %arg4[%c6, %c0_5] : memref<9x256xf32, #tpu.memory_space<vmem>>, vector<1x256xf32>
    %c7 = arith.constant 7 : index
    %c0_6 = arith.constant 0 : index
    %6 = vector.load %arg4[%c7, %c0_6] : memref<9x256xf32, #tpu.memory_space<vmem>>, vector<1x256xf32>
    %c8 = arith.constant 8 : index
    %c0_7 = arith.constant 0 : index
    %7 = vector.load %arg4[%c8, %c0_7] : memref<9x256xf32, #tpu.memory_space<vmem>>, vector<1x256xf32>
    %c0_8 = arith.constant 0 : index
    %c0_9 = arith.constant 0 : index
    %8 = vector.load %arg3[%c0_8, %c0_9] : memref<96x384xf32, #tpu.memory_space<vmem>>, vector<8x73xf32>
    %c8_10 = arith.constant 8 : index
    %c0_11 = arith.constant 0 : index
    %9 = vector.load %arg3[%c8_10, %c0_11] : memref<96x384xf32, #tpu.memory_space<vmem>>, vector<8x9xf32>
    %c16 = arith.constant 16 : index
    %c0_12 = arith.constant 0 : index
    %10 = vector.load %arg3[%c16, %c0_12] : memref<96x384xf32, #tpu.memory_space<vmem>>, vector<4x73xf32>
    %c24 = arith.constant 24 : index
    %c0_13 = arith.constant 0 : index
    %11 = vector.load %arg3[%c24, %c0_13] : memref<96x384xf32, #tpu.memory_space<vmem>>, vector<32x19xf32>
    %c56 = arith.constant 56 : index
    %c0_14 = arith.constant 0 : index
    %12 = vector.load %arg3[%c56, %c0_14] : memref<96x384xf32, #tpu.memory_space<vmem>>, vector<32x33xf32>
    %c88 = arith.constant 88 : index
    %c0_15 = arith.constant 0 : index
    %13 = vector.load %arg3[%c88, %c0_15] : memref<96x384xf32, #tpu.memory_space<vmem>>, vector<4x289xf32>
    %c0_16 = arith.constant 0 : index
    %c0_17 = arith.constant 0 : index
    %c0_18 = arith.constant 0 : index
    %14 = vector.load %arg2[%c0_16, %c0_17, %c0_18] : memref<2x8x256xf32, #tpu.memory_space<vmem>>, vector<1x8x256xf32>
    %15 = vector.shape_cast %14 : vector<1x8x256xf32> to vector<8x256xf32>
    %c0_19 = arith.constant 0 : index
    %c0_20 = arith.constant 0 : index
    %c0_21 = arith.constant 0 : index
    %16 = vector.load %arg1[%c0_19, %c0_20, %c0_21] : memref<2x4x256xf32, #tpu.memory_space<vmem>>, vector<1x4x256xf32>
    %17 = vector.shape_cast %16 : vector<1x4x256xf32> to vector<4x256xf32>
    %18 = vector.extract_strided_slice %17 {offsets = [0, 0], sizes = [2, 256], strides = [1, 1]} : vector<4x256xf32> to vector<2x256xf32>
    %19 = vector.extract_strided_slice %17 {offsets = [2, 0], sizes = [2, 256], strides = [1, 1]} : vector<4x256xf32> to vector<2x256xf32>
    %c17_i32 = arith.constant 17 : i32
    %20 = tpu.dynamic_rotate %15 by %c17_i32 dim 1 : vector<8x256xf32>, i32 -> vector<8x256xf32>
    %21 = vector.broadcast %0 : vector<1x256xf32> to vector<8x256xf32>
    %22 = arith.mulf %20, %21 : vector<8x256xf32>
    %c16_i32 = arith.constant 16 : i32
    %23 = tpu.dynamic_rotate %15 by %c16_i32 dim 1 : vector<8x256xf32>, i32 -> vector<8x256xf32>
    %24 = vector.broadcast %1 : vector<1x256xf32> to vector<8x256xf32>
    %25 = arith.mulf %23, %24 : vector<8x256xf32>
    %c15_i32 = arith.constant 15 : i32
    %26 = tpu.dynamic_rotate %15 by %c15_i32 dim 1 : vector<8x256xf32>, i32 -> vector<8x256xf32>
    %27 = vector.broadcast %2 : vector<1x256xf32> to vector<8x256xf32>
    %28 = arith.mulf %26, %27 : vector<8x256xf32>
    %c1_i32 = arith.constant 1 : i32
    %29 = tpu.dynamic_rotate %15 by %c1_i32 dim 1 : vector<8x256xf32>, i32 -> vector<8x256xf32>
    %30 = vector.broadcast %3 : vector<1x256xf32> to vector<8x256xf32>
    %31 = arith.mulf %29, %30 : vector<8x256xf32>
    %c255_i32 = arith.constant 255 : i32
    %32 = tpu.dynamic_rotate %15 by %c255_i32 dim 1 : vector<8x256xf32>, i32 -> vector<8x256xf32>
    %33 = vector.broadcast %4 : vector<1x256xf32> to vector<8x256xf32>
    %34 = arith.mulf %32, %33 : vector<8x256xf32>
    %c241_i32 = arith.constant 241 : i32
    %35 = tpu.dynamic_rotate %15 by %c241_i32 dim 1 : vector<8x256xf32>, i32 -> vector<8x256xf32>
    %36 = vector.broadcast %5 : vector<1x256xf32> to vector<8x256xf32>
    %37 = arith.mulf %35, %36 : vector<8x256xf32>
    %c240_i32 = arith.constant 240 : i32
    %38 = tpu.dynamic_rotate %15 by %c240_i32 dim 1 : vector<8x256xf32>, i32 -> vector<8x256xf32>
    %39 = vector.broadcast %6 : vector<1x256xf32> to vector<8x256xf32>
    %40 = arith.mulf %38, %39 : vector<8x256xf32>
    %c239_i32 = arith.constant 239 : i32
    %41 = tpu.dynamic_rotate %15 by %c239_i32 dim 1 : vector<8x256xf32>, i32 -> vector<8x256xf32>
    %42 = vector.broadcast %7 : vector<1x256xf32> to vector<8x256xf32>
    %43 = arith.mulf %41, %42 : vector<8x256xf32>
    %44 = tpu.concatenate %22, %25, %28, %31, %15, %34, %37, %40, %43 in 0 : vector<8x256xf32>, vector<8x256xf32>, vector<8x256xf32>, vector<8x256xf32>, vector<8x256xf32>, vector<8x256xf32>, vector<8x256xf32>, vector<8x256xf32>, vector<8x256xf32> -> vector<72x256xf32>
    %45 = vector.extract_strided_slice %8 {offsets = [0, 0], sizes = [8, 72], strides = [1, 1]} : vector<8x73xf32> to vector<8x72xf32>
    %cst = arith.constant dense<0.000000e+00> : vector<8x256xf32>
    %46 = tpu.matmul %45, %44, %cst {dimension_numbers = #tpu.dot_dimension_numbers<[1], [0], [0], [1], [0, 0, 1, 1], [], []>} : vector<8x72xf32>, vector<72x256xf32>, vector<8x256xf32> -> vector<8x256xf32>
    %47 = vector.extract_strided_slice %8 {offsets = [0, 72], sizes = [8, 1], strides = [1, 1]} : vector<8x73xf32> to vector<8x1xf32>
    %48 = vector.broadcast %47 : vector<8x1xf32> to vector<8x256xf32>
    %49 = arith.addf %46, %48 : vector<8x256xf32>
    %cst_22 = arith.constant 0.000000e+00 : f32
    %50 = vector.broadcast %cst_22 : f32 to vector<8x256xf32>
    %51 = arith.maximumf %49, %50 : vector<8x256xf32>
    %52 = vector.extract_strided_slice %9 {offsets = [0, 0], sizes = [8, 8], strides = [1, 1]} : vector<8x9xf32> to vector<8x8xf32>
    %cst_23 = arith.constant dense<0.000000e+00> : vector<8x256xf32>
    %53 = tpu.matmul %52, %51, %cst_23 {dimension_numbers = #tpu.dot_dimension_numbers<[1], [0], [0], [1], [0, 0, 1, 1], [], []>} : vector<8x8xf32>, vector<8x256xf32>, vector<8x256xf32> -> vector<8x256xf32>
    %54 = vector.extract_strided_slice %9 {offsets = [0, 8], sizes = [8, 1], strides = [1, 1]} : vector<8x9xf32> to vector<8x1xf32>
    %55 = vector.broadcast %54 : vector<8x1xf32> to vector<8x256xf32>
    %56 = arith.addf %53, %55 : vector<8x256xf32>
    %cst_24 = arith.constant 0.000000e+00 : f32
    %57 = vector.broadcast %cst_24 : f32 to vector<8x256xf32>
    %58 = arith.maximumf %56, %57 : vector<8x256xf32>
    %c17_i32_25 = arith.constant 17 : i32
    %59 = tpu.dynamic_rotate %58 by %c17_i32_25 dim 1 : vector<8x256xf32>, i32 -> vector<8x256xf32>
    %60 = vector.broadcast %0 : vector<1x256xf32> to vector<8x256xf32>
    %61 = arith.mulf %59, %60 : vector<8x256xf32>
    %c16_i32_26 = arith.constant 16 : i32
    %62 = tpu.dynamic_rotate %58 by %c16_i32_26 dim 1 : vector<8x256xf32>, i32 -> vector<8x256xf32>
    %63 = vector.broadcast %1 : vector<1x256xf32> to vector<8x256xf32>
    %64 = arith.mulf %62, %63 : vector<8x256xf32>
    %c15_i32_27 = arith.constant 15 : i32
    %65 = tpu.dynamic_rotate %58 by %c15_i32_27 dim 1 : vector<8x256xf32>, i32 -> vector<8x256xf32>
    %66 = vector.broadcast %2 : vector<1x256xf32> to vector<8x256xf32>
    %67 = arith.mulf %65, %66 : vector<8x256xf32>
    %c1_i32_28 = arith.constant 1 : i32
    %68 = tpu.dynamic_rotate %58 by %c1_i32_28 dim 1 : vector<8x256xf32>, i32 -> vector<8x256xf32>
    %69 = vector.broadcast %3 : vector<1x256xf32> to vector<8x256xf32>
    %70 = arith.mulf %68, %69 : vector<8x256xf32>
    %c255_i32_29 = arith.constant 255 : i32
    %71 = tpu.dynamic_rotate %58 by %c255_i32_29 dim 1 : vector<8x256xf32>, i32 -> vector<8x256xf32>
    %72 = vector.broadcast %4 : vector<1x256xf32> to vector<8x256xf32>
    %73 = arith.mulf %71, %72 : vector<8x256xf32>
    %c241_i32_30 = arith.constant 241 : i32
    %74 = tpu.dynamic_rotate %58 by %c241_i32_30 dim 1 : vector<8x256xf32>, i32 -> vector<8x256xf32>
    %75 = vector.broadcast %5 : vector<1x256xf32> to vector<8x256xf32>
    %76 = arith.mulf %74, %75 : vector<8x256xf32>
    %c240_i32_31 = arith.constant 240 : i32
    %77 = tpu.dynamic_rotate %58 by %c240_i32_31 dim 1 : vector<8x256xf32>, i32 -> vector<8x256xf32>
    %78 = vector.broadcast %6 : vector<1x256xf32> to vector<8x256xf32>
    %79 = arith.mulf %77, %78 : vector<8x256xf32>
    %c239_i32_32 = arith.constant 239 : i32
    %80 = tpu.dynamic_rotate %58 by %c239_i32_32 dim 1 : vector<8x256xf32>, i32 -> vector<8x256xf32>
    %81 = vector.broadcast %7 : vector<1x256xf32> to vector<8x256xf32>
    %82 = arith.mulf %80, %81 : vector<8x256xf32>
    %83 = tpu.concatenate %61, %64, %67, %70, %58, %73, %76, %79, %82 in 0 : vector<8x256xf32>, vector<8x256xf32>, vector<8x256xf32>, vector<8x256xf32>, vector<8x256xf32>, vector<8x256xf32>, vector<8x256xf32>, vector<8x256xf32>, vector<8x256xf32> -> vector<72x256xf32>
    %84 = vector.extract_strided_slice %10 {offsets = [0, 0], sizes = [4, 72], strides = [1, 1]} : vector<4x73xf32> to vector<4x72xf32>
    %cst_33 = arith.constant dense<0.000000e+00> : vector<4x256xf32>
    %85 = tpu.matmul %84, %83, %cst_33 {dimension_numbers = #tpu.dot_dimension_numbers<[1], [0], [0], [1], [0, 0, 1, 1], [], []>} : vector<4x72xf32>, vector<72x256xf32>, vector<4x256xf32> -> vector<4x256xf32>
    %86 = vector.extract_strided_slice %10 {offsets = [0, 72], sizes = [4, 1], strides = [1, 1]} : vector<4x73xf32> to vector<4x1xf32>
    %87 = vector.broadcast %86 : vector<4x1xf32> to vector<4x256xf32>
    %88 = arith.addf %85, %87 : vector<4x256xf32>
    %89 = vector.extract_strided_slice %88 {offsets = [0, 0], sizes = [2, 256], strides = [1, 1]} : vector<4x256xf32> to vector<2x256xf32>
    %90 = vector.extract_strided_slice %88 {offsets = [2, 0], sizes = [2, 256], strides = [1, 1]} : vector<4x256xf32> to vector<2x256xf32>
    %cst_34 = arith.constant 2.000000e+00 : f32
    %91 = vector.broadcast %cst_34 : f32 to vector<2x256xf32>
    %92 = arith.addf %90, %91 : vector<2x256xf32>
    %cst_35 = arith.constant 0.000000e+00 : f32
    %93 = vector.broadcast %cst_35 : f32 to vector<2x256xf32>
    %94 = arith.subf %93, %92 : vector<2x256xf32>
    %95 = math.exp %94 : vector<2x256xf32>
    %cst_36 = arith.constant 1.000000e+00 : f32
    %96 = vector.broadcast %cst_36 : f32 to vector<2x256xf32>
    %97 = arith.addf %96, %95 : vector<2x256xf32>
    %cst_37 = arith.constant 1.000000e+00 : f32
    %98 = vector.broadcast %cst_37 : f32 to vector<2x256xf32>
    %99 = arith.divf %98, %97 : vector<2x256xf32>
    %cst_38 = arith.constant 9.99999974E-5 : f32
    %100 = vector.broadcast %cst_38 : f32 to vector<2x256xf32>
    %101 = arith.addf %99, %100 : vector<2x256xf32>
    %102 = arith.addf %18, %89 : vector<2x256xf32>
    %103 = arith.mulf %102, %101 : vector<2x256xf32>
    %c17_i32_39 = arith.constant 17 : i32
    %104 = tpu.dynamic_rotate %103 by %c17_i32_39 dim 1 : vector<2x256xf32>, i32 -> vector<2x256xf32>
    %105 = vector.broadcast %0 : vector<1x256xf32> to vector<2x256xf32>
    %106 = arith.mulf %104, %105 : vector<2x256xf32>
    %c16_i32_40 = arith.constant 16 : i32
    %107 = tpu.dynamic_rotate %103 by %c16_i32_40 dim 1 : vector<2x256xf32>, i32 -> vector<2x256xf32>
    %108 = vector.broadcast %1 : vector<1x256xf32> to vector<2x256xf32>
    %109 = arith.mulf %107, %108 : vector<2x256xf32>
    %c15_i32_41 = arith.constant 15 : i32
    %110 = tpu.dynamic_rotate %103 by %c15_i32_41 dim 1 : vector<2x256xf32>, i32 -> vector<2x256xf32>
    %111 = vector.broadcast %2 : vector<1x256xf32> to vector<2x256xf32>
    %112 = arith.mulf %110, %111 : vector<2x256xf32>
    %c1_i32_42 = arith.constant 1 : i32
    %113 = tpu.dynamic_rotate %103 by %c1_i32_42 dim 1 : vector<2x256xf32>, i32 -> vector<2x256xf32>
    %114 = vector.broadcast %3 : vector<1x256xf32> to vector<2x256xf32>
    %115 = arith.mulf %113, %114 : vector<2x256xf32>
    %c255_i32_43 = arith.constant 255 : i32
    %116 = tpu.dynamic_rotate %103 by %c255_i32_43 dim 1 : vector<2x256xf32>, i32 -> vector<2x256xf32>
    %117 = vector.broadcast %4 : vector<1x256xf32> to vector<2x256xf32>
    %118 = arith.mulf %116, %117 : vector<2x256xf32>
    %c241_i32_44 = arith.constant 241 : i32
    %119 = tpu.dynamic_rotate %103 by %c241_i32_44 dim 1 : vector<2x256xf32>, i32 -> vector<2x256xf32>
    %120 = vector.broadcast %5 : vector<1x256xf32> to vector<2x256xf32>
    %121 = arith.mulf %119, %120 : vector<2x256xf32>
    %c240_i32_45 = arith.constant 240 : i32
    %122 = tpu.dynamic_rotate %103 by %c240_i32_45 dim 1 : vector<2x256xf32>, i32 -> vector<2x256xf32>
    %123 = vector.broadcast %6 : vector<1x256xf32> to vector<2x256xf32>
    %124 = arith.mulf %122, %123 : vector<2x256xf32>
    %c239_i32_46 = arith.constant 239 : i32
    %125 = tpu.dynamic_rotate %103 by %c239_i32_46 dim 1 : vector<2x256xf32>, i32 -> vector<2x256xf32>
    %126 = vector.broadcast %7 : vector<1x256xf32> to vector<2x256xf32>
    %127 = arith.mulf %125, %126 : vector<2x256xf32>
    %128 = vector.extract_strided_slice %11 {offsets = [0, 0], sizes = [32, 2], strides = [1, 1]} : vector<32x19xf32> to vector<32x2xf32>
    %cst_47 = arith.constant dense<0.000000e+00> : vector<32x256xf32>
    %129 = tpu.matmul %128, %106, %cst_47 {dimension_numbers = #tpu.dot_dimension_numbers<[1], [0], [0], [1], [0, 0, 1, 1], [], []>} : vector<32x2xf32>, vector<2x256xf32>, vector<32x256xf32> -> vector<32x256xf32>
    %130 = vector.extract_strided_slice %11 {offsets = [0, 2], sizes = [32, 2], strides = [1, 1]} : vector<32x19xf32> to vector<32x2xf32>
    %cst_48 = arith.constant dense<0.000000e+00> : vector<32x256xf32>
    %131 = tpu.matmul %130, %109, %cst_48 {dimension_numbers = #tpu.dot_dimension_numbers<[1], [0], [0], [1], [0, 0, 1, 1], [], []>} : vector<32x2xf32>, vector<2x256xf32>, vector<32x256xf32> -> vector<32x256xf32>
    %132 = arith.addf %129, %131 : vector<32x256xf32>
    %133 = vector.extract_strided_slice %11 {offsets = [0, 4], sizes = [32, 2], strides = [1, 1]} : vector<32x19xf32> to vector<32x2xf32>
    %cst_49 = arith.constant dense<0.000000e+00> : vector<32x256xf32>
    %134 = tpu.matmul %133, %112, %cst_49 {dimension_numbers = #tpu.dot_dimension_numbers<[1], [0], [0], [1], [0, 0, 1, 1], [], []>} : vector<32x2xf32>, vector<2x256xf32>, vector<32x256xf32> -> vector<32x256xf32>
    %135 = arith.addf %132, %134 : vector<32x256xf32>
    %136 = vector.extract_strided_slice %11 {offsets = [0, 6], sizes = [32, 2], strides = [1, 1]} : vector<32x19xf32> to vector<32x2xf32>
    %cst_50 = arith.constant dense<0.000000e+00> : vector<32x256xf32>
    %137 = tpu.matmul %136, %115, %cst_50 {dimension_numbers = #tpu.dot_dimension_numbers<[1], [0], [0], [1], [0, 0, 1, 1], [], []>} : vector<32x2xf32>, vector<2x256xf32>, vector<32x256xf32> -> vector<32x256xf32>
    %138 = arith.addf %135, %137 : vector<32x256xf32>
    %139 = vector.extract_strided_slice %11 {offsets = [0, 8], sizes = [32, 2], strides = [1, 1]} : vector<32x19xf32> to vector<32x2xf32>
    %cst_51 = arith.constant dense<0.000000e+00> : vector<32x256xf32>
    %140 = tpu.matmul %139, %103, %cst_51 {dimension_numbers = #tpu.dot_dimension_numbers<[1], [0], [0], [1], [0, 0, 1, 1], [], []>} : vector<32x2xf32>, vector<2x256xf32>, vector<32x256xf32> -> vector<32x256xf32>
    %141 = arith.addf %138, %140 : vector<32x256xf32>
    %142 = vector.extract_strided_slice %11 {offsets = [0, 10], sizes = [32, 2], strides = [1, 1]} : vector<32x19xf32> to vector<32x2xf32>
    %cst_52 = arith.constant dense<0.000000e+00> : vector<32x256xf32>
    %143 = tpu.matmul %142, %118, %cst_52 {dimension_numbers = #tpu.dot_dimension_numbers<[1], [0], [0], [1], [0, 0, 1, 1], [], []>} : vector<32x2xf32>, vector<2x256xf32>, vector<32x256xf32> -> vector<32x256xf32>
    %144 = arith.addf %141, %143 : vector<32x256xf32>
    %145 = vector.extract_strided_slice %11 {offsets = [0, 12], sizes = [32, 2], strides = [1, 1]} : vector<32x19xf32> to vector<32x2xf32>
    %cst_53 = arith.constant dense<0.000000e+00> : vector<32x256xf32>
    %146 = tpu.matmul %145, %121, %cst_53 {dimension_numbers = #tpu.dot_dimension_numbers<[1], [0], [0], [1], [0, 0, 1, 1], [], []>} : vector<32x2xf32>, vector<2x256xf32>, vector<32x256xf32> -> vector<32x256xf32>
    %147 = arith.addf %144, %146 : vector<32x256xf32>
    %148 = vector.extract_strided_slice %11 {offsets = [0, 14], sizes = [32, 2], strides = [1, 1]} : vector<32x19xf32> to vector<32x2xf32>
    %cst_54 = arith.constant dense<0.000000e+00> : vector<32x256xf32>
    %149 = tpu.matmul %148, %124, %cst_54 {dimension_numbers = #tpu.dot_dimension_numbers<[1], [0], [0], [1], [0, 0, 1, 1], [], []>} : vector<32x2xf32>, vector<2x256xf32>, vector<32x256xf32> -> vector<32x256xf32>
    %150 = arith.addf %147, %149 : vector<32x256xf32>
    %151 = vector.extract_strided_slice %11 {offsets = [0, 16], sizes = [32, 2], strides = [1, 1]} : vector<32x19xf32> to vector<32x2xf32>
    %cst_55 = arith.constant dense<0.000000e+00> : vector<32x256xf32>
    %152 = tpu.matmul %151, %127, %cst_55 {dimension_numbers = #tpu.dot_dimension_numbers<[1], [0], [0], [1], [0, 0, 1, 1], [], []>} : vector<32x2xf32>, vector<2x256xf32>, vector<32x256xf32> -> vector<32x256xf32>
    %153 = arith.addf %150, %152 : vector<32x256xf32>
    %154 = vector.extract_strided_slice %11 {offsets = [0, 18], sizes = [32, 1], strides = [1, 1]} : vector<32x19xf32> to vector<32x1xf32>
    %155 = vector.broadcast %154 : vector<32x1xf32> to vector<32x256xf32>
    %156 = arith.addf %153, %155 : vector<32x256xf32>
    %cst_56 = arith.constant 0.000000e+00 : f32
    %157 = vector.broadcast %cst_56 : f32 to vector<32x256xf32>
    %158 = arith.maximumf %156, %157 : vector<32x256xf32>
    %159 = vector.extract_strided_slice %12 {offsets = [0, 0], sizes = [32, 32], strides = [1, 1]} : vector<32x33xf32> to vector<32x32xf32>
    %cst_57 = arith.constant dense<0.000000e+00> : vector<32x256xf32>
    %160 = tpu.matmul %159, %158, %cst_57 {dimension_numbers = #tpu.dot_dimension_numbers<[1], [0], [0], [1], [0, 0, 1, 1], [], []>} : vector<32x32xf32>, vector<32x256xf32>, vector<32x256xf32> -> vector<32x256xf32>
    %161 = vector.extract_strided_slice %12 {offsets = [0, 32], sizes = [32, 1], strides = [1, 1]} : vector<32x33xf32> to vector<32x1xf32>
    %162 = vector.broadcast %161 : vector<32x1xf32> to vector<32x256xf32>
    %163 = arith.addf %160, %162 : vector<32x256xf32>
    %cst_58 = arith.constant 0.000000e+00 : f32
    %164 = vector.broadcast %cst_58 : f32 to vector<32x256xf32>
    %165 = arith.maximumf %163, %164 : vector<32x256xf32>
    %c17_i32_59 = arith.constant 17 : i32
    %166 = tpu.dynamic_rotate %165 by %c17_i32_59 dim 1 : vector<32x256xf32>, i32 -> vector<32x256xf32>
    %167 = vector.broadcast %0 : vector<1x256xf32> to vector<32x256xf32>
    %168 = arith.mulf %166, %167 : vector<32x256xf32>
    %c16_i32_60 = arith.constant 16 : i32
    %169 = tpu.dynamic_rotate %165 by %c16_i32_60 dim 1 : vector<32x256xf32>, i32 -> vector<32x256xf32>
    %170 = vector.broadcast %1 : vector<1x256xf32> to vector<32x256xf32>
    %171 = arith.mulf %169, %170 : vector<32x256xf32>
    %c15_i32_61 = arith.constant 15 : i32
    %172 = tpu.dynamic_rotate %165 by %c15_i32_61 dim 1 : vector<32x256xf32>, i32 -> vector<32x256xf32>
    %173 = vector.broadcast %2 : vector<1x256xf32> to vector<32x256xf32>
    %174 = arith.mulf %172, %173 : vector<32x256xf32>
    %c1_i32_62 = arith.constant 1 : i32
    %175 = tpu.dynamic_rotate %165 by %c1_i32_62 dim 1 : vector<32x256xf32>, i32 -> vector<32x256xf32>
    %176 = vector.broadcast %3 : vector<1x256xf32> to vector<32x256xf32>
    %177 = arith.mulf %175, %176 : vector<32x256xf32>
    %c255_i32_63 = arith.constant 255 : i32
    %178 = tpu.dynamic_rotate %165 by %c255_i32_63 dim 1 : vector<32x256xf32>, i32 -> vector<32x256xf32>
    %179 = vector.broadcast %4 : vector<1x256xf32> to vector<32x256xf32>
    %180 = arith.mulf %178, %179 : vector<32x256xf32>
    %c241_i32_64 = arith.constant 241 : i32
    %181 = tpu.dynamic_rotate %165 by %c241_i32_64 dim 1 : vector<32x256xf32>, i32 -> vector<32x256xf32>
    %182 = vector.broadcast %5 : vector<1x256xf32> to vector<32x256xf32>
    %183 = arith.mulf %181, %182 : vector<32x256xf32>
    %c240_i32_65 = arith.constant 240 : i32
    %184 = tpu.dynamic_rotate %165 by %c240_i32_65 dim 1 : vector<32x256xf32>, i32 -> vector<32x256xf32>
    %185 = vector.broadcast %6 : vector<1x256xf32> to vector<32x256xf32>
    %186 = arith.mulf %184, %185 : vector<32x256xf32>
    %c239_i32_66 = arith.constant 239 : i32
    %187 = tpu.dynamic_rotate %165 by %c239_i32_66 dim 1 : vector<32x256xf32>, i32 -> vector<32x256xf32>
    %188 = vector.broadcast %7 : vector<1x256xf32> to vector<32x256xf32>
    %189 = arith.mulf %187, %188 : vector<32x256xf32>
    %190 = tpu.concatenate %168, %171, %174, %177, %165, %180, %183, %186, %189 in 0 : vector<32x256xf32>, vector<32x256xf32>, vector<32x256xf32>, vector<32x256xf32>, vector<32x256xf32>, vector<32x256xf32>, vector<32x256xf32>, vector<32x256xf32>, vector<32x256xf32> -> vector<288x256xf32>
    %191 = vector.extract_strided_slice %13 {offsets = [0, 0], sizes = [4, 288], strides = [1, 1]} : vector<4x289xf32> to vector<4x288xf32>
    %cst_67 = arith.constant dense<0.000000e+00> : vector<4x256xf32>
    %192 = tpu.matmul %191, %190, %cst_67 {dimension_numbers = #tpu.dot_dimension_numbers<[1], [0], [0], [1], [0, 0, 1, 1], [], []>} : vector<4x288xf32>, vector<288x256xf32>, vector<4x256xf32> -> vector<4x256xf32>
    %193 = vector.extract_strided_slice %13 {offsets = [0, 288], sizes = [4, 1], strides = [1, 1]} : vector<4x289xf32> to vector<4x1xf32>
    %194 = vector.broadcast %193 : vector<4x1xf32> to vector<4x256xf32>
    %195 = arith.addf %192, %194 : vector<4x256xf32>
    %196 = vector.extract_strided_slice %195 {offsets = [0, 0], sizes = [2, 256], strides = [1, 1]} : vector<4x256xf32> to vector<2x256xf32>
    %197 = vector.extract_strided_slice %195 {offsets = [2, 0], sizes = [2, 256], strides = [1, 1]} : vector<4x256xf32> to vector<2x256xf32>
    %cst_68 = arith.constant 2.000000e+00 : f32
    %198 = vector.broadcast %cst_68 : f32 to vector<2x256xf32>
    %199 = arith.addf %197, %198 : vector<2x256xf32>
    %cst_69 = arith.constant 0.000000e+00 : f32
    %200 = vector.broadcast %cst_69 : f32 to vector<2x256xf32>
    %201 = arith.subf %200, %199 : vector<2x256xf32>
    %202 = math.exp %201 : vector<2x256xf32>
    %cst_70 = arith.constant 1.000000e+00 : f32
    %203 = vector.broadcast %cst_70 : f32 to vector<2x256xf32>
    %204 = arith.addf %203, %202 : vector<2x256xf32>
    %cst_71 = arith.constant 1.000000e+00 : f32
    %205 = vector.broadcast %cst_71 : f32 to vector<2x256xf32>
    %206 = arith.divf %205, %204 : vector<2x256xf32>
    %cst_72 = arith.constant 9.99999974E-5 : f32
    %207 = vector.broadcast %cst_72 : f32 to vector<2x256xf32>
    %208 = arith.addf %206, %207 : vector<2x256xf32>
    %209 = arith.addf %19, %196 : vector<2x256xf32>
    %210 = arith.mulf %209, %208 : vector<2x256xf32>
    %c0_73 = arith.constant 0 : index
    %c0_74 = arith.constant 0 : index
    %c0_75 = arith.constant 0 : index
    %211 = vector.load %arg5[%c0_73, %c0_74, %c0_75] : memref<2x2x256xf32, #tpu.memory_space<vmem>>, vector<1x2x256xf32>
    %212 = vector.shape_cast %211 : vector<1x2x256xf32> to vector<2x256xf32>
    %213 = vector.shape_cast %210 : vector<2x256xf32> to vector<1x2x256xf32>
    tpu.vector_store %arg5[%c0_73, %c0_74, %c0_75], %213 {strides = array<i32>} : memref<2x2x256xf32, #tpu.memory_space<vmem>>, vector<1x2x256xf32>,
    %214 = math.log %208 : vector<2x256xf32>
    %cst_76 = arith.constant dense<0.000000e+00> : vector<256xf32>
    %215 = vector.multi_reduction <add>, %214, %cst_76 [0] : vector<2x256xf32> to vector<256xf32>
    %216 = vector.shape_cast %215 : vector<256xf32> to vector<1x256xf32>
    %c0_77 = arith.constant 0 : index
    %c0_78 = arith.constant 0 : index
    %c0_79 = arith.constant 0 : index
    %217 = vector.load %arg6[%c0_77, %c0_78, %c0_79] : memref<2x1x256xf32, #tpu.memory_space<vmem>>, vector<1x1x256xf32>
    %218 = vector.shape_cast %217 : vector<1x1x256xf32> to vector<1x256xf32>
    %219 = vector.shape_cast %216 : vector<1x256xf32> to vector<1x1x256xf32>
    tpu.vector_store %arg6[%c0_77, %c0_78, %c0_79], %219 {strides = array<i32>} : memref<2x1x256xf32, #tpu.memory_space<vmem>>, vector<1x1x256xf32>,
    %c1_80 = arith.constant 1 : index
    %c0_81 = arith.constant 0 : index
    %c0_82 = arith.constant 0 : index
    %220 = vector.load %arg2[%c1_80, %c0_81, %c0_82] : memref<2x8x256xf32, #tpu.memory_space<vmem>>, vector<1x8x256xf32>
    %221 = vector.shape_cast %220 : vector<1x8x256xf32> to vector<8x256xf32>
    %c1_83 = arith.constant 1 : index
    %c0_84 = arith.constant 0 : index
    %c0_85 = arith.constant 0 : index
    %222 = vector.load %arg1[%c1_83, %c0_84, %c0_85] : memref<2x4x256xf32, #tpu.memory_space<vmem>>, vector<1x4x256xf32>
    %223 = vector.shape_cast %222 : vector<1x4x256xf32> to vector<4x256xf32>
    %224 = vector.extract_strided_slice %223 {offsets = [0, 0], sizes = [2, 256], strides = [1, 1]} : vector<4x256xf32> to vector<2x256xf32>
    %225 = vector.extract_strided_slice %223 {offsets = [2, 0], sizes = [2, 256], strides = [1, 1]} : vector<4x256xf32> to vector<2x256xf32>
    %c17_i32_86 = arith.constant 17 : i32
    %226 = tpu.dynamic_rotate %221 by %c17_i32_86 dim 1 : vector<8x256xf32>, i32 -> vector<8x256xf32>
    %227 = vector.broadcast %0 : vector<1x256xf32> to vector<8x256xf32>
    %228 = arith.mulf %226, %227 : vector<8x256xf32>
    %c16_i32_87 = arith.constant 16 : i32
    %229 = tpu.dynamic_rotate %221 by %c16_i32_87 dim 1 : vector<8x256xf32>, i32 -> vector<8x256xf32>
    %230 = vector.broadcast %1 : vector<1x256xf32> to vector<8x256xf32>
    %231 = arith.mulf %229, %230 : vector<8x256xf32>
    %c15_i32_88 = arith.constant 15 : i32
    %232 = tpu.dynamic_rotate %221 by %c15_i32_88 dim 1 : vector<8x256xf32>, i32 -> vector<8x256xf32>
    %233 = vector.broadcast %2 : vector<1x256xf32> to vector<8x256xf32>
    %234 = arith.mulf %232, %233 : vector<8x256xf32>
    %c1_i32_89 = arith.constant 1 : i32
    %235 = tpu.dynamic_rotate %221 by %c1_i32_89 dim 1 : vector<8x256xf32>, i32 -> vector<8x256xf32>
    %236 = vector.broadcast %3 : vector<1x256xf32> to vector<8x256xf32>
    %237 = arith.mulf %235, %236 : vector<8x256xf32>
    %c255_i32_90 = arith.constant 255 : i32
    %238 = tpu.dynamic_rotate %221 by %c255_i32_90 dim 1 : vector<8x256xf32>, i32 -> vector<8x256xf32>
    %239 = vector.broadcast %4 : vector<1x256xf32> to vector<8x256xf32>
    %240 = arith.mulf %238, %239 : vector<8x256xf32>
    %c241_i32_91 = arith.constant 241 : i32
    %241 = tpu.dynamic_rotate %221 by %c241_i32_91 dim 1 : vector<8x256xf32>, i32 -> vector<8x256xf32>
    %242 = vector.broadcast %5 : vector<1x256xf32> to vector<8x256xf32>
    %243 = arith.mulf %241, %242 : vector<8x256xf32>
    %c240_i32_92 = arith.constant 240 : i32
    %244 = tpu.dynamic_rotate %221 by %c240_i32_92 dim 1 : vector<8x256xf32>, i32 -> vector<8x256xf32>
    %245 = vector.broadcast %6 : vector<1x256xf32> to vector<8x256xf32>
    %246 = arith.mulf %244, %245 : vector<8x256xf32>
    %c239_i32_93 = arith.constant 239 : i32
    %247 = tpu.dynamic_rotate %221 by %c239_i32_93 dim 1 : vector<8x256xf32>, i32 -> vector<8x256xf32>
    %248 = vector.broadcast %7 : vector<1x256xf32> to vector<8x256xf32>
    %249 = arith.mulf %247, %248 : vector<8x256xf32>
    %250 = tpu.concatenate %228, %231, %234, %237, %221, %240, %243, %246, %249 in 0 : vector<8x256xf32>, vector<8x256xf32>, vector<8x256xf32>, vector<8x256xf32>, vector<8x256xf32>, vector<8x256xf32>, vector<8x256xf32>, vector<8x256xf32>, vector<8x256xf32> -> vector<72x256xf32>
    %251 = vector.extract_strided_slice %8 {offsets = [0, 0], sizes = [8, 72], strides = [1, 1]} : vector<8x73xf32> to vector<8x72xf32>
    %cst_94 = arith.constant dense<0.000000e+00> : vector<8x256xf32>
    %252 = tpu.matmul %251, %250, %cst_94 {dimension_numbers = #tpu.dot_dimension_numbers<[1], [0], [0], [1], [0, 0, 1, 1], [], []>} : vector<8x72xf32>, vector<72x256xf32>, vector<8x256xf32> -> vector<8x256xf32>
    %253 = vector.extract_strided_slice %8 {offsets = [0, 72], sizes = [8, 1], strides = [1, 1]} : vector<8x73xf32> to vector<8x1xf32>
    %254 = vector.broadcast %253 : vector<8x1xf32> to vector<8x256xf32>
    %255 = arith.addf %252, %254 : vector<8x256xf32>
    %cst_95 = arith.constant 0.000000e+00 : f32
    %256 = vector.broadcast %cst_95 : f32 to vector<8x256xf32>
    %257 = arith.maximumf %255, %256 : vector<8x256xf32>
    %258 = vector.extract_strided_slice %9 {offsets = [0, 0], sizes = [8, 8], strides = [1, 1]} : vector<8x9xf32> to vector<8x8xf32>
    %cst_96 = arith.constant dense<0.000000e+00> : vector<8x256xf32>
    %259 = tpu.matmul %258, %257, %cst_96 {dimension_numbers = #tpu.dot_dimension_numbers<[1], [0], [0], [1], [0, 0, 1, 1], [], []>} : vector<8x8xf32>, vector<8x256xf32>, vector<8x256xf32> -> vector<8x256xf32>
    %260 = vector.extract_strided_slice %9 {offsets = [0, 8], sizes = [8, 1], strides = [1, 1]} : vector<8x9xf32> to vector<8x1xf32>
    %261 = vector.broadcast %260 : vector<8x1xf32> to vector<8x256xf32>
    %262 = arith.addf %259, %261 : vector<8x256xf32>
    %cst_97 = arith.constant 0.000000e+00 : f32
    %263 = vector.broadcast %cst_97 : f32 to vector<8x256xf32>
    %264 = arith.maximumf %262, %263 : vector<8x256xf32>
    %c17_i32_98 = arith.constant 17 : i32
    %265 = tpu.dynamic_rotate %264 by %c17_i32_98 dim 1 : vector<8x256xf32>, i32 -> vector<8x256xf32>
    %266 = vector.broadcast %0 : vector<1x256xf32> to vector<8x256xf32>
    %267 = arith.mulf %265, %266 : vector<8x256xf32>
    %c16_i32_99 = arith.constant 16 : i32
    %268 = tpu.dynamic_rotate %264 by %c16_i32_99 dim 1 : vector<8x256xf32>, i32 -> vector<8x256xf32>
    %269 = vector.broadcast %1 : vector<1x256xf32> to vector<8x256xf32>
    %270 = arith.mulf %268, %269 : vector<8x256xf32>
    %c15_i32_100 = arith.constant 15 : i32
    %271 = tpu.dynamic_rotate %264 by %c15_i32_100 dim 1 : vector<8x256xf32>, i32 -> vector<8x256xf32>
    %272 = vector.broadcast %2 : vector<1x256xf32> to vector<8x256xf32>
    %273 = arith.mulf %271, %272 : vector<8x256xf32>
    %c1_i32_101 = arith.constant 1 : i32
    %274 = tpu.dynamic_rotate %264 by %c1_i32_101 dim 1 : vector<8x256xf32>, i32 -> vector<8x256xf32>
    %275 = vector.broadcast %3 : vector<1x256xf32> to vector<8x256xf32>
    %276 = arith.mulf %274, %275 : vector<8x256xf32>
    %c255_i32_102 = arith.constant 255 : i32
    %277 = tpu.dynamic_rotate %264 by %c255_i32_102 dim 1 : vector<8x256xf32>, i32 -> vector<8x256xf32>
    %278 = vector.broadcast %4 : vector<1x256xf32> to vector<8x256xf32>
    %279 = arith.mulf %277, %278 : vector<8x256xf32>
    %c241_i32_103 = arith.constant 241 : i32
    %280 = tpu.dynamic_rotate %264 by %c241_i32_103 dim 1 : vector<8x256xf32>, i32 -> vector<8x256xf32>
    %281 = vector.broadcast %5 : vector<1x256xf32> to vector<8x256xf32>
    %282 = arith.mulf %280, %281 : vector<8x256xf32>
    %c240_i32_104 = arith.constant 240 : i32
    %283 = tpu.dynamic_rotate %264 by %c240_i32_104 dim 1 : vector<8x256xf32>, i32 -> vector<8x256xf32>
    %284 = vector.broadcast %6 : vector<1x256xf32> to vector<8x256xf32>
    %285 = arith.mulf %283, %284 : vector<8x256xf32>
    %c239_i32_105 = arith.constant 239 : i32
    %286 = tpu.dynamic_rotate %264 by %c239_i32_105 dim 1 : vector<8x256xf32>, i32 -> vector<8x256xf32>
    %287 = vector.broadcast %7 : vector<1x256xf32> to vector<8x256xf32>
    %288 = arith.mulf %286, %287 : vector<8x256xf32>
    %289 = tpu.concatenate %267, %270, %273, %276, %264, %279, %282, %285, %288 in 0 : vector<8x256xf32>, vector<8x256xf32>, vector<8x256xf32>, vector<8x256xf32>, vector<8x256xf32>, vector<8x256xf32>, vector<8x256xf32>, vector<8x256xf32>, vector<8x256xf32> -> vector<72x256xf32>
    %290 = vector.extract_strided_slice %10 {offsets = [0, 0], sizes = [4, 72], strides = [1, 1]} : vector<4x73xf32> to vector<4x72xf32>
    %cst_106 = arith.constant dense<0.000000e+00> : vector<4x256xf32>
    %291 = tpu.matmul %290, %289, %cst_106 {dimension_numbers = #tpu.dot_dimension_numbers<[1], [0], [0], [1], [0, 0, 1, 1], [], []>} : vector<4x72xf32>, vector<72x256xf32>, vector<4x256xf32> -> vector<4x256xf32>
    %292 = vector.extract_strided_slice %10 {offsets = [0, 72], sizes = [4, 1], strides = [1, 1]} : vector<4x73xf32> to vector<4x1xf32>
    %293 = vector.broadcast %292 : vector<4x1xf32> to vector<4x256xf32>
    %294 = arith.addf %291, %293 : vector<4x256xf32>
    %295 = vector.extract_strided_slice %294 {offsets = [0, 0], sizes = [2, 256], strides = [1, 1]} : vector<4x256xf32> to vector<2x256xf32>
    %296 = vector.extract_strided_slice %294 {offsets = [2, 0], sizes = [2, 256], strides = [1, 1]} : vector<4x256xf32> to vector<2x256xf32>
    %cst_107 = arith.constant 2.000000e+00 : f32
    %297 = vector.broadcast %cst_107 : f32 to vector<2x256xf32>
    %298 = arith.addf %296, %297 : vector<2x256xf32>
    %cst_108 = arith.constant 0.000000e+00 : f32
    %299 = vector.broadcast %cst_108 : f32 to vector<2x256xf32>
    %300 = arith.subf %299, %298 : vector<2x256xf32>
    %301 = math.exp %300 : vector<2x256xf32>
    %cst_109 = arith.constant 1.000000e+00 : f32
    %302 = vector.broadcast %cst_109 : f32 to vector<2x256xf32>
    %303 = arith.addf %302, %301 : vector<2x256xf32>
    %cst_110 = arith.constant 1.000000e+00 : f32
    %304 = vector.broadcast %cst_110 : f32 to vector<2x256xf32>
    %305 = arith.divf %304, %303 : vector<2x256xf32>
    %cst_111 = arith.constant 9.99999974E-5 : f32
    %306 = vector.broadcast %cst_111 : f32 to vector<2x256xf32>
    %307 = arith.addf %305, %306 : vector<2x256xf32>
    %308 = arith.addf %224, %295 : vector<2x256xf32>
    %309 = arith.mulf %308, %307 : vector<2x256xf32>
    %c17_i32_112 = arith.constant 17 : i32
    %310 = tpu.dynamic_rotate %309 by %c17_i32_112 dim 1 : vector<2x256xf32>, i32 -> vector<2x256xf32>
    %311 = vector.broadcast %0 : vector<1x256xf32> to vector<2x256xf32>
    %312 = arith.mulf %310, %311 : vector<2x256xf32>
    %c16_i32_113 = arith.constant 16 : i32
    %313 = tpu.dynamic_rotate %309 by %c16_i32_113 dim 1 : vector<2x256xf32>, i32 -> vector<2x256xf32>
    %314 = vector.broadcast %1 : vector<1x256xf32> to vector<2x256xf32>
    %315 = arith.mulf %313, %314 : vector<2x256xf32>
    %c15_i32_114 = arith.constant 15 : i32
    %316 = tpu.dynamic_rotate %309 by %c15_i32_114 dim 1 : vector<2x256xf32>, i32 -> vector<2x256xf32>
    %317 = vector.broadcast %2 : vector<1x256xf32> to vector<2x256xf32>
    %318 = arith.mulf %316, %317 : vector<2x256xf32>
    %c1_i32_115 = arith.constant 1 : i32
    %319 = tpu.dynamic_rotate %309 by %c1_i32_115 dim 1 : vector<2x256xf32>, i32 -> vector<2x256xf32>
    %320 = vector.broadcast %3 : vector<1x256xf32> to vector<2x256xf32>
    %321 = arith.mulf %319, %320 : vector<2x256xf32>
    %c255_i32_116 = arith.constant 255 : i32
    %322 = tpu.dynamic_rotate %309 by %c255_i32_116 dim 1 : vector<2x256xf32>, i32 -> vector<2x256xf32>
    %323 = vector.broadcast %4 : vector<1x256xf32> to vector<2x256xf32>
    %324 = arith.mulf %322, %323 : vector<2x256xf32>
    %c241_i32_117 = arith.constant 241 : i32
    %325 = tpu.dynamic_rotate %309 by %c241_i32_117 dim 1 : vector<2x256xf32>, i32 -> vector<2x256xf32>
    %326 = vector.broadcast %5 : vector<1x256xf32> to vector<2x256xf32>
    %327 = arith.mulf %325, %326 : vector<2x256xf32>
    %c240_i32_118 = arith.constant 240 : i32
    %328 = tpu.dynamic_rotate %309 by %c240_i32_118 dim 1 : vector<2x256xf32>, i32 -> vector<2x256xf32>
    %329 = vector.broadcast %6 : vector<1x256xf32> to vector<2x256xf32>
    %330 = arith.mulf %328, %329 : vector<2x256xf32>
    %c239_i32_119 = arith.constant 239 : i32
    %331 = tpu.dynamic_rotate %309 by %c239_i32_119 dim 1 : vector<2x256xf32>, i32 -> vector<2x256xf32>
    %332 = vector.broadcast %7 : vector<1x256xf32> to vector<2x256xf32>
    %333 = arith.mulf %331, %332 : vector<2x256xf32>
    %334 = vector.extract_strided_slice %11 {offsets = [0, 0], sizes = [32, 2], strides = [1, 1]} : vector<32x19xf32> to vector<32x2xf32>
    %cst_120 = arith.constant dense<0.000000e+00> : vector<32x256xf32>
    %335 = tpu.matmul %334, %312, %cst_120 {dimension_numbers = #tpu.dot_dimension_numbers<[1], [0], [0], [1], [0, 0, 1, 1], [], []>} : vector<32x2xf32>, vector<2x256xf32>, vector<32x256xf32> -> vector<32x256xf32>
    %336 = vector.extract_strided_slice %11 {offsets = [0, 2], sizes = [32, 2], strides = [1, 1]} : vector<32x19xf32> to vector<32x2xf32>
    %cst_121 = arith.constant dense<0.000000e+00> : vector<32x256xf32>
    %337 = tpu.matmul %336, %315, %cst_121 {dimension_numbers = #tpu.dot_dimension_numbers<[1], [0], [0], [1], [0, 0, 1, 1], [], []>} : vector<32x2xf32>, vector<2x256xf32>, vector<32x256xf32> -> vector<32x256xf32>
    %338 = arith.addf %335, %337 : vector<32x256xf32>
    %339 = vector.extract_strided_slice %11 {offsets = [0, 4], sizes = [32, 2], strides = [1, 1]} : vector<32x19xf32> to vector<32x2xf32>
    %cst_122 = arith.constant dense<0.000000e+00> : vector<32x256xf32>
    %340 = tpu.matmul %339, %318, %cst_122 {dimension_numbers = #tpu.dot_dimension_numbers<[1], [0], [0], [1], [0, 0, 1, 1], [], []>} : vector<32x2xf32>, vector<2x256xf32>, vector<32x256xf32> -> vector<32x256xf32>
    %341 = arith.addf %338, %340 : vector<32x256xf32>
    %342 = vector.extract_strided_slice %11 {offsets = [0, 6], sizes = [32, 2], strides = [1, 1]} : vector<32x19xf32> to vector<32x2xf32>
    %cst_123 = arith.constant dense<0.000000e+00> : vector<32x256xf32>
    %343 = tpu.matmul %342, %321, %cst_123 {dimension_numbers = #tpu.dot_dimension_numbers<[1], [0], [0], [1], [0, 0, 1, 1], [], []>} : vector<32x2xf32>, vector<2x256xf32>, vector<32x256xf32> -> vector<32x256xf32>
    %344 = arith.addf %341, %343 : vector<32x256xf32>
    %345 = vector.extract_strided_slice %11 {offsets = [0, 8], sizes = [32, 2], strides = [1, 1]} : vector<32x19xf32> to vector<32x2xf32>
    %cst_124 = arith.constant dense<0.000000e+00> : vector<32x256xf32>
    %346 = tpu.matmul %345, %309, %cst_124 {dimension_numbers = #tpu.dot_dimension_numbers<[1], [0], [0], [1], [0, 0, 1, 1], [], []>} : vector<32x2xf32>, vector<2x256xf32>, vector<32x256xf32> -> vector<32x256xf32>
    %347 = arith.addf %344, %346 : vector<32x256xf32>
    %348 = vector.extract_strided_slice %11 {offsets = [0, 10], sizes = [32, 2], strides = [1, 1]} : vector<32x19xf32> to vector<32x2xf32>
    %cst_125 = arith.constant dense<0.000000e+00> : vector<32x256xf32>
    %349 = tpu.matmul %348, %324, %cst_125 {dimension_numbers = #tpu.dot_dimension_numbers<[1], [0], [0], [1], [0, 0, 1, 1], [], []>} : vector<32x2xf32>, vector<2x256xf32>, vector<32x256xf32> -> vector<32x256xf32>
    %350 = arith.addf %347, %349 : vector<32x256xf32>
    %351 = vector.extract_strided_slice %11 {offsets = [0, 12], sizes = [32, 2], strides = [1, 1]} : vector<32x19xf32> to vector<32x2xf32>
    %cst_126 = arith.constant dense<0.000000e+00> : vector<32x256xf32>
    %352 = tpu.matmul %351, %327, %cst_126 {dimension_numbers = #tpu.dot_dimension_numbers<[1], [0], [0], [1], [0, 0, 1, 1], [], []>} : vector<32x2xf32>, vector<2x256xf32>, vector<32x256xf32> -> vector<32x256xf32>
    %353 = arith.addf %350, %352 : vector<32x256xf32>
    %354 = vector.extract_strided_slice %11 {offsets = [0, 14], sizes = [32, 2], strides = [1, 1]} : vector<32x19xf32> to vector<32x2xf32>
    %cst_127 = arith.constant dense<0.000000e+00> : vector<32x256xf32>
    %355 = tpu.matmul %354, %330, %cst_127 {dimension_numbers = #tpu.dot_dimension_numbers<[1], [0], [0], [1], [0, 0, 1, 1], [], []>} : vector<32x2xf32>, vector<2x256xf32>, vector<32x256xf32> -> vector<32x256xf32>
    %356 = arith.addf %353, %355 : vector<32x256xf32>
    %357 = vector.extract_strided_slice %11 {offsets = [0, 16], sizes = [32, 2], strides = [1, 1]} : vector<32x19xf32> to vector<32x2xf32>
    %cst_128 = arith.constant dense<0.000000e+00> : vector<32x256xf32>
    %358 = tpu.matmul %357, %333, %cst_128 {dimension_numbers = #tpu.dot_dimension_numbers<[1], [0], [0], [1], [0, 0, 1, 1], [], []>} : vector<32x2xf32>, vector<2x256xf32>, vector<32x256xf32> -> vector<32x256xf32>
    %359 = arith.addf %356, %358 : vector<32x256xf32>
    %360 = vector.extract_strided_slice %11 {offsets = [0, 18], sizes = [32, 1], strides = [1, 1]} : vector<32x19xf32> to vector<32x1xf32>
    %361 = vector.broadcast %360 : vector<32x1xf32> to vector<32x256xf32>
    %362 = arith.addf %359, %361 : vector<32x256xf32>
    %cst_129 = arith.constant 0.000000e+00 : f32
    %363 = vector.broadcast %cst_129 : f32 to vector<32x256xf32>
    %364 = arith.maximumf %362, %363 : vector<32x256xf32>
    %365 = vector.extract_strided_slice %12 {offsets = [0, 0], sizes = [32, 32], strides = [1, 1]} : vector<32x33xf32> to vector<32x32xf32>
    %cst_130 = arith.constant dense<0.000000e+00> : vector<32x256xf32>
    %366 = tpu.matmul %365, %364, %cst_130 {dimension_numbers = #tpu.dot_dimension_numbers<[1], [0], [0], [1], [0, 0, 1, 1], [], []>} : vector<32x32xf32>, vector<32x256xf32>, vector<32x256xf32> -> vector<32x256xf32>
    %367 = vector.extract_strided_slice %12 {offsets = [0, 32], sizes = [32, 1], strides = [1, 1]} : vector<32x33xf32> to vector<32x1xf32>
    %368 = vector.broadcast %367 : vector<32x1xf32> to vector<32x256xf32>
    %369 = arith.addf %366, %368 : vector<32x256xf32>
    %cst_131 = arith.constant 0.000000e+00 : f32
    %370 = vector.broadcast %cst_131 : f32 to vector<32x256xf32>
    %371 = arith.maximumf %369, %370 : vector<32x256xf32>
    %c17_i32_132 = arith.constant 17 : i32
    %372 = tpu.dynamic_rotate %371 by %c17_i32_132 dim 1 : vector<32x256xf32>, i32 -> vector<32x256xf32>
    %373 = vector.broadcast %0 : vector<1x256xf32> to vector<32x256xf32>
    %374 = arith.mulf %372, %373 : vector<32x256xf32>
    %c16_i32_133 = arith.constant 16 : i32
    %375 = tpu.dynamic_rotate %371 by %c16_i32_133 dim 1 : vector<32x256xf32>, i32 -> vector<32x256xf32>
    %376 = vector.broadcast %1 : vector<1x256xf32> to vector<32x256xf32>
    %377 = arith.mulf %375, %376 : vector<32x256xf32>
    %c15_i32_134 = arith.constant 15 : i32
    %378 = tpu.dynamic_rotate %371 by %c15_i32_134 dim 1 : vector<32x256xf32>, i32 -> vector<32x256xf32>
    %379 = vector.broadcast %2 : vector<1x256xf32> to vector<32x256xf32>
    %380 = arith.mulf %378, %379 : vector<32x256xf32>
    %c1_i32_135 = arith.constant 1 : i32
    %381 = tpu.dynamic_rotate %371 by %c1_i32_135 dim 1 : vector<32x256xf32>, i32 -> vector<32x256xf32>
    %382 = vector.broadcast %3 : vector<1x256xf32> to vector<32x256xf32>
    %383 = arith.mulf %381, %382 : vector<32x256xf32>
    %c255_i32_136 = arith.constant 255 : i32
    %384 = tpu.dynamic_rotate %371 by %c255_i32_136 dim 1 : vector<32x256xf32>, i32 -> vector<32x256xf32>
    %385 = vector.broadcast %4 : vector<1x256xf32> to vector<32x256xf32>
    %386 = arith.mulf %384, %385 : vector<32x256xf32>
    %c241_i32_137 = arith.constant 241 : i32
    %387 = tpu.dynamic_rotate %371 by %c241_i32_137 dim 1 : vector<32x256xf32>, i32 -> vector<32x256xf32>
    %388 = vector.broadcast %5 : vector<1x256xf32> to vector<32x256xf32>
    %389 = arith.mulf %387, %388 : vector<32x256xf32>
    %c240_i32_138 = arith.constant 240 : i32
    %390 = tpu.dynamic_rotate %371 by %c240_i32_138 dim 1 : vector<32x256xf32>, i32 -> vector<32x256xf32>
    %391 = vector.broadcast %6 : vector<1x256xf32> to vector<32x256xf32>
    %392 = arith.mulf %390, %391 : vector<32x256xf32>
    %c239_i32_139 = arith.constant 239 : i32
    %393 = tpu.dynamic_rotate %371 by %c239_i32_139 dim 1 : vector<32x256xf32>, i32 -> vector<32x256xf32>
    %394 = vector.broadcast %7 : vector<1x256xf32> to vector<32x256xf32>
    %395 = arith.mulf %393, %394 : vector<32x256xf32>
    %396 = tpu.concatenate %374, %377, %380, %383, %371, %386, %389, %392, %395 in 0 : vector<32x256xf32>, vector<32x256xf32>, vector<32x256xf32>, vector<32x256xf32>, vector<32x256xf32>, vector<32x256xf32>, vector<32x256xf32>, vector<32x256xf32>, vector<32x256xf32> -> vector<288x256xf32>
    %397 = vector.extract_strided_slice %13 {offsets = [0, 0], sizes = [4, 288], strides = [1, 1]} : vector<4x289xf32> to vector<4x288xf32>
    %cst_140 = arith.constant dense<0.000000e+00> : vector<4x256xf32>
    %398 = tpu.matmul %397, %396, %cst_140 {dimension_numbers = #tpu.dot_dimension_numbers<[1], [0], [0], [1], [0, 0, 1, 1], [], []>} : vector<4x288xf32>, vector<288x256xf32>, vector<4x256xf32> -> vector<4x256xf32>
    %399 = vector.extract_strided_slice %13 {offsets = [0, 288], sizes = [4, 1], strides = [1, 1]} : vector<4x289xf32> to vector<4x1xf32>
    %400 = vector.broadcast %399 : vector<4x1xf32> to vector<4x256xf32>
    %401 = arith.addf %398, %400 : vector<4x256xf32>
    %402 = vector.extract_strided_slice %401 {offsets = [0, 0], sizes = [2, 256], strides = [1, 1]} : vector<4x256xf32> to vector<2x256xf32>
    %403 = vector.extract_strided_slice %401 {offsets = [2, 0], sizes = [2, 256], strides = [1, 1]} : vector<4x256xf32> to vector<2x256xf32>
    %cst_141 = arith.constant 2.000000e+00 : f32
    %404 = vector.broadcast %cst_141 : f32 to vector<2x256xf32>
    %405 = arith.addf %403, %404 : vector<2x256xf32>
    %cst_142 = arith.constant 0.000000e+00 : f32
    %406 = vector.broadcast %cst_142 : f32 to vector<2x256xf32>
    %407 = arith.subf %406, %405 : vector<2x256xf32>
    %408 = math.exp %407 : vector<2x256xf32>
    %cst_143 = arith.constant 1.000000e+00 : f32
    %409 = vector.broadcast %cst_143 : f32 to vector<2x256xf32>
    %410 = arith.addf %409, %408 : vector<2x256xf32>
    %cst_144 = arith.constant 1.000000e+00 : f32
    %411 = vector.broadcast %cst_144 : f32 to vector<2x256xf32>
    %412 = arith.divf %411, %410 : vector<2x256xf32>
    %cst_145 = arith.constant 9.99999974E-5 : f32
    %413 = vector.broadcast %cst_145 : f32 to vector<2x256xf32>
    %414 = arith.addf %412, %413 : vector<2x256xf32>
    %415 = arith.addf %225, %402 : vector<2x256xf32>
    %416 = arith.mulf %415, %414 : vector<2x256xf32>
    %c1_146 = arith.constant 1 : index
    %c0_147 = arith.constant 0 : index
    %c0_148 = arith.constant 0 : index
    %417 = vector.load %arg5[%c1_146, %c0_147, %c0_148] : memref<2x2x256xf32, #tpu.memory_space<vmem>>, vector<1x2x256xf32>
    %418 = vector.shape_cast %417 : vector<1x2x256xf32> to vector<2x256xf32>
    %419 = vector.shape_cast %416 : vector<2x256xf32> to vector<1x2x256xf32>
    tpu.vector_store %arg5[%c1_146, %c0_147, %c0_148], %419 {strides = array<i32>} : memref<2x2x256xf32, #tpu.memory_space<vmem>>, vector<1x2x256xf32>,
    %420 = math.log %414 : vector<2x256xf32>
    %cst_149 = arith.constant dense<0.000000e+00> : vector<256xf32>
    %421 = vector.multi_reduction <add>, %420, %cst_149 [0] : vector<2x256xf32> to vector<256xf32>
    %422 = vector.shape_cast %421 : vector<256xf32> to vector<1x256xf32>
    %c1_150 = arith.constant 1 : index
    %c0_151 = arith.constant 0 : index
    %c0_152 = arith.constant 0 : index
    %423 = vector.load %arg6[%c1_150, %c0_151, %c0_152] : memref<2x1x256xf32, #tpu.memory_space<vmem>>, vector<1x1x256xf32>
    %424 = vector.shape_cast %423 : vector<1x1x256xf32> to vector<1x256xf32>
    %425 = vector.shape_cast %422 : vector<1x256xf32> to vector<1x1x256xf32>
    tpu.vector_store %arg6[%c1_150, %c0_151, %c0_152], %425 {strides = array<i32>} : memref<2x1x256xf32, #tpu.memory_space<vmem>>, vector<1x1x256xf32>,
    return
  }
  func.func @transform_0(%arg0: i32) -> (i32, i32, i32) {
    %c0_i32 = arith.constant 0 : i32
    %c0_i32_0 = arith.constant 0 : i32
    %c0_i32_1 = arith.constant 0 : i32
    return %arg0, %c0_i32, %c0_i32_0 : i32, i32, i32
  }
  func.func @transform_1(%arg0: i32) -> (i32, i32, i32) {
    %c0_i32 = arith.constant 0 : i32
    %c0_i32_0 = arith.constant 0 : i32
    %c0_i32_1 = arith.constant 0 : i32
    return %arg0, %c0_i32, %c0_i32_0 : i32, i32, i32
  }
  func.func @transform_2(%arg0: i32) -> (i32, i32) {
    %c0_i32 = arith.constant 0 : i32
    %c0_i32_0 = arith.constant 0 : i32
    %c0_i32_1 = arith.constant 0 : i32
    return %c0_i32, %c0_i32_0 : i32, i32
  }
  func.func @transform_3(%arg0: i32) -> (i32, i32) {
    %c0_i32 = arith.constant 0 : i32
    %c0_i32_0 = arith.constant 0 : i32
    %c0_i32_1 = arith.constant 0 : i32
    return %c0_i32, %c0_i32_0 : i32, i32
  }
  func.func @transform_4(%arg0: i32) -> (i32, i32, i32) {
    %c0_i32 = arith.constant 0 : i32
    %c0_i32_0 = arith.constant 0 : i32
    %c0_i32_1 = arith.constant 0 : i32
    return %arg0, %c0_i32, %c0_i32_0 : i32, i32, i32
  }
  func.func @transform_5(%arg0: i32) -> (i32, i32, i32) {
    %c0_i32 = arith.constant 0 : i32
    %c0_i32_0 = arith.constant 0 : i32
    %c0_i32_1 = arith.constant 0 : i32
    return %arg0, %c0_i32, %c0_i32_0 : i32, i32, i32
  }
}

</mosaic_0001>

<llo_original>
// kernel: tpu_custom_call.1
$region0: #{tpu_custom_call.1}
  #allocation0 [shape = 'u32[]', space=smem, size = 0x4, offset = 0x4, fixed_abs, tag = 'smem constant byte address 0x4 - core index']
  #allocation1 [shape = 'u32[144,128]{1,0:T(1,128)}', space=vmem, size = 0x12000, scoped, tag = 'internal scratch']
  %s0 = inlined_call_operand.hbm [shape: f32[2,4,256], index: 0, kind: input, shape index: {}]
  %s1 = inlined_call_operand.hbm [shape: f32[2,8,256], index: 1, kind: input, shape index: {}]
  %s2 = inlined_call_operand.hbm [shape: f32[96,384], index: 2, kind: input, shape index: {}]
  %s3 = inlined_call_operand.hbm [shape: f32[9,256], index: 3, kind: input, shape index: {}]
  %s4 = inlined_call_operand.hbm [shape: f32[2,2,256], index: 4, kind: output, shape index: {0}]
  %s5 = inlined_call_operand.hbm [shape: f32[2,1,256], index: 5, kind: output, shape index: {1}]
  %6 = xla_tuple %s4, %s5
  %s7 = sld [smem:[#allocation0]]
  $region50: #{tpu_custom_call.1} parent=0
    _
  %s9 = ssub.s32 1, %s7
  %s10 = scalar_select 0, %s9, %s7
  $region1: #{tpu_custom_call.1} parent=0
    #allocation2 [shape = 'u8[8192]{0}', space=vmem, size = 0x2000, scoped, tag = 'input window, operand 0, single buffered']
    #allocation3 [shape = 's32[1]{0}', space=sflag, size = 0x4, scoped, tag = 'scoped memory for tpu_custom_call.1']
    #allocation4 [shape = 's32[1]{0}', space=sflag, size = 0x4, scoped, tag = 'scoped memory for tpu_custom_call.1']
    #allocation5 [shape = 'u8[16384]{0}', space=vmem, size = 0x4000, scoped, tag = 'input window, operand 1, single buffered']
    #allocation6 [shape = 's32[1]{0}', space=sflag, size = 0x4, scoped, tag = 'scoped memory for tpu_custom_call.1']
    #allocation7 [shape = 'u8[147456]{0}', space=vmem, size = 0x24000, scoped, tag = 'input window, operand 2, single buffered']
    #allocation8 [shape = 'u8[16384]{0}', space=vmem, size = 0x4000, scoped, tag = 'input window, operand 3, single buffered']
    #allocation9 [shape = 's32[1]{0}', space=sflag, size = 0x4, scoped, tag = 'scoped memory for tpu_custom_call.1']
    #allocation10 [shape = 'u8[4096]{0}', space=vmem, size = 0x1000, scoped, tag = 'output window, operand 0, single buffered']
    #allocation11 [shape = 'u8[2048]{0}', space=vmem, size = 0x800, scoped, tag = 'output window, operand 1, single buffered']
    #allocation12 [shape = 's32[1]{0}', space=sflag, size = 0x4, scoped, tag = 'scoped memory for tpu_custom_call.1']
    %11 = vsyncpa [#allocation3], 0
    %12 = vsyncpa [#allocation6], 0
    %13 = vsyncpa [#allocation9], 0
    %14 = vsyncpa [#allocation4], 0
    %15 = vsyncpa [#allocation12], 0
    // Predicated region
    $region2: #{tpu_custom_call.1} parent=1 // pred_check
      _
    $region3: #{tpu_custom_call.1} parent=1 // pred_check_branch
      %17 = sbr.rel (0) target = $region5
    $region4: #{tpu_custom_call.1} parent=1 // pred_region
      %s19 = ssub.s32 256, 256
      %20 = vsyncadd [#allocation3], %s19
      %s21 = sshll.u32 [#allocation2], 4
      %s22 = int_to_ptr.vmem [resolvable:$true] %s21
      %27 = dma.hbm_to_vmem [thread:$0]  %s0, 256, %s22, [#allocation3], 128, 128, 8
    $region5: #{tpu_custom_call.1} parent=1 // pred_fallthru
      _
    // Predicated region
    $region6: #{tpu_custom_call.1} parent=1 // pred_check
      _
    $region7: #{tpu_custom_call.1} parent=1 // pred_check_branch
      %29 = sbr.rel (0) target = $region9
    $region8: #{tpu_custom_call.1} parent=1 // pred_region
      %s31 = ssub.s32 512, 512
      %32 = vsyncadd [#allocation6], %s31
      %s33 = sshll.u32 [#allocation5], 4
      %s34 = int_to_ptr.vmem [resolvable:$true] %s33
      %39 = dma.hbm_to_vmem [thread:$0]  %s1, 512, %s34, [#allocation6], 256, 256, 16
    $region9: #{tpu_custom_call.1} parent=1 // pred_fallthru
      _
    // Predicated region
    $region10: #{tpu_custom_call.1} parent=1 // pred_check
      _
    $region11: #{tpu_custom_call.1} parent=1 // pred_check_branch
      %41 = sbr.rel (0) target = $region13
    $region12: #{tpu_custom_call.1} parent=1 // pred_region
      %s43 = ssub.s32 4608, 4608
      %44 = vsyncadd [#allocation6], %s43
      %s45 = sshll.u32 [#allocation7], 4
      %s46 = int_to_ptr.vmem [resolvable:$true] %s45
      %51 = dma.hbm_to_vmem [thread:$0]  %s2, 4608, %s46, [#allocation6], 384, 384, 24
    $region13: #{tpu_custom_call.1} parent=1 // pred_fallthru
      _
    // Predicated region
    $region14: #{tpu_custom_call.1} parent=1 // pred_check
      _
    $region15: #{tpu_custom_call.1} parent=1 // pred_check_branch
      %53 = sbr.rel (0) target = $region17
    $region16: #{tpu_custom_call.1} parent=1 // pred_region
      %s55 = ssub.s32 512, 512
      %56 = vsyncadd [#allocation9], %s55
      %s57 = sshll.u32 [#allocation8], 4
      %s58 = int_to_ptr.vmem [resolvable:$true] %s57
      %63 = dma.hbm_to_vmem [thread:$0]  %s3, 512, %s58, [#allocation9], 256, 256, 16
    $region17: #{tpu_custom_call.1} parent=1 // pred_fallthru
      _
    // Predicated region
    $region18: #{tpu_custom_call.1} parent=1 // pred_check
      _
    $region19: #{tpu_custom_call.1} parent=1 // pred_check_branch
      %65 = sbr.rel (0) target = $region21
    $region20: #{tpu_custom_call.1} parent=1 // pred_region
      %66 = dma.done [#allocation3], 256
    $region21: #{tpu_custom_call.1} parent=1 // pred_fallthru
      _
    // Predicated region
    $region22: #{tpu_custom_call.1} parent=1 // pred_check
      _
    $region23: #{tpu_custom_call.1} parent=1 // pred_check_branch
      %68 = sbr.rel (0) target = $region25
    $region24: #{tpu_custom_call.1} parent=1 // pred_region
      %69 = dma.done [#allocation6], 512
    $region25: #{tpu_custom_call.1} parent=1 // pred_fallthru
      _
    // Predicated region
    $region26: #{tpu_custom_call.1} parent=1 // pred_check
      _
    $region27: #{tpu_custom_call.1} parent=1 // pred_check_branch
      %71 = sbr.rel (0) target = $region29
    $region28: #{tpu_custom_call.1} parent=1 // pred_region
      %72 = dma.done [#allocation6], 4608
    $region29: #{tpu_custom_call.1} parent=1 // pred_fallthru
      _
    // Predicated region
    $region30: #{tpu_custom_call.1} parent=1 // pred_check
      _
    $region31: #{tpu_custom_call.1} parent=1 // pred_check_branch
      %74 = sbr.rel (0) target = $region33
    $region32: #{tpu_custom_call.1} parent=1 // pred_region
      %75 = dma.done [#allocation9], 512
    $region33: #{tpu_custom_call.1} parent=1 // pred_fallthru
      _
    %v76 = vld [vmem:[#allocation8] ss:$8 sm:$0x3]
    %s77 = scalar_lea.vmem [#allocation8], 1
    %v78 = vld [vmem:[%s77] ss:$8 sm:$0x3]
    %s79 = scalar_lea.vmem [#allocation8], 2
    %v80 = vld [vmem:[%s79] ss:$8 sm:$0x3]
    %s81 = scalar_lea.vmem [#allocation8], 3
    %v82 = vld [vmem:[%s81] ss:$8 sm:$0x3]
    %s83 = scalar_lea.vmem [#allocation8], 5
    %v84 = vld [vmem:[%s83] ss:$8 sm:$0x3]
    %s85 = scalar_lea.vmem [#allocation8], 6
    %v86 = vld [vmem:[%s85] ss:$8 sm:$0x3]
    %s87 = scalar_lea.vmem [#allocation8], 7
    %v88 = vld [vmem:[%s87] ss:$8 sm:$0x3]
    %s89 = scalar_lea.vmem [#allocation8], 16
    %v90 = vld [vmem:[%s89] ss:$8 sm:$0x3]
    %v91 = vld [vmem:[#allocation7] sm:$0xff]
    %v92 = vld [vmem:[#allocation7 + $0x18] sm:$0xff]
    %v93 = vld [vmem:[#allocation7 + $0x30] sm:$0xf]
    %v94 = vld [vmem:[#allocation7 + $0x48] sm:$0xff]
    %v95 = vld [vmem:[#allocation7 + $0x60] sm:$0xff]
    %v96 = vld [vmem:[#allocation7 + $0x78] sm:$0xff]
    %v97 = vld [vmem:[#allocation7 + $0x90] sm:$0xff]
    %v98 = vld [vmem:[#allocation7 + $0xa8] sm:$0xff]
    %v99 = vld [vmem:[#allocation7 + $0xc0] sm:$0xff]
    %v100 = vld [vmem:[#allocation7 + $0xd8] sm:$0xff]
    %v101 = vld [vmem:[#allocation7 + $0xf0] sm:$0xff]
    %v102 = vld [vmem:[#allocation7 + $0x108] sm:$0xf]
    %v103 = vld [vmem:[#allocation7 + $0x110] sm:$0xf]
    %v104 = vld [vmem:[#allocation7 + $0x118] sm:$0xf]
    %v105 = vld [vmem:[#allocation5] sm:$0xff]
    %v106 = vld [vmem:[#allocation5 + $0x8] sm:$0xff]
    %v107 = vld [vmem:[#allocation2] sm:$0xff]
    %108 = vrot.lane.b32.xlu0 %v105, 17
    %v109 = vpop.permute.xlu0 %108
    %110 = vrot.lane.b32.xlu0 %v106, 17
    %v111 = vpop.permute.xlu0 %110
    %v112 = vlaneseq
    %v113 = vand.u32 %v112, 127
    %vm114 = vcmp.lt.s32.totalorder %v113, 17
    %v115 = vsel %vm114, %v109, %v111
    %v116 = vsel %vm114, %v111, %v109
    %v118 = vlaneseq
    %v119 = vshrl.u32 %v118, 7
    %v120 = vsub.s32 0, %v119
    %v121 = vrot.slane %v76, %v120
    %v122 = vlaneseq
    %v123 = vshrl.u32 %v122, 7
    %v124 = vsub.s32 1, %v123
    %v125 = vrot.slane %v76, %v124
    %v128 = vmul.f32 %v116, %v121
    %v129 = vmul.f32 %v115, %v125
    %130 = vrot.lane.b32.xlu0 %v105, 16
    %v131 = vpop.permute.xlu0 %130
    %132 = vrot.lane.b32.xlu0 %v106, 16
    %v133 = vpop.permute.xlu0 %132
    %vm134 = vcmp.lt.s32.totalorder %v113, 16
    %v135 = vsel %vm134, %v131, %v133
    %v136 = vsel %vm134, %v133, %v131
    %v138 = vlaneseq
    %v139 = vshrl.u32 %v138, 7
    %v140 = vsub.s32 0, %v139
    %v141 = vrot.slane %v78, %v140
    %v142 = vlaneseq
    %v143 = vshrl.u32 %v142, 7
    %v144 = vsub.s32 1, %v143
    %v145 = vrot.slane %v78, %v144
    %v148 = vmul.f32 %v136, %v141
    %v149 = vmul.f32 %v135, %v145
    %150 = vrot.lane.b32.xlu0 %v105, 15
    %v151 = vpop.permute.xlu0 %150
    %152 = vrot.lane.b32.xlu0 %v106, 15
    %v153 = vpop.permute.xlu0 %152
    %vm154 = vcmp.lt.s32.totalorder %v113, 15
    %v155 = vsel %vm154, %v151, %v153
    %v156 = vsel %vm154, %v153, %v151
    %v158 = vlaneseq
    %v159 = vshrl.u32 %v158, 7
    %v160 = vsub.s32 0, %v159
    %v161 = vrot.slane %v80, %v160
    %v162 = vlaneseq
    %v163 = vshrl.u32 %v162, 7
    %v164 = vsub.s32 1, %v163
    %v165 = vrot.slane %v80, %v164
    %v168 = vmul.f32 %v156, %v161
    %v169 = vmul.f32 %v155, %v165
    %170 = vrot.lane.b32.xlu0 %v105, 1
    %v171 = vpop.permute.xlu0 %170
    %172 = vrot.lane.b32.xlu0 %v106, 1
    %v173 = vpop.permute.xlu0 %172
    %vm174 = vcmp.lt.s32.totalorder %v113, 1
    %v175 = vsel %vm174, %v171, %v173
    %v176 = vsel %vm174, %v173, %v171
    %v178 = vlaneseq
    %v179 = vshrl.u32 %v178, 7
    %v180 = vsub.s32 0, %v179
    %v181 = vrot.slane %v82, %v180
    %v182 = vlaneseq
    %v183 = vshrl.u32 %v182, 7
    %v184 = vsub.s32 1, %v183
    %v185 = vrot.slane %v82, %v184
    %v188 = vmul.f32 %v176, %v181
    %v189 = vmul.f32 %v175, %v185
    %190 = vrot.lane.b32.xlu0 %v105, 127
    %v191 = vpop.permute.xlu0 %190
    %192 = vrot.lane.b32.xlu0 %v106, 127
    %v193 = vpop.permute.xlu0 %192
    %vm194 = vcmp.lt.s32.totalorder %v113, 127
    %v195 = vsel %vm194, %v191, %v193
    %v196 = vsel %vm194, %v193, %v191
    %v198 = vlaneseq
    %v199 = vshrl.u32 %v198, 7
    %v200 = vsub.s32 0, %v199
    %v201 = vrot.slane %v84, %v200
    %v202 = vlaneseq
    %v203 = vshrl.u32 %v202, 7
    %v204 = vsub.s32 1, %v203
    %v205 = vrot.slane %v84, %v204
    %v208 = vmul.f32 %v195, %v201
    %v209 = vmul.f32 %v196, %v205
    %210 = vrot.lane.b32.xlu0 %v105, 113
    %v211 = vpop.permute.xlu0 %210
    %212 = vrot.lane.b32.xlu0 %v106, 113
    %v213 = vpop.permute.xlu0 %212
    %vm214 = vcmp.lt.s32.totalorder %v113, 113
    %v215 = vsel %vm214, %v211, %v213
    %v216 = vsel %vm214, %v213, %v211
    %v218 = vlaneseq
    %v219 = vshrl.u32 %v218, 7
    %v220 = vsub.s32 0, %v219
    %v221 = vrot.slane %v86, %v220
    %v222 = vlaneseq
    %v223 = vshrl.u32 %v222, 7
    %v224 = vsub.s32 1, %v223
    %v225 = vrot.slane %v86, %v224
    %v228 = vmul.f32 %v215, %v221
    %v229 = vmul.f32 %v216, %v225
    %230 = vrot.lane.b32.xlu0 %v105, 112
    %v231 = vpop.permute.xlu0 %230
    %232 = vrot.lane.b32.xlu0 %v106, 112
    %v233 = vpop.permute.xlu0 %232
    %vm234 = vcmp.lt.s32.totalorder %v113, 112
    %v235 = vsel %vm234, %v231, %v233
    %v236 = vsel %vm234, %v233, %v231
    %v238 = vlaneseq
    %v239 = vshrl.u32 %v238, 7
    %v240 = vsub.s32 0, %v239
    %v241 = vrot.slane %v88, %v240
    %v242 = vlaneseq
    %v243 = vshrl.u32 %v242, 7
    %v244 = vsub.s32 1, %v243
    %v245 = vrot.slane %v88, %v244
    %v248 = vmul.f32 %v235, %v241
    %v249 = vmul.f32 %v236, %v245
    %250 = vrot.lane.b32.xlu0 %v105, 111
    %v251 = vpop.permute.xlu0 %250
    %252 = vrot.lane.b32.xlu0 %v106, 111
    %v253 = vpop.permute.xlu0 %252
    %vm254 = vcmp.lt.s32.totalorder %v113, 111
    %v255 = vsel %vm254, %v251, %v253
    %v256 = vsel %vm254, %v253, %v251
    %v258 = vlaneseq
    %v259 = vshrl.u32 %v258, 7
    %v260 = vsub.s32 0, %v259
    %v261 = vrot.slane %v90, %v260
    %v262 = vlaneseq
    %v263 = vshrl.u32 %v262, 7
    %v264 = vsub.s32 1, %v263
    %v265 = vrot.slane %v90, %v264
    %v268 = vmul.f32 %v255, %v261
    %v269 = vmul.f32 %v256, %v265
    %271 = vset.pattern.permute.xlu0 72
    %272 = vperm.xlu0 %271, %v91
    %v273 = vpop.permute.xlu0 %272
    %vm275 = vcmask 588800
    %v276 = vsel %vm275, %v91, 0
    %278 = vmatprep.subr.mxu0 0.0
    %279 = vmatpush1.msra.mxu0 0.0
    %280 = vmatprep.subr.mxu0 0.0
    %281 = vmatpush1.msra.mxu0 0.0
    %282 = vmatprep.subr.mxu0 0.0
    %283 = vmatpush1.msra.mxu0 0.0
    %284 = vmatprep.subr.mxu0 0.0
    %285 = vmatpush1.msra.mxu0 0.0
    %286 = vmatprep.subr.mxu0 0.0
    %287 = vmatpush1.msra.mxu0 0.0
    %288 = vmatprep.subr.mxu0 0.0
    %289 = vmatpush1.msra.mxu0 0.0
    %290 = vmatprep.subr.mxu0 0.0
    %291 = vmatpush1.msra.mxu0 0.0
    %292 = vmatprep.subr.mxu0 %v269
    %293 = vmatpush1.msra.mxu0 %v268
    %294 = vmatprep.subr.mxu0 %v249
    %295 = vmatpush1.msra.mxu0 %v248
    %296 = vmatprep.subr.mxu0 %v229
    %297 = vmatpush1.msra.mxu0 %v228
    %298 = vmatprep.subr.mxu0 %v209
    %299 = vmatpush1.msra.mxu0 %v208
    %300 = vmatprep.subr.mxu0 %v106
    %301 = vmatpush1.msra.mxu0 %v105
    %302 = vmatprep.subr.mxu0 %v189
    %303 = vmatpush1.msra.mxu0 %v188
    %304 = vmatprep.subr.mxu0 %v169
    %305 = vmatpush1.msra.mxu0 %v168
    %306 = vmatprep.subr.mxu0 %v149
    %307 = vmatpush1.msra.mxu0 %v148
    %308 = vmatprep.subr.mxu0 %v129
    %309 = vmatpush1.msra.mxu0 %v128
    %310 = vmatprep.subr.mxu0 0.0
    %311 = vmatpush2.msra.mxu0 0.0
    %312 = vmatprep.subr.mxu0 0.0
    %313 = vmatpush2.msra.mxu0 0.0
    %314 = vmatprep.subr.mxu0 0.0
    %315 = vmatpush2.msra.mxu0 0.0
    %316 = vmatprep.subr.mxu0 0.0
    %317 = vmatpush2.msra.mxu0 0.0
    %318 = vmatprep.subr.mxu0 0.0
    %319 = vmatpush2.msra.mxu0 0.0
    %320 = vmatprep.subr.mxu0 0.0
    %321 = vmatpush2.msra.mxu0 0.0
    %322 = vmatprep.subr.mxu0 0.0
    %323 = vmatpush2.msra.mxu0 0.0
    %324 = vmatprep.subr.mxu0 0.0
    %325 = vmatpush2.msra.mxu0 0.0
    %326 = vmatprep.subr.mxu0 0.0
    %327 = vmatpush2.msra.mxu0 0.0
    %328 = vmatprep.subr.mxu0 0.0
    %329 = vmatpush2.msra.mxu0 0.0
    %330 = vmatprep.subr.mxu0 0.0
    %331 = vmatpush2.msra.mxu0 0.0
    %332 = vmatprep.subr.mxu0 0.0
    %333 = vmatpush2.msra.mxu0 0.0
    %334 = vmatprep.subr.mxu0 0.0
    %335 = vmatpush2.msra.mxu0 0.0
    %336 = vmatprep.subr.mxu0 0.0
    %337 = vmatpush2.msra.mxu0 0.0
    %338 = vmatprep.subr.mxu0 0.0
    %339 = vmatpush2.msra.mxu0 0.0
    %340 = vmatprep.subr.mxu0 0.0
    %341 = vmatpush2.msra.mxu0 0.0
    %342 = vmatprep.mubr.f32.mxu0 0.0
    %343 = vmatmul.mubr.f32.gmra.mxu0 %v276
    %v344 = vpop.f32.mrf.mxu0
    %v345 = vadd.f32 %v273, %v344
    %v346 = vpop.f32.mrf.mxu0
    %v347 = vadd.f32 %v273, %v346
    %348 = vdwg.mxu0
    %v349 = vmax.f32 %v345, 0.0
    %v350 = vmax.f32 %v347, 0.0
    %352 = vset.pattern.permute.xlu0 8
    %353 = vperm.xlu0 %352, %v92
    %v354 = vpop.permute.xlu0 %353
    %vm356 = vcmask 64512
    %v357 = vsel %vm356, %v92, 0
    %359 = vmatprep.subr.mxu0 0.0
    %360 = vmatpush1.msra.mxu0 0.0
    %361 = vmatprep.subr.mxu0 0.0
    %362 = vmatpush1.msra.mxu0 0.0
    %363 = vmatprep.subr.mxu0 0.0
    %364 = vmatpush1.msra.mxu0 0.0
    %365 = vmatprep.subr.mxu0 0.0
    %366 = vmatpush1.msra.mxu0 0.0
    %367 = vmatprep.subr.mxu0 0.0
    %368 = vmatpush1.msra.mxu0 0.0
    %369 = vmatprep.subr.mxu0 0.0
    %370 = vmatpush1.msra.mxu0 0.0
    %371 = vmatprep.subr.mxu0 0.0
    %372 = vmatpush1.msra.mxu0 0.0
    %373 = vmatprep.subr.mxu0 0.0
    %374 = vmatpush1.msra.mxu0 0.0
    %375 = vmatprep.subr.mxu0 0.0
    %376 = vmatpush1.msra.mxu0 0.0
    %377 = vmatprep.subr.mxu0 0.0
    %378 = vmatpush1.msra.mxu0 0.0
    %379 = vmatprep.subr.mxu0 0.0
    %380 = vmatpush1.msra.mxu0 0.0
    %381 = vmatprep.subr.mxu0 0.0
    %382 = vmatpush1.msra.mxu0 0.0
    %383 = vmatprep.subr.mxu0 0.0
    %384 = vmatpush1.msra.mxu0 0.0
    %385 = vmatprep.subr.mxu0 0.0
    %386 = vmatpush1.msra.mxu0 0.0
    %387 = vmatprep.subr.mxu0 0.0
    %388 = vmatpush1.msra.mxu0 0.0
    %389 = vmatprep.subr.mxu0 %v350
    %390 = vmatpush1.msra.mxu0 %v349
    %391 = vmatprep.subr.mxu0 0.0
    %392 = vmatpush2.msra.mxu0 0.0
    %393 = vmatprep.subr.mxu0 0.0
    %394 = vmatpush2.msra.mxu0 0.0
    %395 = vmatprep.subr.mxu0 0.0
    %396 = vmatpush2.msra.mxu0 0.0
    %397 = vmatprep.subr.mxu0 0.0
    %398 = vmatpush2.msra.mxu0 0.0
    %399 = vmatprep.subr.mxu0 0.0
    %400 = vmatpush2.msra.mxu0 0.0
    %401 = vmatprep.subr.mxu0 0.0
    %402 = vmatpush2.msra.mxu0 0.0
    %403 = vmatprep.subr.mxu0 0.0
    %404 = vmatpush2.msra.mxu0 0.0
    %405 = vmatprep.subr.mxu0 0.0
    %406 = vmatpush2.msra.mxu0 0.0
    %407 = vmatprep.subr.mxu0 0.0
    %408 = vmatpush2.msra.mxu0 0.0
    %409 = vmatprep.subr.mxu0 0.0
    %410 = vmatpush2.msra.mxu0 0.0
    %411 = vmatprep.subr.mxu0 0.0
    %412 = vmatpush2.msra.mxu0 0.0
    %413 = vmatprep.subr.mxu0 0.0
    %414 = vmatpush2.msra.mxu0 0.0
    %415 = vmatprep.subr.mxu0 0.0
    %416 = vmatpush2.msra.mxu0 0.0
    %417 = vmatprep.subr.mxu0 0.0
    %418 = vmatpush2.msra.mxu0 0.0
    %419 = vmatprep.subr.mxu0 0.0
    %420 = vmatpush2.msra.mxu0 0.0
    %421 = vmatprep.subr.mxu0 0.0
    %422 = vmatpush2.msra.mxu0 0.0
    %423 = vmatprep.mubr.f32.mxu0 0.0
    %424 = vmatmul.mubr.f32.gmra.mxu0 %v357
    %v425 = vpop.f32.mrf.mxu0
    %v426 = vadd.f32 %v354, %v425
    %v427 = vpop.f32.mrf.mxu0
    %v428 = vadd.f32 %v354, %v427
    %429 = vdwg.mxu0
    %v430 = vmax.f32 %v426, 0.0
    %v431 = vmax.f32 %v428, 0.0
    %432 = vrot.lane.b32.xlu0 %v430, 17
    %v433 = vpop.permute.xlu0 %432
    %434 = vrot.lane.b32.xlu0 %v431, 17
    %v435 = vpop.permute.xlu0 %434
    %v436 = vsel %vm114, %v433, %v435
    %v437 = vsel %vm114, %v435, %v433
    %v438 = vmul.f32 %v437, %v121
    %v439 = vmul.f32 %v436, %v125
    %440 = vrot.lane.b32.xlu0 %v430, 16
    %v441 = vpop.permute.xlu0 %440
    %442 = vrot.lane.b32.xlu0 %v431, 16
    %v443 = vpop.permute.xlu0 %442
    %v444 = vsel %vm134, %v441, %v443
    %v445 = vsel %vm134, %v443, %v441
    %v446 = vmul.f32 %v445, %v141
    %v447 = vmul.f32 %v444, %v145
    %448 = vrot.lane.b32.xlu0 %v430, 15
    %v449 = vpop.permute.xlu0 %448
    %450 = vrot.lane.b32.xlu0 %v431, 15
    %v451 = vpop.permute.xlu0 %450
    %v452 = vsel %vm154, %v449, %v451
    %v453 = vsel %vm154, %v451, %v449
    %v454 = vmul.f32 %v453, %v161
    %v455 = vmul.f32 %v452, %v165
    %456 = vrot.lane.b32.xlu0 %v430, 1
    %v457 = vpop.permute.xlu0 %456
    %458 = vrot.lane.b32.xlu0 %v431, 1
    %v459 = vpop.permute.xlu0 %458
    %v460 = vsel %vm174, %v457, %v459
    %v461 = vsel %vm174, %v459, %v457
    %v462 = vmul.f32 %v461, %v181
    %v463 = vmul.f32 %v460, %v185
    %464 = vrot.lane.b32.xlu0 %v430, 127
    %v465 = vpop.permute.xlu0 %464
    %466 = vrot.lane.b32.xlu0 %v431, 127
    %v467 = vpop.permute.xlu0 %466
    %v468 = vsel %vm194, %v465, %v467
    %v469 = vsel %vm194, %v467, %v465
    %v470 = vmul.f32 %v468, %v201
    %v471 = vmul.f32 %v469, %v205
    %472 = vrot.lane.b32.xlu0 %v430, 113
    %v473 = vpop.permute.xlu0 %472
    %474 = vrot.lane.b32.xlu0 %v431, 113
    %v475 = vpop.permute.xlu0 %474
    %v476 = vsel %vm214, %v473, %v475
    %v477 = vsel %vm214, %v475, %v473
    %v478 = vmul.f32 %v476, %v221
    %v479 = vmul.f32 %v477, %v225
    %480 = vrot.lane.b32.xlu0 %v430, 112
    %v481 = vpop.permute.xlu0 %480
    %482 = vrot.lane.b32.xlu0 %v431, 112
    %v483 = vpop.permute.xlu0 %482
    %v484 = vsel %vm234, %v481, %v483
    %v485 = vsel %vm234, %v483, %v481
    %v486 = vmul.f32 %v484, %v241
    %v487 = vmul.f32 %v485, %v245
    %488 = vrot.lane.b32.xlu0 %v430, 111
    %v489 = vpop.permute.xlu0 %488
    %490 = vrot.lane.b32.xlu0 %v431, 111
    %v491 = vpop.permute.xlu0 %490
    %v492 = vsel %vm254, %v489, %v491
    %v493 = vsel %vm254, %v491, %v489
    %v494 = vmul.f32 %v492, %v261
    %v495 = vmul.f32 %v493, %v265
    %497 = vset.pattern.permute.xlu0 72
    %498 = vperm.xlu0 %497, %v93
    %v499 = vpop.permute.xlu0 %498
    %v501 = vsel %vm275, %v93, 0
    %503 = vmatprep.subr.mxu0 0.0
    %504 = vmatpush1.msra.mxu0 0.0
    %505 = vmatprep.subr.mxu0 0.0
    %506 = vmatpush1.msra.mxu0 0.0
    %507 = vmatprep.subr.mxu0 0.0
    %508 = vmatpush1.msra.mxu0 0.0
    %509 = vmatprep.subr.mxu0 0.0
    %510 = vmatpush1.msra.mxu0 0.0
    %511 = vmatprep.subr.mxu0 0.0
    %512 = vmatpush1.msra.mxu0 0.0
    %513 = vmatprep.subr.mxu0 0.0
    %514 = vmatpush1.msra.mxu0 0.0
    %515 = vmatprep.subr.mxu0 0.0
    %516 = vmatpush1.msra.mxu0 0.0
    %517 = vmatprep.subr.mxu0 %v495
    %518 = vmatpush1.msra.mxu0 %v494
    %519 = vmatprep.subr.mxu0 %v487
    %520 = vmatpush1.msra.mxu0 %v486
    %521 = vmatprep.subr.mxu0 %v479
    %522 = vmatpush1.msra.mxu0 %v478
    %523 = vmatprep.subr.mxu0 %v471
    %524 = vmatpush1.msra.mxu0 %v470
    %525 = vmatprep.subr.mxu0 %v431
    %526 = vmatpush1.msra.mxu0 %v430
    %527 = vmatprep.subr.mxu0 %v463
    %528 = vmatpush1.msra.mxu0 %v462
    %529 = vmatprep.subr.mxu0 %v455
    %530 = vmatpush1.msra.mxu0 %v454
    %531 = vmatprep.subr.mxu0 %v447
    %532 = vmatpush1.msra.mxu0 %v446
    %533 = vmatprep.subr.mxu0 %v439
    %534 = vmatpush1.msra.mxu0 %v438
    %535 = vmatprep.subr.mxu0 0.0
    %536 = vmatpush2.msra.mxu0 0.0
    %537 = vmatprep.subr.mxu0 0.0
    %538 = vmatpush2.msra.mxu0 0.0
    %539 = vmatprep.subr.mxu0 0.0
    %540 = vmatpush2.msra.mxu0 0.0
    %541 = vmatprep.subr.mxu0 0.0
    %542 = vmatpush2.msra.mxu0 0.0
    %543 = vmatprep.subr.mxu0 0.0
    %544 = vmatpush2.msra.mxu0 0.0
    %545 = vmatprep.subr.mxu0 0.0
    %546 = vmatpush2.msra.mxu0 0.0
    %547 = vmatprep.subr.mxu0 0.0
    %548 = vmatpush2.msra.mxu0 0.0
    %549 = vmatprep.subr.mxu0 0.0
    %550 = vmatpush2.msra.mxu0 0.0
    %551 = vmatprep.subr.mxu0 0.0
    %552 = vmatpush2.msra.mxu0 0.0
    %553 = vmatprep.subr.mxu0 0.0
    %554 = vmatpush2.msra.mxu0 0.0
    %555 = vmatprep.subr.mxu0 0.0
    %556 = vmatpush2.msra.mxu0 0.0
    %557 = vmatprep.subr.mxu0 0.0
    %558 = vmatpush2.msra.mxu0 0.0
    %559 = vmatprep.subr.mxu0 0.0
    %560 = vmatpush2.msra.mxu0 0.0
    %561 = vmatprep.subr.mxu0 0.0
    %562 = vmatpush2.msra.mxu0 0.0
    %563 = vmatprep.subr.mxu0 0.0
    %564 = vmatpush2.msra.mxu0 0.0
    %565 = vmatprep.subr.mxu0 0.0
    %566 = vmatpush2.msra.mxu0 0.0
    %567 = vmatprep.mubr.f32.mxu0 0.0
    %568 = vmatmul.mubr.f32.gmra.mxu0 %v501
    %v569 = vpop.f32.mrf.mxu0
    %v570 = vadd.f32 %v499, %v569
    %v571 = vpop.f32.mrf.mxu0
    %v572 = vadd.f32 %v499, %v571
    %573 = vdwg.mxu0
    %v574 = vadd.f32 %v570, 2.0
    %v575 = vadd.f32 %v572, 2.0
    %v576 = vsub.f32 0.0, %v574
    %v577 = vsub.f32 0.0, %v575
    %v578 = vmul.f32 %v576, 1.442695
    %v579 = vpow.pop %v578
    %v580 = vmul.f32 %v577, 1.442695
    %v581 = vpow.pop %v580
    %v582 = vadd.f32 %v579, 1.0
    %v583 = vadd.f32 %v581, 1.0
    %v584 = vrcp.pop %v582
    %v585 = vmul.f32 1.0, %v584
    %v586 = vrcp.pop %v583
    %v587 = vmul.f32 1.0, %v586
    %v588 = vadd.f32 %v585, 0.0001
    %v589 = vadd.f32 %v587, 0.0001
    %v592 = vcombine.low %v570, %v572
    %v594 = vadd.f32 %v107, %v592
    %v597 = vcombine.low %v588, %v589
    %v598 = vrot.slane %v597, 6
    %v599 = vrot.slane %v598, 4
    %v601 = vmul.f32 %v594, %v599
    %v603 = vcombine.high %v601, %v601
    %605 = vrot.lane.b32.xlu0 %v601, 17
    %v606 = vpop.permute.xlu0 %605
    %607 = vrot.lane.b32.xlu0 %v603, 17
    %v608 = vpop.permute.xlu0 %607
    %v609 = vsel %vm114, %v606, %v608
    %v610 = vsel %vm114, %v608, %v606
    %v611 = vmul.f32 %v610, %v121
    %v612 = vmul.f32 %v609, %v125
    %613 = vrot.lane.b32.xlu0 %v601, 16
    %v614 = vpop.permute.xlu0 %613
    %615 = vrot.lane.b32.xlu0 %v603, 16
    %v616 = vpop.permute.xlu0 %615
    %v617 = vsel %vm134, %v614, %v616
    %v618 = vsel %vm134, %v616, %v614
    %v619 = vmul.f32 %v618, %v141
    %v620 = vmul.f32 %v617, %v145
    %621 = vrot.lane.b32.xlu0 %v601, 15
    %v622 = vpop.permute.xlu0 %621
    %623 = vrot.lane.b32.xlu0 %v603, 15
    %v624 = vpop.permute.xlu0 %623
    %v625 = vsel %vm154, %v622, %v624
    %v626 = vsel %vm154, %v624, %v622
    %v627 = vmul.f32 %v626, %v161
    %v628 = vmul.f32 %v625, %v165
    %629 = vrot.lane.b32.xlu0 %v601, 1
    %v630 = vpop.permute.xlu0 %629
    %631 = vrot.lane.b32.xlu0 %v603, 1
    %v632 = vpop.permute.xlu0 %631
    %v633 = vsel %vm174, %v630, %v632
    %v634 = vsel %vm174, %v632, %v630
    %v635 = vmul.f32 %v634, %v181
    %v636 = vmul.f32 %v633, %v185
    %637 = vrot.lane.b32.xlu0 %v601, 127
    %v638 = vpop.permute.xlu0 %637
    %639 = vrot.lane.b32.xlu0 %v603, 127
    %v640 = vpop.permute.xlu0 %639
    %v641 = vsel %vm194, %v638, %v640
    %v642 = vsel %vm194, %v640, %v638
    %v643 = vmul.f32 %v641, %v201
    %v644 = vmul.f32 %v642, %v205
    %645 = vrot.lane.b32.xlu0 %v601, 113
    %v646 = vpop.permute.xlu0 %645
    %647 = vrot.lane.b32.xlu0 %v603, 113
    %v648 = vpop.permute.xlu0 %647
    %v649 = vsel %vm214, %v646, %v648
    %v650 = vsel %vm214, %v648, %v646
    %v651 = vmul.f32 %v649, %v221
    %v652 = vmul.f32 %v650, %v225
    %653 = vrot.lane.b32.xlu0 %v601, 112
    %v654 = vpop.permute.xlu0 %653
    %655 = vrot.lane.b32.xlu0 %v603, 112
    %v656 = vpop.permute.xlu0 %655
    %v657 = vsel %vm234, %v654, %v656
    %v658 = vsel %vm234, %v656, %v654
    %v659 = vmul.f32 %v657, %v241
    %v660 = vmul.f32 %v658, %v245
    %661 = vrot.lane.b32.xlu0 %v601, 111
    %v662 = vpop.permute.xlu0 %661
    %663 = vrot.lane.b32.xlu0 %v603, 111
    %v664 = vpop.permute.xlu0 %663
    %v665 = vsel %vm254, %v662, %v664
    %v666 = vsel %vm254, %v664, %v662
    %v667 = vmul.f32 %v665, %v261
    %v668 = vmul.f32 %v666, %v265
    %673 = vrot.lane.b32.xlu0 %v94, 126
    %v674 = vpop.permute.xlu0 %673
    %675 = vrot.lane.b32.xlu0 %v95, 126
    %v676 = vpop.permute.xlu0 %675
    %677 = vrot.lane.b32.xlu0 %v96, 126
    %v678 = vpop.permute.xlu0 %677
    %679 = vrot.lane.b32.xlu0 %v97, 126
    %v680 = vpop.permute.xlu0 %679
    %vm681 = vcmask 15360
    %v682 = vsel %vm681, %v674, 0
    %v684 = vsel %vm681, %v676, 0
    %v686 = vsel %vm681, %v678, 0
    %v688 = vsel %vm681, %v680, 0
    %vm690 = vcmask 1041408
    %v692 = vsel %vm690, %v619, 0
    %v695 = vsel %vm690, %v620, 0
    %697 = vmatprep.subr.mxu0 0.0
    %698 = vmatpush1.msra.mxu0 0.0
    %699 = vmatprep.subr.mxu0 0.0
    %700 = vmatpush1.msra.mxu0 0.0
    %701 = vmatprep.subr.mxu0 0.0
    %702 = vmatpush1.msra.mxu0 0.0
    %703 = vmatprep.subr.mxu0 0.0
    %704 = vmatpush1.msra.mxu0 0.0
    %705 = vmatprep.subr.mxu0 0.0
    %706 = vmatpush1.msra.mxu0 0.0
    %707 = vmatprep.subr.mxu0 0.0
    %708 = vmatpush1.msra.mxu0 0.0
    %709 = vmatprep.subr.mxu0 0.0
    %710 = vmatpush1.msra.mxu0 0.0
    %711 = vmatprep.subr.mxu0 0.0
    %712 = vmatpush1.msra.mxu0 0.0
    %713 = vmatprep.subr.mxu0 0.0
    %714 = vmatpush1.msra.mxu0 0.0
    %715 = vmatprep.subr.mxu0 0.0
    %716 = vmatpush1.msra.mxu0 0.0
    %717 = vmatprep.subr.mxu0 0.0
    %718 = vmatpush1.msra.mxu0 0.0
    %719 = vmatprep.subr.mxu0 0.0
    %720 = vmatpush1.msra.mxu0 0.0
    %721 = vmatprep.subr.mxu0 0.0
    %722 = vmatpush1.msra.mxu0 0.0
    %723 = vmatprep.subr.mxu0 0.0
    %724 = vmatpush1.msra.mxu0 0.0
    %725 = vmatprep.subr.mxu0 0.0
    %726 = vmatpush1.msra.mxu0 0.0
    %727 = vmatprep.subr.mxu0 %v695
    %728 = vmatpush1.msra.mxu0 %v692
    %729 = vmatprep.subr.mxu0 0.0
    %730 = vmatpush2.msra.mxu0 0.0
    %731 = vmatprep.subr.mxu0 0.0
    %732 = vmatpush2.msra.mxu0 0.0
    %733 = vmatprep.subr.mxu0 0.0
    %734 = vmatpush2.msra.mxu0 0.0
    %735 = vmatprep.subr.mxu0 0.0
    %736 = vmatpush2.msra.mxu0 0.0
    %737 = vmatprep.subr.mxu0 0.0
    %738 = vmatpush2.msra.mxu0 0.0
    %739 = vmatprep.subr.mxu0 0.0
    %740 = vmatpush2.msra.mxu0 0.0
    %741 = vmatprep.subr.mxu0 0.0
    %742 = vmatpush2.msra.mxu0 0.0
    %743 = vmatprep.subr.mxu0 0.0
    %744 = vmatpush2.msra.mxu0 0.0
    %745 = vmatprep.subr.mxu0 0.0
    %746 = vmatpush2.msra.mxu0 0.0
    %747 = vmatprep.subr.mxu0 0.0
    %748 = vmatpush2.msra.mxu0 0.0
    %749 = vmatprep.subr.mxu0 0.0
    %750 = vmatpush2.msra.mxu0 0.0
    %751 = vmatprep.subr.mxu0 0.0
    %752 = vmatpush2.msra.mxu0 0.0
    %753 = vmatprep.subr.mxu0 0.0
    %754 = vmatpush2.msra.mxu0 0.0
    %755 = vmatprep.subr.mxu0 0.0
    %756 = vmatpush2.msra.mxu0 0.0
    %757 = vmatprep.subr.mxu0 0.0
    %758 = vmatpush2.msra.mxu0 0.0
    %759 = vmatprep.subr.mxu0 0.0
    %760 = vmatpush2.msra.mxu0 0.0
    %761 = vmatprep.mubr.f32.mxu0 0.0
    %762 = vmatmul.mubr.f32.gmra.mxu0 %v682
    %v763 = vpop.f32.mrf.mxu0
    %v764 = vadd.f32 0.0, %v763
    %v765 = vpop.f32.mrf.mxu0
    %v766 = vadd.f32 0.0, %v765
    %767 = vmatprep.mubr.f32.mxu0 0.0
    %768 = vmatmul.mubr.f32.gmra.mxu0 %v684
    %v769 = vpop.f32.mrf.mxu0
    %v770 = vadd.f32 0.0, %v769
    %v771 = vpop.f32.mrf.mxu0
    %v772 = vadd.f32 0.0, %v771
    %773 = vmatprep.mubr.f32.mxu0 0.0
    %774 = vmatmul.mubr.f32.gmra.mxu0 %v686
    %v775 = vpop.f32.mrf.mxu0
    %v776 = vadd.f32 0.0, %v775
    %v777 = vpop.f32.mrf.mxu0
    %v778 = vadd.f32 0.0, %v777
    %779 = vmatprep.mubr.f32.mxu0 0.0
    %780 = vmatmul.mubr.f32.gmra.mxu0 %v688
    %v781 = vpop.f32.mrf.mxu0
    %v782 = vadd.f32 0.0, %v781
    %v783 = vpop.f32.mrf.mxu0
    %v784 = vadd.f32 0.0, %v783
    %785 = vdwg.mxu0
    %v786 = vsel %vm681, %v94, 0
    %v788 = vsel %vm681, %v95, 0
    %v790 = vsel %vm681, %v96, 0
    %v792 = vsel %vm681, %v97, 0
    %v795 = vsel %vm690, %v611, 0
    %v798 = vsel %vm690, %v612, 0
    %800 = vmatprep.subr.mxu0 0.0
    %801 = vmatpush1.msra.mxu0 0.0
    %802 = vmatprep.subr.mxu0 0.0
    %803 = vmatpush1.msra.mxu0 0.0
    %804 = vmatprep.subr.mxu0 0.0
    %805 = vmatpush1.msra.mxu0 0.0
    %806 = vmatprep.subr.mxu0 0.0
    %807 = vmatpush1.msra.mxu0 0.0
    %808 = vmatprep.subr.mxu0 0.0
    %809 = vmatpush1.msra.mxu0 0.0
    %810 = vmatprep.subr.mxu0 0.0
    %811 = vmatpush1.msra.mxu0 0.0
    %812 = vmatprep.subr.mxu0 0.0
    %813 = vmatpush1.msra.mxu0 0.0
    %814 = vmatprep.subr.mxu0 0.0
    %815 = vmatpush1.msra.mxu0 0.0
    %816 = vmatprep.subr.mxu0 0.0
    %817 = vmatpush1.msra.mxu0 0.0
    %818 = vmatprep.subr.mxu0 0.0
    %819 = vmatpush1.msra.mxu0 0.0
    %820 = vmatprep.subr.mxu0 0.0
    %821 = vmatpush1.msra.mxu0 0.0
    %822 = vmatprep.subr.mxu0 0.0
    %823 = vmatpush1.msra.mxu0 0.0
    %824 = vmatprep.subr.mxu0 0.0
    %825 = vmatpush1.msra.mxu0 0.0
    %826 = vmatprep.subr.mxu0 0.0
    %827 = vmatpush1.msra.mxu0 0.0
    %828 = vmatprep.subr.mxu0 0.0
    %829 = vmatpush1.msra.mxu0 0.0
    %830 = vmatprep.subr.mxu0 %v798
    %831 = vmatpush1.msra.mxu0 %v795
    %832 = vmatprep.subr.mxu0 0.0
    %833 = vmatpush2.msra.mxu0 0.0
    %834 = vmatprep.subr.mxu0 0.0
    %835 = vmatpush2.msra.mxu0 0.0
    %836 = vmatprep.subr.mxu0 0.0
    %837 = vmatpush2.msra.mxu0 0.0
    %838 = vmatprep.subr.mxu0 0.0
    %839 = vmatpush2.msra.mxu0 0.0
    %840 = vmatprep.subr.mxu0 0.0
    %841 = vmatpush2.msra.mxu0 0.0
    %842 = vmatprep.subr.mxu0 0.0
    %843 = vmatpush2.msra.mxu0 0.0
    %844 = vmatprep.subr.mxu0 0.0
    %845 = vmatpush2.msra.mxu0 0.0
    %846 = vmatprep.subr.mxu0 0.0
    %847 = vmatpush2.msra.mxu0 0.0
    %848 = vmatprep.subr.mxu0 0.0
    %849 = vmatpush2.msra.mxu0 0.0
    %850 = vmatprep.subr.mxu0 0.0
    %851 = vmatpush2.msra.mxu0 0.0
    %852 = vmatprep.subr.mxu0 0.0
    %853 = vmatpush2.msra.mxu0 0.0
    %854 = vmatprep.subr.mxu0 0.0
    %855 = vmatpush2.msra.mxu0 0.0
    %856 = vmatprep.subr.mxu0 0.0
    %857 = vmatpush2.msra.mxu0 0.0
    %858 = vmatprep.subr.mxu0 0.0
    %859 = vmatpush2.msra.mxu0 0.0
    %860 = vmatprep.subr.mxu0 0.0
    %861 = vmatpush2.msra.mxu0 0.0
    %862 = vmatprep.subr.mxu0 0.0
    %863 = vmatpush2.msra.mxu0 0.0
    %864 = vmatprep.mubr.f32.mxu0 0.0
    %865 = vmatmul.mubr.f32.gmra.mxu0 %v786
    %v866 = vpop.f32.mrf.mxu0
    %v867 = vadd.f32 %v764, %v866
    %v868 = vpop.f32.mrf.mxu0
    %v869 = vadd.f32 %v766, %v868
    %870 = vmatprep.mubr.f32.mxu0 0.0
    %871 = vmatmul.mubr.f32.gmra.mxu0 %v788
    %v872 = vpop.f32.mrf.mxu0
    %v873 = vadd.f32 %v770, %v872
    %v874 = vpop.f32.mrf.mxu0
    %v875 = vadd.f32 %v772, %v874
    %876 = vmatprep.mubr.f32.mxu0 0.0
    %877 = vmatmul.mubr.f32.gmra.mxu0 %v790
    %v878 = vpop.f32.mrf.mxu0
    %v879 = vadd.f32 %v776, %v878
    %v880 = vpop.f32.mrf.mxu0
    %v881 = vadd.f32 %v778, %v880
    %882 = vmatprep.mubr.f32.mxu0 0.0
    %883 = vmatmul.mubr.f32.gmra.mxu0 %v792
    %v884 = vpop.f32.mrf.mxu0
    %v885 = vadd.f32 %v782, %v884
    %v886 = vpop.f32.mrf.mxu0
    %v887 = vadd.f32 %v784, %v886
    %888 = vdwg.mxu0
    %889 = vrot.lane.b32.xlu0 %v94, 124
    %v890 = vpop.permute.xlu0 %889
    %891 = vrot.lane.b32.xlu0 %v95, 124
    %v892 = vpop.permute.xlu0 %891
    %893 = vrot.lane.b32.xlu0 %v96, 124
    %v894 = vpop.permute.xlu0 %893
    %895 = vrot.lane.b32.xlu0 %v97, 124
    %v896 = vpop.permute.xlu0 %895
    %v897 = vsel %vm681, %v890, 0
    %v899 = vsel %vm681, %v892, 0
    %v901 = vsel %vm681, %v894, 0
    %v903 = vsel %vm681, %v896, 0
    %v906 = vsel %vm690, %v627, 0
    %v909 = vsel %vm690, %v628, 0
    %911 = vmatprep.subr.mxu0 0.0
    %912 = vmatpush1.msra.mxu0 0.0
    %913 = vmatprep.subr.mxu0 0.0
    %914 = vmatpush1.msra.mxu0 0.0
    %915 = vmatprep.subr.mxu0 0.0
    %916 = vmatpush1.msra.mxu0 0.0
    %917 = vmatprep.subr.mxu0 0.0
    %918 = vmatpush1.msra.mxu0 0.0
    %919 = vmatprep.subr.mxu0 0.0
    %920 = vmatpush1.msra.mxu0 0.0
    %921 = vmatprep.subr.mxu0 0.0
    %922 = vmatpush1.msra.mxu0 0.0
    %923 = vmatprep.subr.mxu0 0.0
    %924 = vmatpush1.msra.mxu0 0.0
    %925 = vmatprep.subr.mxu0 0.0
    %926 = vmatpush1.msra.mxu0 0.0
    %927 = vmatprep.subr.mxu0 0.0
    %928 = vmatpush1.msra.mxu0 0.0
    %929 = vmatprep.subr.mxu0 0.0
    %930 = vmatpush1.msra.mxu0 0.0
    %931 = vmatprep.subr.mxu0 0.0
    %932 = vmatpush1.msra.mxu0 0.0
    %933 = vmatprep.subr.mxu0 0.0
    %934 = vmatpush1.msra.mxu0 0.0
    %935 = vmatprep.subr.mxu0 0.0
    %936 = vmatpush1.msra.mxu0 0.0
    %937 = vmatprep.subr.mxu0 0.0
    %938 = vmatpush1.msra.mxu0 0.0
    %939 = vmatprep.subr.mxu0 0.0
    %940 = vmatpush1.msra.mxu0 0.0
    %941 = vmatprep.subr.mxu0 %v909
    %942 = vmatpush1.msra.mxu0 %v906
    %943 = vmatprep.subr.mxu0 0.0
    %944 = vmatpush2.msra.mxu0 0.0
    %945 = vmatprep.subr.mxu0 0.0
    %946 = vmatpush2.msra.mxu0 0.0
    %947 = vmatprep.subr.mxu0 0.0
    %948 = vmatpush2.msra.mxu0 0.0
    %949 = vmatprep.subr.mxu0 0.0
    %950 = vmatpush2.msra.mxu0 0.0
    %951 = vmatprep.subr.mxu0 0.0
    %952 = vmatpush2.msra.mxu0 0.0
    %953 = vmatprep.subr.mxu0 0.0
    %954 = vmatpush2.msra.mxu0 0.0
    %955 = vmatprep.subr.mxu0 0.0
    %956 = vmatpush2.msra.mxu0 0.0
    %957 = vmatprep.subr.mxu0 0.0
    %958 = vmatpush2.msra.mxu0 0.0
    %959 = vmatprep.subr.mxu0 0.0
    %960 = vmatpush2.msra.mxu0 0.0
    %961 = vmatprep.subr.mxu0 0.0
    %962 = vmatpush2.msra.mxu0 0.0
    %963 = vmatprep.subr.mxu0 0.0
    %964 = vmatpush2.msra.mxu0 0.0
    %965 = vmatprep.subr.mxu0 0.0
    %966 = vmatpush2.msra.mxu0 0.0
    %967 = vmatprep.subr.mxu0 0.0
    %968 = vmatpush2.msra.mxu0 0.0
    %969 = vmatprep.subr.mxu0 0.0
    %970 = vmatpush2.msra.mxu0 0.0
    %971 = vmatprep.subr.mxu0 0.0
    %972 = vmatpush2.msra.mxu0 0.0
    %973 = vmatprep.subr.mxu0 0.0
    %974 = vmatpush2.msra.mxu0 0.0
    %975 = vmatprep.mubr.f32.mxu0 0.0
    %976 = vmatmul.mubr.f32.gmra.mxu0 %v897
    %v977 = vpop.f32.mrf.mxu0
    %v978 = vadd.f32 0.0, %v977
    %v979 = vpop.f32.mrf.mxu0
    %v980 = vadd.f32 0.0, %v979
    %981 = vmatprep.mubr.f32.mxu0 0.0
    %982 = vmatmul.mubr.f32.gmra.mxu0 %v899
    %v983 = vpop.f32.mrf.mxu0
    %v984 = vadd.f32 0.0, %v983
    %v985 = vpop.f32.mrf.mxu0
    %v986 = vadd.f32 0.0, %v985
    %987 = vmatprep.mubr.f32.mxu0 0.0
    %988 = vmatmul.mubr.f32.gmra.mxu0 %v901
    %v989 = vpop.f32.mrf.mxu0
    %v990 = vadd.f32 0.0, %v989
    %v991 = vpop.f32.mrf.mxu0
    %v992 = vadd.f32 0.0, %v991
    %993 = vmatprep.mubr.f32.mxu0 0.0
    %994 = vmatmul.mubr.f32.gmra.mxu0 %v903
    %v995 = vpop.f32.mrf.mxu0
    %v996 = vadd.f32 0.0, %v995
    %v997 = vpop.f32.mrf.mxu0
    %v998 = vadd.f32 0.0, %v997
    %999 = vdwg.mxu0
    %v1000 = vadd.f32 %v867, %v978
    %v1001 = vadd.f32 %v869, %v980
    %v1002 = vadd.f32 %v873, %v984
    %v1003 = vadd.f32 %v875, %v986
    %v1004 = vadd.f32 %v879, %v990
    %v1005 = vadd.f32 %v881, %v992
    %v1006 = vadd.f32 %v885, %v996
    %v1007 = vadd.f32 %v887, %v998
    %1008 = vrot.lane.b32.xlu0 %v94, 122
    %v1009 = vpop.permute.xlu0 %1008
    %1010 = vrot.lane.b32.xlu0 %v95, 122
    %v1011 = vpop.permute.xlu0 %1010
    %1012 = vrot.lane.b32.xlu0 %v96, 122
    %v1013 = vpop.permute.xlu0 %1012
    %1014 = vrot.lane.b32.xlu0 %v97, 122
    %v1015 = vpop.permute.xlu0 %1014
    %v1016 = vsel %vm681, %v1009, 0
    %v1018 = vsel %vm681, %v1011, 0
    %v1020 = vsel %vm681, %v1013, 0
    %v1022 = vsel %vm681, %v1015, 0
    %v1025 = vsel %vm690, %v635, 0
    %v1028 = vsel %vm690, %v636, 0
    %1030 = vmatprep.subr.mxu0 0.0
    %1031 = vmatpush1.msra.mxu0 0.0
    %1032 = vmatprep.subr.mxu0 0.0
    %1033 = vmatpush1.msra.mxu0 0.0
    %1034 = vmatprep.subr.mxu0 0.0
    %1035 = vmatpush1.msra.mxu0 0.0
    %1036 = vmatprep.subr.mxu0 0.0
    %1037 = vmatpush1.msra.mxu0 0.0
    %1038 = vmatprep.subr.mxu0 0.0
    %1039 = vmatpush1.msra.mxu0 0.0
    %1040 = vmatprep.subr.mxu0 0.0
    %1041 = vmatpush1.msra.mxu0 0.0
    %1042 = vmatprep.subr.mxu0 0.0
    %1043 = vmatpush1.msra.mxu0 0.0
    %1044 = vmatprep.subr.mxu0 0.0
    %1045 = vmatpush1.msra.mxu0 0.0
    %1046 = vmatprep.subr.mxu0 0.0
    %1047 = vmatpush1.msra.mxu0 0.0
    %1048 = vmatprep.subr.mxu0 0.0
    %1049 = vmatpush1.msra.mxu0 0.0
    %1050 = vmatprep.subr.mxu0 0.0
    %1051 = vmatpush1.msra.mxu0 0.0
    %1052 = vmatprep.subr.mxu0 0.0
    %1053 = vmatpush1.msra.mxu0 0.0
    %1054 = vmatprep.subr.mxu0 0.0
    %1055 = vmatpush1.msra.mxu0 0.0
    %1056 = vmatprep.subr.mxu0 0.0
    %1057 = vmatpush1.msra.mxu0 0.0
    %1058 = vmatprep.subr.mxu0 0.0
    %1059 = vmatpush1.msra.mxu0 0.0
    %1060 = vmatprep.subr.mxu0 %v1028
    %1061 = vmatpush1.msra.mxu0 %v1025
    %1062 = vmatprep.subr.mxu0 0.0
    %1063 = vmatpush2.msra.mxu0 0.0
    %1064 = vmatprep.subr.mxu0 0.0
    %1065 = vmatpush2.msra.mxu0 0.0
    %1066 = vmatprep.subr.mxu0 0.0
    %1067 = vmatpush2.msra.mxu0 0.0
    %1068 = vmatprep.subr.mxu0 0.0
    %1069 = vmatpush2.msra.mxu0 0.0
    %1070 = vmatprep.subr.mxu0 0.0
    %1071 = vmatpush2.msra.mxu0 0.0
    %1072 = vmatprep.subr.mxu0 0.0
    %1073 = vmatpush2.msra.mxu0 0.0
    %1074 = vmatprep.subr.mxu0 0.0
    %1075 = vmatpush2.msra.mxu0 0.0
    %1076 = vmatprep.subr.mxu0 0.0
    %1077 = vmatpush2.msra.mxu0 0.0
    %1078 = vmatprep.subr.mxu0 0.0
    %1079 = vmatpush2.msra.mxu0 0.0
    %1080 = vmatprep.subr.mxu0 0.0
    %1081 = vmatpush2.msra.mxu0 0.0
    %1082 = vmatprep.subr.mxu0 0.0
    %1083 = vmatpush2.msra.mxu0 0.0
    %1084 = vmatprep.subr.mxu0 0.0
    %1085 = vmatpush2.msra.mxu0 0.0
    %1086 = vmatprep.subr.mxu0 0.0
    %1087 = vmatpush2.msra.mxu0 0.0
    %1088 = vmatprep.subr.mxu0 0.0
    %1089 = vmatpush2.msra.mxu0 0.0
    %1090 = vmatprep.subr.mxu0 0.0
    %1091 = vmatpush2.msra.mxu0 0.0
    %1092 = vmatprep.subr.mxu0 0.0
    %1093 = vmatpush2.msra.mxu0 0.0
    %1094 = vmatprep.mubr.f32.mxu0 0.0
    %1095 = vmatmul.mubr.f32.gmra.mxu0 %v1016
    %v1096 = vpop.f32.mrf.mxu0
    %v1097 = vadd.f32 0.0, %v1096
    %v1098 = vpop.f32.mrf.mxu0
    %v1099 = vadd.f32 0.0, %v1098
    %1100 = vmatprep.mubr.f32.mxu0 0.0
    %1101 = vmatmul.mubr.f32.gmra.mxu0 %v1018
    %v1102 = vpop.f32.mrf.mxu0
    %v1103 = vadd.f32 0.0, %v1102
    %v1104 = vpop.f32.mrf.mxu0
    %v1105 = vadd.f32 0.0, %v1104
    %1106 = vmatprep.mubr.f32.mxu0 0.0
    %1107 = vmatmul.mubr.f32.gmra.mxu0 %v1020
    %v1108 = vpop.f32.mrf.mxu0
    %v1109 = vadd.f32 0.0, %v1108
    %v1110 = vpop.f32.mrf.mxu0
    %v1111 = vadd.f32 0.0, %v1110
    %1112 = vmatprep.mubr.f32.mxu0 0.0
    %1113 = vmatmul.mubr.f32.gmra.mxu0 %v1022
    %v1114 = vpop.f32.mrf.mxu0
    %v1115 = vadd.f32 0.0, %v1114
    %v1116 = vpop.f32.mrf.mxu0
    %v1117 = vadd.f32 0.0, %v1116
    %1118 = vdwg.mxu0
    %v1119 = vadd.f32 %v1000, %v1097
    %v1120 = vadd.f32 %v1001, %v1099
    %v1121 = vadd.f32 %v1002, %v1103
    %v1122 = vadd.f32 %v1003, %v1105
    %v1123 = vadd.f32 %v1004, %v1109
    %v1124 = vadd.f32 %v1005, %v1111
    %v1125 = vadd.f32 %v1006, %v1115
    %v1126 = vadd.f32 %v1007, %v1117
    %1127 = vrot.lane.b32.xlu0 %v94, 120
    %v1128 = vpop.permute.xlu0 %1127
    %1129 = vrot.lane.b32.xlu0 %v95, 120
    %v1130 = vpop.permute.xlu0 %1129
    %1131 = vrot.lane.b32.xlu0 %v96, 120
    %v1132 = vpop.permute.xlu0 %1131
    %1133 = vrot.lane.b32.xlu0 %v97, 120
    %v1134 = vpop.permute.xlu0 %1133
    %v1135 = vsel %vm681, %v1128, 0
    %v1137 = vsel %vm681, %v1130, 0
    %v1139 = vsel %vm681, %v1132, 0
    %v1141 = vsel %vm681, %v1134, 0
    %v1143 = vsel %vm690, %v601, 0
    %v1145 = vsel %vm690, %v603, 0
    %1147 = vmatprep.subr.mxu0 0.0
    %1148 = vmatpush1.msra.mxu0 0.0
    %1149 = vmatprep.subr.mxu0 0.0
    %1150 = vmatpush1.msra.mxu0 0.0
    %1151 = vmatprep.subr.mxu0 0.0
    %1152 = vmatpush1.msra.mxu0 0.0
    %1153 = vmatprep.subr.mxu0 0.0
    %1154 = vmatpush1.msra.mxu0 0.0
    %1155 = vmatprep.subr.mxu0 0.0
    %1156 = vmatpush1.msra.mxu0 0.0
    %1157 = vmatprep.subr.mxu0 0.0
    %1158 = vmatpush1.msra.mxu0 0.0
    %1159 = vmatprep.subr.mxu0 0.0
    %1160 = vmatpush1.msra.mxu0 0.0
    %1161 = vmatprep.subr.mxu0 0.0
    %1162 = vmatpush1.msra.mxu0 0.0
    %1163 = vmatprep.subr.mxu0 0.0
    %1164 = vmatpush1.msra.mxu0 0.0
    %1165 = vmatprep.subr.mxu0 0.0
    %1166 = vmatpush1.msra.mxu0 0.0
    %1167 = vmatprep.subr.mxu0 0.0
    %1168 = vmatpush1.msra.mxu0 0.0
    %1169 = vmatprep.subr.mxu0 0.0
    %1170 = vmatpush1.msra.mxu0 0.0
    %1171 = vmatprep.subr.mxu0 0.0
    %1172 = vmatpush1.msra.mxu0 0.0
    %1173 = vmatprep.subr.mxu0 0.0
    %1174 = vmatpush1.msra.mxu0 0.0
    %1175 = vmatprep.subr.mxu0 0.0
    %1176 = vmatpush1.msra.mxu0 0.0
    %1177 = vmatprep.subr.mxu0 %v1145
    %1178 = vmatpush1.msra.mxu0 %v1143
    %1179 = vmatprep.subr.mxu0 0.0
    %1180 = vmatpush2.msra.mxu0 0.0
    %1181 = vmatprep.subr.mxu0 0.0
    %1182 = vmatpush2.msra.mxu0 0.0
    %1183 = vmatprep.subr.mxu0 0.0
    %1184 = vmatpush2.msra.mxu0 0.0
    %1185 = vmatprep.subr.mxu0 0.0
    %1186 = vmatpush2.msra.mxu0 0.0
    %1187 = vmatprep.subr.mxu0 0.0
    %1188 = vmatpush2.msra.mxu0 0.0
    %1189 = vmatprep.subr.mxu0 0.0
    %1190 = vmatpush2.msra.mxu0 0.0
    %1191 = vmatprep.subr.mxu0 0.0
    %1192 = vmatpush2.msra.mxu0 0.0
    %1193 = vmatprep.subr.mxu0 0.0
    %1194 = vmatpush2.msra.mxu0 0.0
    %1195 = vmatprep.subr.mxu0 0.0
    %1196 = vmatpush2.msra.mxu0 0.0
    %1197 = vmatprep.subr.mxu0 0.0
    %1198 = vmatpush2.msra.mxu0 0.0
    %1199 = vmatprep.subr.mxu0 0.0
    %1200 = vmatpush2.msra.mxu0 0.0
    %1201 = vmatprep.subr.mxu0 0.0
    %1202 = vmatpush2.msra.mxu0 0.0
    %1203 = vmatprep.subr.mxu0 0.0
    %1204 = vmatpush2.msra.mxu0 0.0
    %1205 = vmatprep.subr.mxu0 0.0
    %1206 = vmatpush2.msra.mxu0 0.0
    %1207 = vmatprep.subr.mxu0 0.0
    %1208 = vmatpush2.msra.mxu0 0.0
    %1209 = vmatprep.subr.mxu0 0.0
    %1210 = vmatpush2.msra.mxu0 0.0
    %1211 = vmatprep.mubr.f32.mxu0 0.0
    %1212 = vmatmul.mubr.f32.gmra.mxu0 %v1135
    %v1213 = vpop.f32.mrf.mxu0
    %v1214 = vadd.f32 0.0, %v1213
    %v1215 = vpop.f32.mrf.mxu0
    %v1216 = vadd.f32 0.0, %v1215
    %1217 = vmatprep.mubr.f32.mxu0 0.0
    %1218 = vmatmul.mubr.f32.gmra.mxu0 %v1137
    %v1219 = vpop.f32.mrf.mxu0
    %v1220 = vadd.f32 0.0, %v1219
    %v1221 = vpop.f32.mrf.mxu0
    %v1222 = vadd.f32 0.0, %v1221
    %1223 = vmatprep.mubr.f32.mxu0 0.0
    %1224 = vmatmul.mubr.f32.gmra.mxu0 %v1139
    %v1225 = vpop.f32.mrf.mxu0
    %v1226 = vadd.f32 0.0, %v1225
    %v1227 = vpop.f32.mrf.mxu0
    %v1228 = vadd.f32 0.0, %v1227
    %1229 = vmatprep.mubr.f32.mxu0 0.0
    %1230 = vmatmul.mubr.f32.gmra.mxu0 %v1141
    %v1231 = vpop.f32.mrf.mxu0
    %v1232 = vadd.f32 0.0, %v1231
    %v1233 = vpop.f32.mrf.mxu0
    %v1234 = vadd.f32 0.0, %v1233
    %1235 = vdwg.mxu0
    %v1236 = vadd.f32 %v1119, %v1214
    %v1237 = vadd.f32 %v1120, %v1216
    %v1238 = vadd.f32 %v1121, %v1220
    %v1239 = vadd.f32 %v1122, %v1222
    %v1240 = vadd.f32 %v1123, %v1226
    %v1241 = vadd.f32 %v1124, %v1228
    %v1242 = vadd.f32 %v1125, %v1232
    %v1243 = vadd.f32 %v1126, %v1234
    %1244 = vrot.lane.b32.xlu0 %v94, 118
    %v1245 = vpop.permute.xlu0 %1244
    %1246 = vrot.lane.b32.xlu0 %v95, 118
    %v1247 = vpop.permute.xlu0 %1246
    %1248 = vrot.lane.b32.xlu0 %v96, 118
    %v1249 = vpop.permute.xlu0 %1248
    %1250 = vrot.lane.b32.xlu0 %v97, 118
    %v1251 = vpop.permute.xlu0 %1250
    %v1252 = vsel %vm681, %v1245, 0
    %v1254 = vsel %vm681, %v1247, 0
    %v1256 = vsel %vm681, %v1249, 0
    %v1258 = vsel %vm681, %v1251, 0
    %v1261 = vsel %vm690, %v643, 0
    %v1264 = vsel %vm690, %v644, 0
    %1266 = vmatprep.subr.mxu0 0.0
    %1267 = vmatpush1.msra.mxu0 0.0
    %1268 = vmatprep.subr.mxu0 0.0
    %1269 = vmatpush1.msra.mxu0 0.0
    %1270 = vmatprep.subr.mxu0 0.0
    %1271 = vmatpush1.msra.mxu0 0.0
    %1272 = vmatprep.subr.mxu0 0.0
    %1273 = vmatpush1.msra.mxu0 0.0
    %1274 = vmatprep.subr.mxu0 0.0
    %1275 = vmatpush1.msra.mxu0 0.0
    %1276 = vmatprep.subr.mxu0 0.0
    %1277 = vmatpush1.msra.mxu0 0.0
    %1278 = vmatprep.subr.mxu0 0.0
    %1279 = vmatpush1.msra.mxu0 0.0
    %1280 = vmatprep.subr.mxu0 0.0
    %1281 = vmatpush1.msra.mxu0 0.0
    %1282 = vmatprep.subr.mxu0 0.0
    %1283 = vmatpush1.msra.mxu0 0.0
    %1284 = vmatprep.subr.mxu0 0.0
    %1285 = vmatpush1.msra.mxu0 0.0
    %1286 = vmatprep.subr.mxu0 0.0
    %1287 = vmatpush1.msra.mxu0 0.0
    %1288 = vmatprep.subr.mxu0 0.0
    %1289 = vmatpush1.msra.mxu0 0.0
    %1290 = vmatprep.subr.mxu0 0.0
    %1291 = vmatpush1.msra.mxu0 0.0
    %1292 = vmatprep.subr.mxu0 0.0
    %1293 = vmatpush1.msra.mxu0 0.0
    %1294 = vmatprep.subr.mxu0 0.0
    %1295 = vmatpush1.msra.mxu0 0.0
    %1296 = vmatprep.subr.mxu0 %v1264
    %1297 = vmatpush1.msra.mxu0 %v1261
    %1298 = vmatprep.subr.mxu0 0.0
    %1299 = vmatpush2.msra.mxu0 0.0
    %1300 = vmatprep.subr.mxu0 0.0
    %1301 = vmatpush2.msra.mxu0 0.0
    %1302 = vmatprep.subr.mxu0 0.0
    %1303 = vmatpush2.msra.mxu0 0.0
    %1304 = vmatprep.subr.mxu0 0.0
    %1305 = vmatpush2.msra.mxu0 0.0
    %1306 = vmatprep.subr.mxu0 0.0
    %1307 = vmatpush2.msra.mxu0 0.0
    %1308 = vmatprep.subr.mxu0 0.0
    %1309 = vmatpush2.msra.mxu0 0.0
    %1310 = vmatprep.subr.mxu0 0.0
    %1311 = vmatpush2.msra.mxu0 0.0
    %1312 = vmatprep.subr.mxu0 0.0
    %1313 = vmatpush2.msra.mxu0 0.0
    %1314 = vmatprep.subr.mxu0 0.0
    %1315 = vmatpush2.msra.mxu0 0.0
    %1316 = vmatprep.subr.mxu0 0.0
    %1317 = vmatpush2.msra.mxu0 0.0
    %1318 = vmatprep.subr.mxu0 0.0
    %1319 = vmatpush2.msra.mxu0 0.0
    %1320 = vmatprep.subr.mxu0 0.0
    %1321 = vmatpush2.msra.mxu0 0.0
    %1322 = vmatprep.subr.mxu0 0.0
    %1323 = vmatpush2.msra.mxu0 0.0
    %1324 = vmatprep.subr.mxu0 0.0
    %1325 = vmatpush2.msra.mxu0 0.0
    %1326 = vmatprep.subr.mxu0 0.0
    %1327 = vmatpush2.msra.mxu0 0.0
    %1328 = vmatprep.subr.mxu0 0.0
    %1329 = vmatpush2.msra.mxu0 0.0
    %1330 = vmatprep.mubr.f32.mxu0 0.0
    %1331 = vmatmul.mubr.f32.gmra.mxu0 %v1252
    %v1332 = vpop.f32.mrf.mxu0
    %v1333 = vadd.f32 0.0, %v1332
    %v1334 = vpop.f32.mrf.mxu0
    %v1335 = vadd.f32 0.0, %v1334
    %1336 = vmatprep.mubr.f32.mxu0 0.0
    %1337 = vmatmul.mubr.f32.gmra.mxu0 %v1254
    %v1338 = vpop.f32.mrf.mxu0
    %v1339 = vadd.f32 0.0, %v1338
    %v1340 = vpop.f32.mrf.mxu0
    %v1341 = vadd.f32 0.0, %v1340
    %1342 = vmatprep.mubr.f32.mxu0 0.0
    %1343 = vmatmul.mubr.f32.gmra.mxu0 %v1256
    %v1344 = vpop.f32.mrf.mxu0
    %v1345 = vadd.f32 0.0, %v1344
    %v1346 = vpop.f32.mrf.mxu0
    %v1347 = vadd.f32 0.0, %v1346
    %1348 = vmatprep.mubr.f32.mxu0 0.0
    %1349 = vmatmul.mubr.f32.gmra.mxu0 %v1258
    %v1350 = vpop.f32.mrf.mxu0
    %v1351 = vadd.f32 0.0, %v1350
    %v1352 = vpop.f32.mrf.mxu0
    %v1353 = vadd.f32 0.0, %v1352
    %1354 = vdwg.mxu0
    %v1355 = vadd.f32 %v1236, %v1333
    %v1356 = vadd.f32 %v1237, %v1335
    %v1357 = vadd.f32 %v1238, %v1339
    %v1358 = vadd.f32 %v1239, %v1341
    %v1359 = vadd.f32 %v1240, %v1345
    %v1360 = vadd.f32 %v1241, %v1347
    %v1361 = vadd.f32 %v1242, %v1351
    %v1362 = vadd.f32 %v1243, %v1353
    %1363 = vrot.lane.b32.xlu0 %v94, 116
    %v1364 = vpop.permute.xlu0 %1363
    %1365 = vrot.lane.b32.xlu0 %v95, 116
    %v1366 = vpop.permute.xlu0 %1365
    %1367 = vrot.lane.b32.xlu0 %v96, 116
    %v1368 = vpop.permute.xlu0 %1367
    %1369 = vrot.lane.b32.xlu0 %v97, 116
    %v1370 = vpop.permute.xlu0 %1369
    %v1371 = vsel %vm681, %v1364, 0
    %v1373 = vsel %vm681, %v1366, 0
    %v1375 = vsel %vm681, %v1368, 0
    %v1377 = vsel %vm681, %v1370, 0
    %v1380 = vsel %vm690, %v651, 0
    %v1383 = vsel %vm690, %v652, 0
    %1385 = vmatprep.subr.mxu0 0.0
    %1386 = vmatpush1.msra.mxu0 0.0
    %1387 = vmatprep.subr.mxu0 0.0
    %1388 = vmatpush1.msra.mxu0 0.0
    %1389 = vmatprep.subr.mxu0 0.0
    %1390 = vmatpush1.msra.mxu0 0.0
    %1391 = vmatprep.subr.mxu0 0.0
    %1392 = vmatpush1.msra.mxu0 0.0
    %1393 = vmatprep.subr.mxu0 0.0
    %1394 = vmatpush1.msra.mxu0 0.0
    %1395 = vmatprep.subr.mxu0 0.0
    %1396 = vmatpush1.msra.mxu0 0.0
    %1397 = vmatprep.subr.mxu0 0.0
    %1398 = vmatpush1.msra.mxu0 0.0
    %1399 = vmatprep.subr.mxu0 0.0
    %1400 = vmatpush1.msra.mxu0 0.0
    %1401 = vmatprep.subr.mxu0 0.0
    %1402 = vmatpush1.msra.mxu0 0.0
    %1403 = vmatprep.subr.mxu0 0.0
    %1404 = vmatpush1.msra.mxu0 0.0
    %1405 = vmatprep.subr.mxu0 0.0
    %1406 = vmatpush1.msra.mxu0 0.0
    %1407 = vmatprep.subr.mxu0 0.0
    %1408 = vmatpush1.msra.mxu0 0.0
    %1409 = vmatprep.subr.mxu0 0.0
    %1410 = vmatpush1.msra.mxu0 0.0
    %1411 = vmatprep.subr.mxu0 0.0
    %1412 = vmatpush1.msra.mxu0 0.0
    %1413 = vmatprep.subr.mxu0 0.0
    %1414 = vmatpush1.msra.mxu0 0.0
    %1415 = vmatprep.subr.mxu0 %v1383
    %1416 = vmatpush1.msra.mxu0 %v1380
    %1417 = vmatprep.subr.mxu0 0.0
    %1418 = vmatpush2.msra.mxu0 0.0
    %1419 = vmatprep.subr.mxu0 0.0
    %1420 = vmatpush2.msra.mxu0 0.0
    %1421 = vmatprep.subr.mxu0 0.0
    %1422 = vmatpush2.msra.mxu0 0.0
    %1423 = vmatprep.subr.mxu0 0.0
    %1424 = vmatpush2.msra.mxu0 0.0
    %1425 = vmatprep.subr.mxu0 0.0
    %1426 = vmatpush2.msra.mxu0 0.0
    %1427 = vmatprep.subr.mxu0 0.0
    %1428 = vmatpush2.msra.mxu0 0.0
    %1429 = vmatprep.subr.mxu0 0.0
    %1430 = vmatpush2.msra.mxu0 0.0
    %1431 = vmatprep.subr.mxu0 0.0
    %1432 = vmatpush2.msra.mxu0 0.0
    %1433 = vmatprep.subr.mxu0 0.0
    %1434 = vmatpush2.msra.mxu0 0.0
    %1435 = vmatprep.subr.mxu0 0.0
    %1436 = vmatpush2.msra.mxu0 0.0
    %1437 = vmatprep.subr.mxu0 0.0
    %1438 = vmatpush2.msra.mxu0 0.0
    %1439 = vmatprep.subr.mxu0 0.0
    %1440 = vmatpush2.msra.mxu0 0.0
    %1441 = vmatprep.subr.mxu0 0.0
    %1442 = vmatpush2.msra.mxu0 0.0
    %1443 = vmatprep.subr.mxu0 0.0
    %1444 = vmatpush2.msra.mxu0 0.0
    %1445 = vmatprep.subr.mxu0 0.0
    %1446 = vmatpush2.msra.mxu0 0.0
    %1447 = vmatprep.subr.mxu0 0.0
    %1448 = vmatpush2.msra.mxu0 0.0
    %1449 = vmatprep.mubr.f32.mxu0 0.0
    %1450 = vmatmul.mubr.f32.gmra.mxu0 %v1371
    %v1451 = vpop.f32.mrf.mxu0
    %v1452 = vadd.f32 0.0, %v1451
    %v1453 = vpop.f32.mrf.mxu0
    %v1454 = vadd.f32 0.0, %v1453
    %1455 = vmatprep.mubr.f32.mxu0 0.0
    %1456 = vmatmul.mubr.f32.gmra.mxu0 %v1373
    %v1457 = vpop.f32.mrf.mxu0
    %v1458 = vadd.f32 0.0, %v1457
    %v1459 = vpop.f32.mrf.mxu0
    %v1460 = vadd.f32 0.0, %v1459
    %1461 = vmatprep.mubr.f32.mxu0 0.0
    %1462 = vmatmul.mubr.f32.gmra.mxu0 %v1375
    %v1463 = vpop.f32.mrf.mxu0
    %v1464 = vadd.f32 0.0, %v1463
    %v1465 = vpop.f32.mrf.mxu0
    %v1466 = vadd.f32 0.0, %v1465
    %1467 = vmatprep.mubr.f32.mxu0 0.0
    %1468 = vmatmul.mubr.f32.gmra.mxu0 %v1377
    %v1469 = vpop.f32.mrf.mxu0
    %v1470 = vadd.f32 0.0, %v1469
    %v1471 = vpop.f32.mrf.mxu0
    %v1472 = vadd.f32 0.0, %v1471
    %1473 = vdwg.mxu0
    %v1474 = vadd.f32 %v1355, %v1452
    %v1475 = vadd.f32 %v1356, %v1454
    %v1476 = vadd.f32 %v1357, %v1458
    %v1477 = vadd.f32 %v1358, %v1460
    %v1478 = vadd.f32 %v1359, %v1464
    %v1479 = vadd.f32 %v1360, %v1466
    %v1480 = vadd.f32 %v1361, %v1470
    %v1481 = vadd.f32 %v1362, %v1472
    %1482 = vrot.lane.b32.xlu0 %v94, 114
    %v1483 = vpop.permute.xlu0 %1482
    %1484 = vrot.lane.b32.xlu0 %v95, 114
    %v1485 = vpop.permute.xlu0 %1484
    %1486 = vrot.lane.b32.xlu0 %v96, 114
    %v1487 = vpop.permute.xlu0 %1486
    %1488 = vrot.lane.b32.xlu0 %v97, 114
    %v1489 = vpop.permute.xlu0 %1488
    %v1490 = vsel %vm681, %v1483, 0
    %v1492 = vsel %vm681, %v1485, 0
    %v1494 = vsel %vm681, %v1487, 0
    %v1496 = vsel %vm681, %v1489, 0
    %v1499 = vsel %vm690, %v659, 0
    %v1502 = vsel %vm690, %v660, 0
    %1504 = vmatprep.subr.mxu0 0.0
    %1505 = vmatpush1.msra.mxu0 0.0
    %1506 = vmatprep.subr.mxu0 0.0
    %1507 = vmatpush1.msra.mxu0 0.0
    %1508 = vmatprep.subr.mxu0 0.0
    %1509 = vmatpush1.msra.mxu0 0.0
    %1510 = vmatprep.subr.mxu0 0.0
    %1511 = vmatpush1.msra.mxu0 0.0
    %1512 = vmatprep.subr.mxu0 0.0
    %1513 = vmatpush1.msra.mxu0 0.0
    %1514 = vmatprep.subr.mxu0 0.0
    %1515 = vmatpush1.msra.mxu0 0.0
    %1516 = vmatprep.subr.mxu0 0.0
    %1517 = vmatpush1.msra.mxu0 0.0
    %1518 = vmatprep.subr.mxu0 0.0
    %1519 = vmatpush1.msra.mxu0 0.0
    %1520 = vmatprep.subr.mxu0 0.0
    %1521 = vmatpush1.msra.mxu0 0.0
    %1522 = vmatprep.subr.mxu0 0.0
    %1523 = vmatpush1.msra.mxu0 0.0
    %1524 = vmatprep.subr.mxu0 0.0
    %1525 = vmatpush1.msra.mxu0 0.0
    %1526 = vmatprep.subr.mxu0 0.0
    %1527 = vmatpush1.msra.mxu0 0.0
    %1528 = vmatprep.subr.mxu0 0.0
    %1529 = vmatpush1.msra.mxu0 0.0
    %1530 = vmatprep.subr.mxu0 0.0
    %1531 = vmatpush1.msra.mxu0 0.0
    %1532 = vmatprep.subr.mxu0 0.0
    %1533 = vmatpush1.msra.mxu0 0.0
    %1534 = vmatprep.subr.mxu0 %v1502
    %1535 = vmatpush1.msra.mxu0 %v1499
    %1536 = vmatprep.subr.mxu0 0.0
    %1537 = vmatpush2.msra.mxu0 0.0
    %1538 = vmatprep.subr.mxu0 0.0
    %1539 = vmatpush2.msra.mxu0 0.0
    %1540 = vmatprep.subr.mxu0 0.0
    %1541 = vmatpush2.msra.mxu0 0.0
    %1542 = vmatprep.subr.mxu0 0.0
    %1543 = vmatpush2.msra.mxu0 0.0
    %1544 = vmatprep.subr.mxu0 0.0
    %1545 = vmatpush2.msra.mxu0 0.0
    %1546 = vmatprep.subr.mxu0 0.0
    %1547 = vmatpush2.msra.mxu0 0.0
    %1548 = vmatprep.subr.mxu0 0.0
    %1549 = vmatpush2.msra.mxu0 0.0
    %1550 = vmatprep.subr.mxu0 0.0
    %1551 = vmatpush2.msra.mxu0 0.0
    %1552 = vmatprep.subr.mxu0 0.0
    %1553 = vmatpush2.msra.mxu0 0.0
    %1554 = vmatprep.subr.mxu0 0.0
    %1555 = vmatpush2.msra.mxu0 0.0
    %1556 = vmatprep.subr.mxu0 0.0
    %1557 = vmatpush2.msra.mxu0 0.0
    %1558 = vmatprep.subr.mxu0 0.0
    %1559 = vmatpush2.msra.mxu0 0.0
    %1560 = vmatprep.subr.mxu0 0.0
    %1561 = vmatpush2.msra.mxu0 0.0
    %1562 = vmatprep.subr.mxu0 0.0
    %1563 = vmatpush2.msra.mxu0 0.0
    %1564 = vmatprep.subr.mxu0 0.0
    %1565 = vmatpush2.msra.mxu0 0.0
    %1566 = vmatprep.subr.mxu0 0.0
    %1567 = vmatpush2.msra.mxu0 0.0
    %1568 = vmatprep.mubr.f32.mxu0 0.0
    %1569 = vmatmul.mubr.f32.gmra.mxu0 %v1490
    %v1570 = vpop.f32.mrf.mxu0
    %v1571 = vadd.f32 0.0, %v1570
    %v1572 = vpop.f32.mrf.mxu0
    %v1573 = vadd.f32 0.0, %v1572
    %1574 = vmatprep.mubr.f32.mxu0 0.0
    %1575 = vmatmul.mubr.f32.gmra.mxu0 %v1492
    %v1576 = vpop.f32.mrf.mxu0
    %v1577 = vadd.f32 0.0, %v1576
    %v1578 = vpop.f32.mrf.mxu0
    %v1579 = vadd.f32 0.0, %v1578
    %1580 = vmatprep.mubr.f32.mxu0 0.0
    %1581 = vmatmul.mubr.f32.gmra.mxu0 %v1494
    %v1582 = vpop.f32.mrf.mxu0
    %v1583 = vadd.f32 0.0, %v1582
    %v1584 = vpop.f32.mrf.mxu0
    %v1585 = vadd.f32 0.0, %v1584
    %1586 = vmatprep.mubr.f32.mxu0 0.0
    %1587 = vmatmul.mubr.f32.gmra.mxu0 %v1496
    %v1588 = vpop.f32.mrf.mxu0
    %v1589 = vadd.f32 0.0, %v1588
    %v1590 = vpop.f32.mrf.mxu0
    %v1591 = vadd.f32 0.0, %v1590
    %1592 = vdwg.mxu0
    %v1593 = vadd.f32 %v1474, %v1571
    %v1594 = vadd.f32 %v1475, %v1573
    %v1595 = vadd.f32 %v1476, %v1577
    %v1596 = vadd.f32 %v1477, %v1579
    %v1597 = vadd.f32 %v1478, %v1583
    %v1598 = vadd.f32 %v1479, %v1585
    %v1599 = vadd.f32 %v1480, %v1589
    %v1600 = vadd.f32 %v1481, %v1591
    %1601 = vrot.lane.b32.xlu0 %v94, 112
    %v1602 = vpop.permute.xlu0 %1601
    %1603 = vrot.lane.b32.xlu0 %v95, 112
    %v1604 = vpop.permute.xlu0 %1603
    %1605 = vrot.lane.b32.xlu0 %v96, 112
    %v1606 = vpop.permute.xlu0 %1605
    %1607 = vrot.lane.b32.xlu0 %v97, 112
    %v1608 = vpop.permute.xlu0 %1607
    %v1609 = vsel %vm681, %v1602, 0
    %v1611 = vsel %vm681, %v1604, 0
    %v1613 = vsel %vm681, %v1606, 0
    %v1615 = vsel %vm681, %v1608, 0
    %v1618 = vsel %vm690, %v667, 0
    %v1621 = vsel %vm690, %v668, 0
    %1623 = vmatprep.subr.mxu0 0.0
    %1624 = vmatpush1.msra.mxu0 0.0
    %1625 = vmatprep.subr.mxu0 0.0
    %1626 = vmatpush1.msra.mxu0 0.0
    %1627 = vmatprep.subr.mxu0 0.0
    %1628 = vmatpush1.msra.mxu0 0.0
    %1629 = vmatprep.subr.mxu0 0.0
    %1630 = vmatpush1.msra.mxu0 0.0
    %1631 = vmatprep.subr.mxu0 0.0
    %1632 = vmatpush1.msra.mxu0 0.0
    %1633 = vmatprep.subr.mxu0 0.0
    %1634 = vmatpush1.msra.mxu0 0.0
    %1635 = vmatprep.subr.mxu0 0.0
    %1636 = vmatpush1.msra.mxu0 0.0
    %1637 = vmatprep.subr.mxu0 0.0
    %1638 = vmatpush1.msra.mxu0 0.0
    %1639 = vmatprep.subr.mxu0 0.0
    %1640 = vmatpush1.msra.mxu0 0.0
    %1641 = vmatprep.subr.mxu0 0.0
    %1642 = vmatpush1.msra.mxu0 0.0
    %1643 = vmatprep.subr.mxu0 0.0
    %1644 = vmatpush1.msra.mxu0 0.0
    %1645 = vmatprep.subr.mxu0 0.0
    %1646 = vmatpush1.msra.mxu0 0.0
    %1647 = vmatprep.subr.mxu0 0.0
    %1648 = vmatpush1.msra.mxu0 0.0
    %1649 = vmatprep.subr.mxu0 0.0
    %1650 = vmatpush1.msra.mxu0 0.0
    %1651 = vmatprep.subr.mxu0 0.0
    %1652 = vmatpush1.msra.mxu0 0.0
    %1653 = vmatprep.subr.mxu0 %v1621
    %1654 = vmatpush1.msra.mxu0 %v1618
    %1655 = vmatprep.subr.mxu0 0.0
    %1656 = vmatpush2.msra.mxu0 0.0
    %1657 = vmatprep.subr.mxu0 0.0
    %1658 = vmatpush2.msra.mxu0 0.0
    %1659 = vmatprep.subr.mxu0 0.0
    %1660 = vmatpush2.msra.mxu0 0.0
    %1661 = vmatprep.subr.mxu0 0.0
    %1662 = vmatpush2.msra.mxu0 0.0
    %1663 = vmatprep.subr.mxu0 0.0
    %1664 = vmatpush2.msra.mxu0 0.0
    %1665 = vmatprep.subr.mxu0 0.0
    %1666 = vmatpush2.msra.mxu0 0.0
    %1667 = vmatprep.subr.mxu0 0.0
    %1668 = vmatpush2.msra.mxu0 0.0
    %1669 = vmatprep.subr.mxu0 0.0
    %1670 = vmatpush2.msra.mxu0 0.0
    %1671 = vmatprep.subr.mxu0 0.0
    %1672 = vmatpush2.msra.mxu0 0.0
    %1673 = vmatprep.subr.mxu0 0.0
    %1674 = vmatpush2.msra.mxu0 0.0
    %1675 = vmatprep.subr.mxu0 0.0
    %1676 = vmatpush2.msra.mxu0 0.0
    %1677 = vmatprep.subr.mxu0 0.0
    %1678 = vmatpush2.msra.mxu0 0.0
    %1679 = vmatprep.subr.mxu0 0.0
    %1680 = vmatpush2.msra.mxu0 0.0
    %1681 = vmatprep.subr.mxu0 0.0
    %1682 = vmatpush2.msra.mxu0 0.0
    %1683 = vmatprep.subr.mxu0 0.0
    %1684 = vmatpush2.msra.mxu0 0.0
    %1685 = vmatprep.subr.mxu0 0.0
    %1686 = vmatpush2.msra.mxu0 0.0
    %1687 = vmatprep.mubr.f32.mxu0 0.0
    %1688 = vmatmul.mubr.f32.gmra.mxu0 %v1609
    %v1689 = vpop.f32.mrf.mxu0
    %v1690 = vadd.f32 0.0, %v1689
    %v1691 = vpop.f32.mrf.mxu0
    %v1692 = vadd.f32 0.0, %v1691
    %1693 = vmatprep.mubr.f32.mxu0 0.0
    %1694 = vmatmul.mubr.f32.gmra.mxu0 %v1611
    %v1695 = vpop.f32.mrf.mxu0
    %v1696 = vadd.f32 0.0, %v1695
    %v1697 = vpop.f32.mrf.mxu0
    %v1698 = vadd.f32 0.0, %v1697
    %1699 = vmatprep.mubr.f32.mxu0 0.0
    %1700 = vmatmul.mubr.f32.gmra.mxu0 %v1613
    %v1701 = vpop.f32.mrf.mxu0
    %v1702 = vadd.f32 0.0, %v1701
    %v1703 = vpop.f32.mrf.mxu0
    %v1704 = vadd.f32 0.0, %v1703
    %1705 = vmatprep.mubr.f32.mxu0 0.0
    %1706 = vmatmul.mubr.f32.gmra.mxu0 %v1615
    %v1707 = vpop.f32.mrf.mxu0
    %v1708 = vadd.f32 0.0, %v1707
    %v1709 = vpop.f32.mrf.mxu0
    %v1710 = vadd.f32 0.0, %v1709
    %1711 = vdwg.mxu0
    %v1712 = vadd.f32 %v1593, %v1690
    %v1713 = vadd.f32 %v1594, %v1692
    %v1714 = vadd.f32 %v1595, %v1696
    %v1715 = vadd.f32 %v1596, %v1698
    %v1716 = vadd.f32 %v1597, %v1702
    %v1717 = vadd.f32 %v1598, %v1704
    %v1718 = vadd.f32 %v1599, %v1708
    %v1719 = vadd.f32 %v1600, %v1710
    %1720 = vset.pattern.permute.xlu0 18
    %1721 = vperm.xlu0 %1720, %v94
    %v1722 = vpop.permute.xlu0 %1721
    %1724 = vset.pattern.permute.xlu0 18
    %1725 = vperm.xlu0 %1724, %v95
    %v1726 = vpop.permute.xlu0 %1725
    %1728 = vset.pattern.permute.xlu0 18
    %1729 = vperm.xlu0 %1728, %v96
    %v1730 = vpop.permute.xlu0 %1729
    %1732 = vset.pattern.permute.xlu0 18
    %1733 = vperm.xlu0 %1732, %v97
    %v1734 = vpop.permute.xlu0 %1733
    %v1736 = vadd.f32 %v1712, %v1722
    %v1737 = vadd.f32 %v1713, %v1722
    %v1738 = vadd.f32 %v1714, %v1726
    %v1739 = vadd.f32 %v1715, %v1726
    %v1740 = vadd.f32 %v1716, %v1730
    %v1741 = vadd.f32 %v1717, %v1730
    %v1742 = vadd.f32 %v1718, %v1734
    %v1743 = vadd.f32 %v1719, %v1734
    %v1744 = vmax.f32 %v1736, 0.0
    %v1745 = vmax.f32 %v1737, 0.0
    %v1746 = vmax.f32 %v1738, 0.0
    %v1747 = vmax.f32 %v1739, 0.0
    %v1748 = vmax.f32 %v1740, 0.0
    %v1749 = vmax.f32 %v1741, 0.0
    %v1750 = vmax.f32 %v1742, 0.0
    %v1751 = vmax.f32 %v1743, 0.0
    %1753 = vset.pattern.permute.xlu0 32
    %1754 = vperm.xlu0 %1753, %v98
    %v1755 = vpop.permute.xlu0 %1754
    %1758 = vset.pattern.permute.xlu0 32
    %1759 = vperm.xlu0 %1758, %v99
    %v1760 = vpop.permute.xlu0 %1759
    %1763 = vset.pattern.permute.xlu0 32
    %1764 = vperm.xlu0 %1763, %v100
    %v1765 = vpop.permute.xlu0 %1764
    %1768 = vset.pattern.permute.xlu0 32
    %1769 = vperm.xlu0 %1768, %v101
    %v1770 = vpop.permute.xlu0 %1769
    %vm1772 = vcmask 261120
    %v1773 = vsel %vm1772, %v98, 0
    %v1775 = vsel %vm1772, %v99, 0
    %v1777 = vsel %vm1772, %v100, 0
    %v1779 = vsel %vm1772, %v101, 0
    %1781 = vmatprep.subr.mxu0 0.0
    %1782 = vmatpush1.msra.mxu0 0.0
    %1783 = vmatprep.subr.mxu0 0.0
    %1784 = vmatpush1.msra.mxu0 0.0
    %1785 = vmatprep.subr.mxu0 0.0
    %1786 = vmatpush1.msra.mxu0 0.0
    %1787 = vmatprep.subr.mxu0 0.0
    %1788 = vmatpush1.msra.mxu0 0.0
    %1789 = vmatprep.subr.mxu0 0.0
    %1790 = vmatpush1.msra.mxu0 0.0
    %1791 = vmatprep.subr.mxu0 0.0
    %1792 = vmatpush1.msra.mxu0 0.0
    %1793 = vmatprep.subr.mxu0 0.0
    %1794 = vmatpush1.msra.mxu0 0.0
    %1795 = vmatprep.subr.mxu0 0.0
    %1796 = vmatpush1.msra.mxu0 0.0
    %1797 = vmatprep.subr.mxu0 0.0
    %1798 = vmatpush1.msra.mxu0 0.0
    %1799 = vmatprep.subr.mxu0 0.0
    %1800 = vmatpush1.msra.mxu0 0.0
    %1801 = vmatprep.subr.mxu0 0.0
    %1802 = vmatpush1.msra.mxu0 0.0
    %1803 = vmatprep.subr.mxu0 0.0
    %1804 = vmatpush1.msra.mxu0 0.0
    %1805 = vmatprep.subr.mxu0 %v1751
    %1806 = vmatpush1.msra.mxu0 %v1750
    %1807 = vmatprep.subr.mxu0 %v1749
    %1808 = vmatpush1.msra.mxu0 %v1748
    %1809 = vmatprep.subr.mxu0 %v1747
    %1810 = vmatpush1.msra.mxu0 %v1746
    %1811 = vmatprep.subr.mxu0 %v1745
    %1812 = vmatpush1.msra.mxu0 %v1744
    %1813 = vmatprep.subr.mxu0 0.0
    %1814 = vmatpush2.msra.mxu0 0.0
    %1815 = vmatprep.subr.mxu0 0.0
    %1816 = vmatpush2.msra.mxu0 0.0
    %1817 = vmatprep.subr.mxu0 0.0
    %1818 = vmatpush2.msra.mxu0 0.0
    %1819 = vmatprep.subr.mxu0 0.0
    %1820 = vmatpush2.msra.mxu0 0.0
    %1821 = vmatprep.subr.mxu0 0.0
    %1822 = vmatpush2.msra.mxu0 0.0
    %1823 = vmatprep.subr.mxu0 0.0
    %1824 = vmatpush2.msra.mxu0 0.0
    %1825 = vmatprep.subr.mxu0 0.0
    %1826 = vmatpush2.msra.mxu0 0.0
    %1827 = vmatprep.subr.mxu0 0.0
    %1828 = vmatpush2.msra.mxu0 0.0
    %1829 = vmatprep.subr.mxu0 0.0
    %1830 = vmatpush2.msra.mxu0 0.0
    %1831 = vmatprep.subr.mxu0 0.0
    %1832 = vmatpush2.msra.mxu0 0.0
    %1833 = vmatprep.subr.mxu0 0.0
    %1834 = vmatpush2.msra.mxu0 0.0
    %1835 = vmatprep.subr.mxu0 0.0
    %1836 = vmatpush2.msra.mxu0 0.0
    %1837 = vmatprep.subr.mxu0 0.0
    %1838 = vmatpush2.msra.mxu0 0.0
    %1839 = vmatprep.subr.mxu0 0.0
    %1840 = vmatpush2.msra.mxu0 0.0
    %1841 = vmatprep.subr.mxu0 0.0
    %1842 = vmatpush2.msra.mxu0 0.0
    %1843 = vmatprep.subr.mxu0 0.0
    %1844 = vmatpush2.msra.mxu0 0.0
    %1845 = vmatprep.mubr.f32.mxu0 0.0
    %1846 = vmatmul.mubr.f32.gmra.mxu0 %v1773
    %v1847 = vpop.f32.mrf.mxu0
    %v1848 = vadd.f32 %v1755, %v1847
    %v1849 = vpop.f32.mrf.mxu0
    %v1850 = vadd.f32 %v1755, %v1849
    %1851 = vmatprep.mubr.f32.mxu0 0.0
    %1852 = vmatmul.mubr.f32.gmra.mxu0 %v1775
    %v1853 = vpop.f32.mrf.mxu0
    %v1854 = vadd.f32 %v1760, %v1853
    %v1855 = vpop.f32.mrf.mxu0
    %v1856 = vadd.f32 %v1760, %v1855
    %1857 = vmatprep.mubr.f32.mxu0 0.0
    %1858 = vmatmul.mubr.f32.gmra.mxu0 %v1777
    %v1859 = vpop.f32.mrf.mxu0
    %v1860 = vadd.f32 %v1765, %v1859
    %v1861 = vpop.f32.mrf.mxu0
    %v1862 = vadd.f32 %v1765, %v1861
    %1863 = vmatprep.mubr.f32.mxu0 0.0
    %1864 = vmatmul.mubr.f32.gmra.mxu0 %v1779
    %v1865 = vpop.f32.mrf.mxu0
    %v1866 = vadd.f32 %v1770, %v1865
    %v1867 = vpop.f32.mrf.mxu0
    %v1868 = vadd.f32 %v1770, %v1867
    %1869 = vdwg.mxu0
    %v1870 = vmax.f32 %v1848, 0.0
    %v1871 = vmax.f32 %v1850, 0.0
    %v1872 = vmax.f32 %v1854, 0.0
    %v1873 = vmax.f32 %v1856, 0.0
    %v1874 = vmax.f32 %v1860, 0.0
    %v1875 = vmax.f32 %v1862, 0.0
    %v1876 = vmax.f32 %v1866, 0.0
    %v1877 = vmax.f32 %v1868, 0.0
    %1878 = vrot.lane.b32.xlu0 %v1870, 17
    %v1879 = vpop.permute.xlu0 %1878
    %1880 = vrot.lane.b32.xlu0 %v1872, 17
    %v1881 = vpop.permute.xlu0 %1880
    %1882 = vrot.lane.b32.xlu0 %v1874, 17
    %v1883 = vpop.permute.xlu0 %1882
    %1884 = vrot.lane.b32.xlu0 %v1876, 17
    %v1885 = vpop.permute.xlu0 %1884
    %1886 = vrot.lane.b32.xlu0 %v1871, 17
    %v1887 = vpop.permute.xlu0 %1886
    %1888 = vrot.lane.b32.xlu0 %v1873, 17
    %v1889 = vpop.permute.xlu0 %1888
    %1890 = vrot.lane.b32.xlu0 %v1875, 17
    %v1891 = vpop.permute.xlu0 %1890
    %1892 = vrot.lane.b32.xlu0 %v1877, 17
    %v1893 = vpop.permute.xlu0 %1892
    %v1894 = vsel %vm114, %v1879, %v1887
    %v1895 = vsel %vm114, %v1881, %v1889
    %v1896 = vsel %vm114, %v1883, %v1891
    %v1897 = vsel %vm114, %v1885, %v1893
    %v1898 = vsel %vm114, %v1887, %v1879
    %v1899 = vsel %vm114, %v1889, %v1881
    %v1900 = vsel %vm114, %v1891, %v1883
    %v1901 = vsel %vm114, %v1893, %v1885
    %v1902 = vmul.f32 %v1898, %v121
    %v1903 = vmul.f32 %v1894, %v125
    %v1904 = vmul.f32 %v1899, %v121
    %v1905 = vmul.f32 %v1895, %v125
    %v1906 = vmul.f32 %v1900, %v121
    %v1907 = vmul.f32 %v1896, %v125
    %v1908 = vmul.f32 %v1901, %v121
    %v1909 = vmul.f32 %v1897, %v125
    %1910 = vrot.lane.b32.xlu0 %v1870, 16
    %v1911 = vpop.permute.xlu0 %1910
    %1912 = vrot.lane.b32.xlu0 %v1872, 16
    %v1913 = vpop.permute.xlu0 %1912
    %1914 = vrot.lane.b32.xlu0 %v1874, 16
    %v1915 = vpop.permute.xlu0 %1914
    %1916 = vrot.lane.b32.xlu0 %v1876, 16
    %v1917 = vpop.permute.xlu0 %1916
    %1918 = vrot.lane.b32.xlu0 %v1871, 16
    %v1919 = vpop.permute.xlu0 %1918
    %1920 = vrot.lane.b32.xlu0 %v1873, 16
    %v1921 = vpop.permute.xlu0 %1920
    %1922 = vrot.lane.b32.xlu0 %v1875, 16
    %v1923 = vpop.permute.xlu0 %1922
    %1924 = vrot.lane.b32.xlu0 %v1877, 16
    %v1925 = vpop.permute.xlu0 %1924
    %v1926 = vsel %vm134, %v1911, %v1919
    %v1927 = vsel %vm134, %v1913, %v1921
    %v1928 = vsel %vm134, %v1915, %v1923
    %v1929 = vsel %vm134, %v1917, %v1925
    %v1930 = vsel %vm134, %v1919, %v1911
    %v1931 = vsel %vm134, %v1921, %v1913
    %v1932 = vsel %vm134, %v1923, %v1915
    %v1933 = vsel %vm134, %v1925, %v1917
    %v1934 = vmul.f32 %v1930, %v141
    %v1935 = vmul.f32 %v1926, %v145
    %v1936 = vmul.f32 %v1931, %v141
    %v1937 = vmul.f32 %v1927, %v145
    %v1938 = vmul.f32 %v1932, %v141
    %v1939 = vmul.f32 %v1928, %v145
    %v1940 = vmul.f32 %v1933, %v141
    %v1941 = vmul.f32 %v1929, %v145
    %1942 = vrot.lane.b32.xlu0 %v1870, 15
    %v1943 = vpop.permute.xlu0 %1942
    %1944 = vrot.lane.b32.xlu0 %v1872, 15
    %v1945 = vpop.permute.xlu0 %1944
    %1946 = vrot.lane.b32.xlu0 %v1874, 15
    %v1947 = vpop.permute.xlu0 %1946
    %1948 = vrot.lane.b32.xlu0 %v1876, 15
    %v1949 = vpop.permute.xlu0 %1948
    %1950 = vrot.lane.b32.xlu0 %v1871, 15
    %v1951 = vpop.permute.xlu0 %1950
    %1952 = vrot.lane.b32.xlu0 %v1873, 15
    %v1953 = vpop.permute.xlu0 %1952
    %1954 = vrot.lane.b32.xlu0 %v1875, 15
    %v1955 = vpop.permute.xlu0 %1954
    %1956 = vrot.lane.b32.xlu0 %v1877, 15
    %v1957 = vpop.permute.xlu0 %1956
    %v1958 = vsel %vm154, %v1943, %v1951
    %v1959 = vsel %vm154, %v1945, %v1953
    %v1960 = vsel %vm154, %v1947, %v1955
    %v1961 = vsel %vm154, %v1949, %v1957
    %v1962 = vsel %vm154, %v1951, %v1943
    %v1963 = vsel %vm154, %v1953, %v1945
    %v1964 = vsel %vm154, %v1955, %v1947
    %v1965 = vsel %vm154, %v1957, %v1949
    %v1966 = vmul.f32 %v1962, %v161
    %v1967 = vmul.f32 %v1958, %v165
    %v1968 = vmul.f32 %v1963, %v161
    %v1969 = vmul.f32 %v1959, %v165
    %v1970 = vmul.f32 %v1964, %v161
    %v1971 = vmul.f32 %v1960, %v165
    %v1972 = vmul.f32 %v1965, %v161
    %v1973 = vmul.f32 %v1961, %v165
    %1974 = vrot.lane.b32.xlu0 %v1870, 1
    %v1975 = vpop.permute.xlu0 %1974
    %1976 = vrot.lane.b32.xlu0 %v1872, 1
    %v1977 = vpop.permute.xlu0 %1976
    %1978 = vrot.lane.b32.xlu0 %v1874, 1
    %v1979 = vpop.permute.xlu0 %1978
    %1980 = vrot.lane.b32.xlu0 %v1876, 1
    %v1981 = vpop.permute.xlu0 %1980
    %1982 = vrot.lane.b32.xlu0 %v1871, 1
    %v1983 = vpop.permute.xlu0 %1982
    %1984 = vrot.lane.b32.xlu0 %v1873, 1
    %v1985 = vpop.permute.xlu0 %1984
    %1986 = vrot.lane.b32.xlu0 %v1875, 1
    %v1987 = vpop.permute.xlu0 %1986
    %1988 = vrot.lane.b32.xlu0 %v1877, 1
    %v1989 = vpop.permute.xlu0 %1988
    %v1990 = vsel %vm174, %v1975, %v1983
    %v1991 = vsel %vm174, %v1977, %v1985
    %v1992 = vsel %vm174, %v1979, %v1987
    %v1993 = vsel %vm174, %v1981, %v1989
    %v1994 = vsel %vm174, %v1983, %v1975
    %v1995 = vsel %vm174, %v1985, %v1977
    %v1996 = vsel %vm174, %v1987, %v1979
    %v1997 = vsel %vm174, %v1989, %v1981
    %v1998 = vmul.f32 %v1994, %v181
    %v1999 = vmul.f32 %v1990, %v185
    %v2000 = vmul.f32 %v1995, %v181
    %v2001 = vmul.f32 %v1991, %v185
    %v2002 = vmul.f32 %v1996, %v181
    %v2003 = vmul.f32 %v1992, %v185
    %v2004 = vmul.f32 %v1997, %v181
    %v2005 = vmul.f32 %v1993, %v185
    %2006 = vrot.lane.b32.xlu0 %v1870, 127
    %v2007 = vpop.permute.xlu0 %2006
    %2008 = vrot.lane.b32.xlu0 %v1872, 127
    %v2009 = vpop.permute.xlu0 %2008
    %2010 = vrot.lane.b32.xlu0 %v1874, 127
    %v2011 = vpop.permute.xlu0 %2010
    %2012 = vrot.lane.b32.xlu0 %v1876, 127
    %v2013 = vpop.permute.xlu0 %2012
    %2014 = vrot.lane.b32.xlu0 %v1871, 127
    %v2015 = vpop.permute.xlu0 %2014
    %2016 = vrot.lane.b32.xlu0 %v1873, 127
    %v2017 = vpop.permute.xlu0 %2016
    %2018 = vrot.lane.b32.xlu0 %v1875, 127
    %v2019 = vpop.permute.xlu0 %2018
    %2020 = vrot.lane.b32.xlu0 %v1877, 127
    %v2021 = vpop.permute.xlu0 %2020
    %v2022 = vsel %vm194, %v2007, %v2015
    %v2023 = vsel %vm194, %v2009, %v2017
    %v2024 = vsel %vm194, %v2011, %v2019
    %v2025 = vsel %vm194, %v2013, %v2021
    %v2026 = vsel %vm194, %v2015, %v2007
    %v2027 = vsel %vm194, %v2017, %v2009
    %v2028 = vsel %vm194, %v2019, %v2011
    %v2029 = vsel %vm194, %v2021, %v2013
    %v2030 = vmul.f32 %v2022, %v201
    %v2031 = vmul.f32 %v2026, %v205
    %v2032 = vmul.f32 %v2023, %v201
    %v2033 = vmul.f32 %v2027, %v205
    %v2034 = vmul.f32 %v2024, %v201
    %v2035 = vmul.f32 %v2028, %v205
    %v2036 = vmul.f32 %v2025, %v201
    %v2037 = vmul.f32 %v2029, %v205
    %2038 = vrot.lane.b32.xlu0 %v1870, 113
    %v2039 = vpop.permute.xlu0 %2038
    %2040 = vrot.lane.b32.xlu0 %v1872, 113
    %v2041 = vpop.permute.xlu0 %2040
    %2042 = vrot.lane.b32.xlu0 %v1874, 113
    %v2043 = vpop.permute.xlu0 %2042
    %2044 = vrot.lane.b32.xlu0 %v1876, 113
    %v2045 = vpop.permute.xlu0 %2044
    %2046 = vrot.lane.b32.xlu0 %v1871, 113
    %v2047 = vpop.permute.xlu0 %2046
    %2048 = vrot.lane.b32.xlu0 %v1873, 113
    %v2049 = vpop.permute.xlu0 %2048
    %2050 = vrot.lane.b32.xlu0 %v1875, 113
    %v2051 = vpop.permute.xlu0 %2050
    %2052 = vrot.lane.b32.xlu0 %v1877, 113
    %v2053 = vpop.permute.xlu0 %2052
    %v2054 = vsel %vm214, %v2039, %v2047
    %v2055 = vsel %vm214, %v2041, %v2049
    %v2056 = vsel %vm214, %v2043, %v2051
    %v2057 = vsel %vm214, %v2045, %v2053
    %v2058 = vsel %vm214, %v2047, %v2039
    %v2059 = vsel %vm214, %v2049, %v2041
    %v2060 = vsel %vm214, %v2051, %v2043
    %v2061 = vsel %vm214, %v2053, %v2045
    %v2062 = vmul.f32 %v2054, %v221
    %v2063 = vmul.f32 %v2058, %v225
    %v2064 = vmul.f32 %v2055, %v221
    %v2065 = vmul.f32 %v2059, %v225
    %v2066 = vmul.f32 %v2056, %v221
    %v2067 = vmul.f32 %v2060, %v225
    %v2068 = vmul.f32 %v2057, %v221
    %v2069 = vmul.f32 %v2061, %v225
    %2070 = vrot.lane.b32.xlu0 %v1870, 112
    %v2071 = vpop.permute.xlu0 %2070
    %2072 = vrot.lane.b32.xlu0 %v1872, 112
    %v2073 = vpop.permute.xlu0 %2072
    %2074 = vrot.lane.b32.xlu0 %v1874, 112
    %v2075 = vpop.permute.xlu0 %2074
    %2076 = vrot.lane.b32.xlu0 %v1876, 112
    %v2077 = vpop.permute.xlu0 %2076
    %2078 = vrot.lane.b32.xlu0 %v1871, 112
    %v2079 = vpop.permute.xlu0 %2078
    %2080 = vrot.lane.b32.xlu0 %v1873, 112
    %v2081 = vpop.permute.xlu0 %2080
    %2082 = vrot.lane.b32.xlu0 %v1875, 112
    %v2083 = vpop.permute.xlu0 %2082
    %2084 = vrot.lane.b32.xlu0 %v1877, 112
    %v2085 = vpop.permute.xlu0 %2084
    %v2086 = vsel %vm234, %v2071, %v2079
    %v2087 = vsel %vm234, %v2073, %v2081
    %v2088 = vsel %vm234, %v2075, %v2083
    %v2089 = vsel %vm234, %v2077, %v2085
    %v2090 = vsel %vm234, %v2079, %v2071
    %v2091 = vsel %vm234, %v2081, %v2073
    %v2092 = vsel %vm234, %v2083, %v2075
    %v2093 = vsel %vm234, %v2085, %v2077
    %v2094 = vmul.f32 %v2086, %v241
    %v2095 = vmul.f32 %v2090, %v245
    %v2096 = vmul.f32 %v2087, %v241
    %v2097 = vmul.f32 %v2091, %v245
    %v2098 = vmul.f32 %v2088, %v241
    %v2099 = vmul.f32 %v2092, %v245
    %v2100 = vmul.f32 %v2089, %v241
    %v2101 = vmul.f32 %v2093, %v245
    %2102 = vrot.lane.b32.xlu0 %v1870, 111
    %v2103 = vpop.permute.xlu0 %2102
    %2104 = vrot.lane.b32.xlu0 %v1872, 111
    %v2105 = vpop.permute.xlu0 %2104
    %2106 = vrot.lane.b32.xlu0 %v1874, 111
    %v2107 = vpop.permute.xlu0 %2106
    %2108 = vrot.lane.b32.xlu0 %v1876, 111
    %v2109 = vpop.permute.xlu0 %2108
    %2110 = vrot.lane.b32.xlu0 %v1871, 111
    %v2111 = vpop.permute.xlu0 %2110
    %2112 = vrot.lane.b32.xlu0 %v1873, 111
    %v2113 = vpop.permute.xlu0 %2112
    %2114 = vrot.lane.b32.xlu0 %v1875, 111
    %v2115 = vpop.permute.xlu0 %2114
    %2116 = vrot.lane.b32.xlu0 %v1877, 111
    %v2117 = vpop.permute.xlu0 %2116
    %v2118 = vsel %vm254, %v2103, %v2111
    %v2119 = vsel %vm254, %v2105, %v2113
    %v2120 = vsel %vm254, %v2107, %v2115
    %v2121 = vsel %vm254, %v2109, %v2117
    %v2122 = vsel %vm254, %v2111, %v2103
    %v2123 = vsel %vm254, %v2113, %v2105
    %v2124 = vsel %vm254, %v2115, %v2107
    %v2125 = vsel %vm254, %v2117, %v2109
    %v2126 = vmul.f32 %v2118, %v261
    %v2127 = vmul.f32 %v2122, %v265
    %v2128 = vmul.f32 %v2119, %v261
    %v2129 = vmul.f32 %v2123, %v265
    %v2130 = vmul.f32 %v2120, %v261
    %v2131 = vmul.f32 %v2124, %v265
    %v2132 = vmul.f32 %v2121, %v261
    %v2133 = vmul.f32 %v2125, %v265
    %2135 = vset.pattern.permute.xlu0 32
    %2136 = vperm.xlu0 %2135, %v104
    %v2137 = vpop.permute.xlu0 %2136
    %v2139 = vsel %vm1772, %v104, 0
    %2141 = vmatprep.subr.mxu0 %v2005
    %2142 = vmatpush1.msra.mxu0 %v2004
    %2143 = vmatprep.subr.mxu0 %v2003
    %2144 = vmatpush1.msra.mxu0 %v2002
    %2145 = vmatprep.subr.mxu0 %v2001
    %2146 = vmatpush1.msra.mxu0 %v2000
    %2147 = vmatprep.subr.mxu0 %v1999
    %2148 = vmatpush1.msra.mxu0 %v1998
    %2149 = vmatprep.subr.mxu0 %v1973
    %2150 = vmatpush1.msra.mxu0 %v1972
    %2151 = vmatprep.subr.mxu0 %v1971
    %2152 = vmatpush1.msra.mxu0 %v1970
    %2153 = vmatprep.subr.mxu0 %v1969
    %2154 = vmatpush1.msra.mxu0 %v1968
    %2155 = vmatprep.subr.mxu0 %v1967
    %2156 = vmatpush1.msra.mxu0 %v1966
    %2157 = vmatprep.subr.mxu0 %v1941
    %2158 = vmatpush1.msra.mxu0 %v1940
    %2159 = vmatprep.subr.mxu0 %v1939
    %2160 = vmatpush1.msra.mxu0 %v1938
    %2161 = vmatprep.subr.mxu0 %v1937
    %2162 = vmatpush1.msra.mxu0 %v1936
    %2163 = vmatprep.subr.mxu0 %v1935
    %2164 = vmatpush1.msra.mxu0 %v1934
    %2165 = vmatprep.subr.mxu0 %v1909
    %2166 = vmatpush1.msra.mxu0 %v1908
    %2167 = vmatprep.subr.mxu0 %v1907
    %2168 = vmatpush1.msra.mxu0 %v1906
    %2169 = vmatprep.subr.mxu0 %v1905
    %2170 = vmatpush1.msra.mxu0 %v1904
    %2171 = vmatprep.subr.mxu0 %v1903
    %2172 = vmatpush1.msra.mxu0 %v1902
    %2173 = vmatprep.subr.mxu0 %v2101
    %2174 = vmatpush2.msra.mxu0 %v2100
    %2175 = vmatprep.subr.mxu0 %v2099
    %2176 = vmatpush2.msra.mxu0 %v2098
    %2177 = vmatprep.subr.mxu0 %v2097
    %2178 = vmatpush2.msra.mxu0 %v2096
    %2179 = vmatprep.subr.mxu0 %v2095
    %2180 = vmatpush2.msra.mxu0 %v2094
    %2181 = vmatprep.subr.mxu0 %v2069
    %2182 = vmatpush2.msra.mxu0 %v2068
    %2183 = vmatprep.subr.mxu0 %v2067
    %2184 = vmatpush2.msra.mxu0 %v2066
    %2185 = vmatprep.subr.mxu0 %v2065
    %2186 = vmatpush2.msra.mxu0 %v2064
    %2187 = vmatprep.subr.mxu0 %v2063
    %2188 = vmatpush2.msra.mxu0 %v2062
    %2189 = vmatprep.subr.mxu0 %v2037
    %2190 = vmatpush2.msra.mxu0 %v2036
    %2191 = vmatprep.subr.mxu0 %v2035
    %2192 = vmatpush2.msra.mxu0 %v2034
    %2193 = vmatprep.subr.mxu0 %v2033
    %2194 = vmatpush2.msra.mxu0 %v2032
    %2195 = vmatprep.subr.mxu0 %v2031
    %2196 = vmatpush2.msra.mxu0 %v2030
    %2197 = vmatprep.subr.mxu0 %v1877
    %2198 = vmatpush2.msra.mxu0 %v1876
    %2199 = vmatprep.subr.mxu0 %v1875
    %2200 = vmatpush2.msra.mxu0 %v1874
    %2201 = vmatprep.subr.mxu0 %v1873
    %2202 = vmatpush2.msra.mxu0 %v1872
    %2203 = vmatprep.subr.mxu0 %v1871
    %2204 = vmatpush2.msra.mxu0 %v1870
    %2205 = vmatprep.mubr.f32.mxu0 %v103
    %2206 = vmatmul.mubr.f32.gmra.mxu0 %v102
    %v2207 = vpop.f32.mrf.mxu0
    %v2208 = vadd.f32 %v2137, %v2207
    %v2209 = vpop.f32.mrf.mxu0
    %v2210 = vadd.f32 %v2137, %v2209
    %2211 = vdwg.mxu0
    %2212 = vmatprep.subr.mxu0 0.0
    %2213 = vmatpush1.msra.mxu0 0.0
    %2214 = vmatprep.subr.mxu0 0.0
    %2215 = vmatpush1.msra.mxu0 0.0
    %2216 = vmatprep.subr.mxu0 0.0
    %2217 = vmatpush1.msra.mxu0 0.0
    %2218 = vmatprep.subr.mxu0 0.0
    %2219 = vmatpush1.msra.mxu0 0.0
    %2220 = vmatprep.subr.mxu0 0.0
    %2221 = vmatpush1.msra.mxu0 0.0
    %2222 = vmatprep.subr.mxu0 0.0
    %2223 = vmatpush1.msra.mxu0 0.0
    %2224 = vmatprep.subr.mxu0 0.0
    %2225 = vmatpush1.msra.mxu0 0.0
    %2226 = vmatprep.subr.mxu0 0.0
    %2227 = vmatpush1.msra.mxu0 0.0
    %2228 = vmatprep.subr.mxu0 0.0
    %2229 = vmatpush1.msra.mxu0 0.0
    %2230 = vmatprep.subr.mxu0 0.0
    %2231 = vmatpush1.msra.mxu0 0.0
    %2232 = vmatprep.subr.mxu0 0.0
    %2233 = vmatpush1.msra.mxu0 0.0
    %2234 = vmatprep.subr.mxu0 0.0
    %2235 = vmatpush1.msra.mxu0 0.0
    %2236 = vmatprep.subr.mxu0 %v2133
    %2237 = vmatpush1.msra.mxu0 %v2132
    %2238 = vmatprep.subr.mxu0 %v2131
    %2239 = vmatpush1.msra.mxu0 %v2130
    %2240 = vmatprep.subr.mxu0 %v2129
    %2241 = vmatpush1.msra.mxu0 %v2128
    %2242 = vmatprep.subr.mxu0 %v2127
    %2243 = vmatpush1.msra.mxu0 %v2126
    %2244 = vmatprep.subr.mxu0 0.0
    %2245 = vmatpush2.msra.mxu0 0.0
    %2246 = vmatprep.subr.mxu0 0.0
    %2247 = vmatpush2.msra.mxu0 0.0
    %2248 = vmatprep.subr.mxu0 0.0
    %2249 = vmatpush2.msra.mxu0 0.0
    %2250 = vmatprep.subr.mxu0 0.0
    %2251 = vmatpush2.msra.mxu0 0.0
    %2252 = vmatprep.subr.mxu0 0.0
    %2253 = vmatpush2.msra.mxu0 0.0
    %2254 = vmatprep.subr.mxu0 0.0
    %2255 = vmatpush2.msra.mxu0 0.0
    %2256 = vmatprep.subr.mxu0 0.0
    %2257 = vmatpush2.msra.mxu0 0.0
    %2258 = vmatprep.subr.mxu0 0.0
    %2259 = vmatpush2.msra.mxu0 0.0
    %2260 = vmatprep.subr.mxu0 0.0
    %2261 = vmatpush2.msra.mxu0 0.0
    %2262 = vmatprep.subr.mxu0 0.0
    %2263 = vmatpush2.msra.mxu0 0.0
    %2264 = vmatprep.subr.mxu0 0.0
    %2265 = vmatpush2.msra.mxu0 0.0
    %2266 = vmatprep.subr.mxu0 0.0
    %2267 = vmatpush2.msra.mxu0 0.0
    %2268 = vmatprep.subr.mxu0 0.0
    %2269 = vmatpush2.msra.mxu0 0.0
    %2270 = vmatprep.subr.mxu0 0.0
    %2271 = vmatpush2.msra.mxu0 0.0
    %2272 = vmatprep.subr.mxu0 0.0
    %2273 = vmatpush2.msra.mxu0 0.0
    %2274 = vmatprep.subr.mxu0 0.0
    %2275 = vmatpush2.msra.mxu0 0.0
    %2276 = vmatprep.mubr.f32.mxu0 0.0
    %2277 = vmatmul.mubr.f32.gmra.mxu0 %v2139
    %v2278 = vpop.f32.mrf.mxu0
    %v2279 = vadd.f32 %v2208, %v2278
    %v2280 = vpop.f32.mrf.mxu0
    %v2281 = vadd.f32 %v2210, %v2280
    %2282 = vdwg.mxu0
    %v2283 = vadd.f32 %v2279, 2.0
    %v2284 = vadd.f32 %v2281, 2.0
    %v2285 = vsub.f32 0.0, %v2283
    %v2286 = vsub.f32 0.0, %v2284
    %v2287 = vmul.f32 %v2285, 1.442695
    %v2288 = vpow.pop %v2287
    %v2289 = vmul.f32 %v2286, 1.442695
    %v2290 = vpow.pop %v2289
    %v2291 = vadd.f32 %v2288, 1.0
    %v2292 = vadd.f32 %v2290, 1.0
    %v2293 = vrcp.pop %v2291
    %v2294 = vmul.f32 1.0, %v2293
    %v2295 = vrcp.pop %v2292
    %v2296 = vmul.f32 1.0, %v2295
    %v2297 = vadd.f32 %v2294, 0.0001
    %v2298 = vadd.f32 %v2296, 0.0001
    %v2301 = vcombine.low %v2279, %v2281
    %v2302 = vrot.slane %v2301, 6
    %v2304 = vadd.f32 %v107, %v2302
    %v2307 = vcombine.low %v2297, %v2298
    %v2309 = vmul.f32 %v2304, %v2307
    %v2312 = vunpack.c.l.s4 1983009808
    %v2313 = vunpack.c.0.s8 %v2312
    %v2314 = vlaneseq
    %v2315 = vshrl.u32 %v2314, 7
    %v2316 = vsub.s32 %v2313, %v2315
    %v2317 = vrot.slane %v2309, %v2316
    %v2318 = vcombine.high %v2317, %v2317
    %2320 = vst [vmem:[#allocation10] sm:$0xf] %v2318
    %v2321 = vlog2.pop %v2297
    %v2322 = vmul.f32 %v2321, 0.6931472
    %v2323 = vlog2.pop %v2298
    %v2324 = vmul.f32 %v2323, 0.6931472
    %v2327 = vrot.slane %v2322, 2
    %v2328 = vrot.slane %v2324, 2
    %v2331 = vsel %vm690, %v2327, 0.0
    %v2332 = vrot.slane %v2331, 4
    %v2333 = vadd.f32 %v2331, %v2332
    %v2334 = vrot.slane %v2333, 2
    %v2335 = vadd.f32 %v2333, %v2334
    %v2336 = vrot.slane %v2335, 1
    %v2337 = vadd.f32 %v2335, %v2336
    %v2338 = vsel %vm690, %v2328, 0.0
    %v2339 = vrot.slane %v2338, 4
    %v2340 = vadd.f32 %v2338, %v2339
    %v2341 = vrot.slane %v2340, 2
    %v2342 = vadd.f32 %v2340, %v2341
    %v2343 = vrot.slane %v2342, 1
    %v2344 = vadd.f32 %v2342, %v2343
    %v2347 = vcombine.low %v2337, %v2344
    %v2349 = vunpack.c.l.s4 1966171168
    %v2350 = vunpack.c.0.s8 %v2349
    %v2351 = vlaneseq
    %v2352 = vshrl.u32 %v2351, 7
    %v2353 = vsub.s32 %v2350, %v2352
    %v2354 = vrot.slane %v2347, %v2353
    %v2356 = vunpack.c.l.s4 1966171168
    %v2357 = vunpack.c.0.s8 %v2356
    %v2358 = vlaneseq
    %v2359 = vshrl.u32 %v2358, 7
    %v2360 = vsub.s32 %v2357, %v2359
    %v2361 = vrot.slane %v2354, %v2360
    %v2363 = vlaneseq
    %vm2364 = vcmp.ge.s32.totalorder %v2363, 0
    %vm2365 = vcmp.lt.s32.totalorder %v2363, 256
    %vm2366 = vmand %vm2364, %vm2365
    %2367 = vst.msk [vmem:[#allocation11] sm:$0x3] %vm2366, %v2361
    %s2368 = scalar_lea.vmem [#allocation5], 16
    %v2369 = vld [vmem:[%s2368] sm:$0xff]
    %v2370 = vld [vmem:[%s2368 + $0x8] sm:$0xff]
    %s2371 = scalar_lea.vmem [#allocation2], 8
    %v2372 = vld [vmem:[%s2371] sm:$0xff]
    %2373 = vrot.lane.b32.xlu0 %v2369, 17
    %v2374 = vpop.permute.xlu0 %2373
    %2375 = vrot.lane.b32.xlu0 %v2370, 17
    %v2376 = vpop.permute.xlu0 %2375
    %v2377 = vsel %vm114, %v2374, %v2376
    %v2378 = vsel %vm114, %v2376, %v2374
    %v2379 = vmul.f32 %v2378, %v121
    %v2380 = vmul.f32 %v2377, %v125
    %2381 = vrot.lane.b32.xlu0 %v2369, 16
    %v2382 = vpop.permute.xlu0 %2381
    %2383 = vrot.lane.b32.xlu0 %v2370, 16
    %v2384 = vpop.permute.xlu0 %2383
    %v2385 = vsel %vm134, %v2382, %v2384
    %v2386 = vsel %vm134, %v2384, %v2382
    %v2387 = vmul.f32 %v2386, %v141
    %v2388 = vmul.f32 %v2385, %v145
    %2389 = vrot.lane.b32.xlu0 %v2369, 15
    %v2390 = vpop.permute.xlu0 %2389
    %2391 = vrot.lane.b32.xlu0 %v2370, 15
    %v2392 = vpop.permute.xlu0 %2391
    %v2393 = vsel %vm154, %v2390, %v2392
    %v2394 = vsel %vm154, %v2392, %v2390
    %v2395 = vmul.f32 %v2394, %v161
    %v2396 = vmul.f32 %v2393, %v165
    %2397 = vrot.lane.b32.xlu0 %v2369, 1
    %v2398 = vpop.permute.xlu0 %2397
    %2399 = vrot.lane.b32.xlu0 %v2370, 1
    %v2400 = vpop.permute.xlu0 %2399
    %v2401 = vsel %vm174, %v2398, %v2400
    %v2402 = vsel %vm174, %v2400, %v2398
    %v2403 = vmul.f32 %v2402, %v181
    %v2404 = vmul.f32 %v2401, %v185
    %2405 = vrot.lane.b32.xlu0 %v2369, 127
    %v2406 = vpop.permute.xlu0 %2405
    %2407 = vrot.lane.b32.xlu0 %v2370, 127
    %v2408 = vpop.permute.xlu0 %2407
    %v2409 = vsel %vm194, %v2406, %v2408
    %v2410 = vsel %vm194, %v2408, %v2406
    %v2411 = vmul.f32 %v2409, %v201
    %v2412 = vmul.f32 %v2410, %v205
    %2413 = vrot.lane.b32.xlu0 %v2369, 113
    %v2414 = vpop.permute.xlu0 %2413
    %2415 = vrot.lane.b32.xlu0 %v2370, 113
    %v2416 = vpop.permute.xlu0 %2415
    %v2417 = vsel %vm214, %v2414, %v2416
    %v2418 = vsel %vm214, %v2416, %v2414
    %v2419 = vmul.f32 %v2417, %v221
    %v2420 = vmul.f32 %v2418, %v225
    %2421 = vrot.lane.b32.xlu0 %v2369, 112
    %v2422 = vpop.permute.xlu0 %2421
    %2423 = vrot.lane.b32.xlu0 %v2370, 112
    %v2424 = vpop.permute.xlu0 %2423
    %v2425 = vsel %vm234, %v2422, %v2424
    %v2426 = vsel %vm234, %v2424, %v2422
    %v2427 = vmul.f32 %v2425, %v241
    %v2428 = vmul.f32 %v2426, %v245
    %2429 = vrot.lane.b32.xlu0 %v2369, 111
    %v2430 = vpop.permute.xlu0 %2429
    %2431 = vrot.lane.b32.xlu0 %v2370, 111
    %v2432 = vpop.permute.xlu0 %2431
    %v2433 = vsel %vm254, %v2430, %v2432
    %v2434 = vsel %vm254, %v2432, %v2430
    %v2435 = vmul.f32 %v2433, %v261
    %v2436 = vmul.f32 %v2434, %v265
    %2437 = vmatprep.subr.mxu0 0.0
    %2438 = vmatpush1.msra.mxu0 0.0
    %2439 = vmatprep.subr.mxu0 0.0
    %2440 = vmatpush1.msra.mxu0 0.0
    %2441 = vmatprep.subr.mxu0 0.0
    %2442 = vmatpush1.msra.mxu0 0.0
    %2443 = vmatprep.subr.mxu0 0.0
    %2444 = vmatpush1.msra.mxu0 0.0
    %2445 = vmatprep.subr.mxu0 0.0
    %2446 = vmatpush1.msra.mxu0 0.0
    %2447 = vmatprep.subr.mxu0 0.0
    %2448 = vmatpush1.msra.mxu0 0.0
    %2449 = vmatprep.subr.mxu0 0.0
    %2450 = vmatpush1.msra.mxu0 0.0
    %2451 = vmatprep.subr.mxu0 %v2436
    %2452 = vmatpush1.msra.mxu0 %v2435
    %2453 = vmatprep.subr.mxu0 %v2428
    %2454 = vmatpush1.msra.mxu0 %v2427
    %2455 = vmatprep.subr.mxu0 %v2420
    %2456 = vmatpush1.msra.mxu0 %v2419
    %2457 = vmatprep.subr.mxu0 %v2412
    %2458 = vmatpush1.msra.mxu0 %v2411
    %2459 = vmatprep.subr.mxu0 %v2370
    %2460 = vmatpush1.msra.mxu0 %v2369
    %2461 = vmatprep.subr.mxu0 %v2404
    %2462 = vmatpush1.msra.mxu0 %v2403
    %2463 = vmatprep.subr.mxu0 %v2396
    %2464 = vmatpush1.msra.mxu0 %v2395
    %2465 = vmatprep.subr.mxu0 %v2388
    %2466 = vmatpush1.msra.mxu0 %v2387
    %2467 = vmatprep.subr.mxu0 %v2380
    %2468 = vmatpush1.msra.mxu0 %v2379
    %2469 = vmatprep.subr.mxu0 0.0
    %2470 = vmatpush2.msra.mxu0 0.0
    %2471 = vmatprep.subr.mxu0 0.0
    %2472 = vmatpush2.msra.mxu0 0.0
    %2473 = vmatprep.subr.mxu0 0.0
    %2474 = vmatpush2.msra.mxu0 0.0
    %2475 = vmatprep.subr.mxu0 0.0
    %2476 = vmatpush2.msra.mxu0 0.0
    %2477 = vmatprep.subr.mxu0 0.0
    %2478 = vmatpush2.msra.mxu0 0.0
    %2479 = vmatprep.subr.mxu0 0.0
    %2480 = vmatpush2.msra.mxu0 0.0
    %2481 = vmatprep.subr.mxu0 0.0
    %2482 = vmatpush2.msra.mxu0 0.0
    %2483 = vmatprep.subr.mxu0 0.0
    %2484 = vmatpush2.msra.mxu0 0.0
    %2485 = vmatprep.subr.mxu0 0.0
    %2486 = vmatpush2.msra.mxu0 0.0
    %2487 = vmatprep.subr.mxu0 0.0
    %2488 = vmatpush2.msra.mxu0 0.0
    %2489 = vmatprep.subr.mxu0 0.0
    %2490 = vmatpush2.msra.mxu0 0.0
    %2491 = vmatprep.subr.mxu0 0.0
    %2492 = vmatpush2.msra.mxu0 0.0
    %2493 = vmatprep.subr.mxu0 0.0
    %2494 = vmatpush2.msra.mxu0 0.0
    %2495 = vmatprep.subr.mxu0 0.0
    %2496 = vmatpush2.msra.mxu0 0.0
    %2497 = vmatprep.subr.mxu0 0.0
    %2498 = vmatpush2.msra.mxu0 0.0
    %2499 = vmatprep.subr.mxu0 0.0
    %2500 = vmatpush2.msra.mxu0 0.0
    %2501 = vmatprep.mubr.f32.mxu0 0.0
    %2502 = vmatmul.mubr.f32.gmra.mxu0 %v276
    %v2503 = vpop.f32.mrf.mxu0
    %v2504 = vadd.f32 %v273, %v2503
    %v2505 = vpop.f32.mrf.mxu0
    %v2506 = vadd.f32 %v273, %v2505
    %2507 = vdwg.mxu0
    %v2508 = vmax.f32 %v2504, 0.0
    %v2509 = vmax.f32 %v2506, 0.0
    %2510 = vmatprep.subr.mxu0 0.0
    %2511 = vmatpush1.msra.mxu0 0.0
    %2512 = vmatprep.subr.mxu0 0.0
    %2513 = vmatpush1.msra.mxu0 0.0
    %2514 = vmatprep.subr.mxu0 0.0
    %2515 = vmatpush1.msra.mxu0 0.0
    %2516 = vmatprep.subr.mxu0 0.0
    %2517 = vmatpush1.msra.mxu0 0.0
    %2518 = vmatprep.subr.mxu0 0.0
    %2519 = vmatpush1.msra.mxu0 0.0
    %2520 = vmatprep.subr.mxu0 0.0
    %2521 = vmatpush1.msra.mxu0 0.0
    %2522 = vmatprep.subr.mxu0 0.0
    %2523 = vmatpush1.msra.mxu0 0.0
    %2524 = vmatprep.subr.mxu0 0.0
    %2525 = vmatpush1.msra.mxu0 0.0
    %2526 = vmatprep.subr.mxu0 0.0
    %2527 = vmatpush1.msra.mxu0 0.0
    %2528 = vmatprep.subr.mxu0 0.0
    %2529 = vmatpush1.msra.mxu0 0.0
    %2530 = vmatprep.subr.mxu0 0.0
    %2531 = vmatpush1.msra.mxu0 0.0
    %2532 = vmatprep.subr.mxu0 0.0
    %2533 = vmatpush1.msra.mxu0 0.0
    %2534 = vmatprep.subr.mxu0 0.0
    %2535 = vmatpush1.msra.mxu0 0.0
    %2536 = vmatprep.subr.mxu0 0.0
    %2537 = vmatpush1.msra.mxu0 0.0
    %2538 = vmatprep.subr.mxu0 0.0
    %2539 = vmatpush1.msra.mxu0 0.0
    %2540 = vmatprep.subr.mxu0 %v2509
    %2541 = vmatpush1.msra.mxu0 %v2508
    %2542 = vmatprep.subr.mxu0 0.0
    %2543 = vmatpush2.msra.mxu0 0.0
    %2544 = vmatprep.subr.mxu0 0.0
    %2545 = vmatpush2.msra.mxu0 0.0
    %2546 = vmatprep.subr.mxu0 0.0
    %2547 = vmatpush2.msra.mxu0 0.0
    %2548 = vmatprep.subr.mxu0 0.0
    %2549 = vmatpush2.msra.mxu0 0.0
    %2550 = vmatprep.subr.mxu0 0.0
    %2551 = vmatpush2.msra.mxu0 0.0
    %2552 = vmatprep.subr.mxu0 0.0
    %2553 = vmatpush2.msra.mxu0 0.0
    %2554 = vmatprep.subr.mxu0 0.0
    %2555 = vmatpush2.msra.mxu0 0.0
    %2556 = vmatprep.subr.mxu0 0.0
    %2557 = vmatpush2.msra.mxu0 0.0
    %2558 = vmatprep.subr.mxu0 0.0
    %2559 = vmatpush2.msra.mxu0 0.0
    %2560 = vmatprep.subr.mxu0 0.0
    %2561 = vmatpush2.msra.mxu0 0.0
    %2562 = vmatprep.subr.mxu0 0.0
    %2563 = vmatpush2.msra.mxu0 0.0
    %2564 = vmatprep.subr.mxu0 0.0
    %2565 = vmatpush2.msra.mxu0 0.0
    %2566 = vmatprep.subr.mxu0 0.0
    %2567 = vmatpush2.msra.mxu0 0.0
    %2568 = vmatprep.subr.mxu0 0.0
    %2569 = vmatpush2.msra.mxu0 0.0
    %2570 = vmatprep.subr.mxu0 0.0
    %2571 = vmatpush2.msra.mxu0 0.0
    %2572 = vmatprep.subr.mxu0 0.0
    %2573 = vmatpush2.msra.mxu0 0.0
    %2574 = vmatprep.mubr.f32.mxu0 0.0
    %2575 = vmatmul.mubr.f32.gmra.mxu0 %v357
    %v2576 = vpop.f32.mrf.mxu0
    %v2577 = vadd.f32 %v354, %v2576
    %v2578 = vpop.f32.mrf.mxu0
    %v2579 = vadd.f32 %v354, %v2578
    %2580 = vdwg.mxu0
    %v2581 = vmax.f32 %v2577, 0.0
    %v2582 = vmax.f32 %v2579, 0.0
    %2583 = vrot.lane.b32.xlu0 %v2581, 17
    %v2584 = vpop.permute.xlu0 %2583
    %2585 = vrot.lane.b32.xlu0 %v2582, 17
    %v2586 = vpop.permute.xlu0 %2585
    %v2587 = vsel %vm114, %v2584, %v2586
    %v2588 = vsel %vm114, %v2586, %v2584
    %v2589 = vmul.f32 %v2588, %v121
    %v2590 = vmul.f32 %v2587, %v125
    %2591 = vrot.lane.b32.xlu0 %v2581, 16
    %v2592 = vpop.permute.xlu0 %2591
    %2593 = vrot.lane.b32.xlu0 %v2582, 16
    %v2594 = vpop.permute.xlu0 %2593
    %v2595 = vsel %vm134, %v2592, %v2594
    %v2596 = vsel %vm134, %v2594, %v2592
    %v2597 = vmul.f32 %v2596, %v141
    %v2598 = vmul.f32 %v2595, %v145
    %2599 = vrot.lane.b32.xlu0 %v2581, 15
    %v2600 = vpop.permute.xlu0 %2599
    %2601 = vrot.lane.b32.xlu0 %v2582, 15
    %v2602 = vpop.permute.xlu0 %2601
    %v2603 = vsel %vm154, %v2600, %v2602
    %v2604 = vsel %vm154, %v2602, %v2600
    %v2605 = vmul.f32 %v2604, %v161
    %v2606 = vmul.f32 %v2603, %v165
    %2607 = vrot.lane.b32.xlu0 %v2581, 1
    %v2608 = vpop.permute.xlu0 %2607
    %2609 = vrot.lane.b32.xlu0 %v2582, 1
    %v2610 = vpop.permute.xlu0 %2609
    %v2611 = vsel %vm174, %v2608, %v2610
    %v2612 = vsel %vm174, %v2610, %v2608
    %v2613 = vmul.f32 %v2612, %v181
    %v2614 = vmul.f32 %v2611, %v185
    %2615 = vrot.lane.b32.xlu0 %v2581, 127
    %v2616 = vpop.permute.xlu0 %2615
    %2617 = vrot.lane.b32.xlu0 %v2582, 127
    %v2618 = vpop.permute.xlu0 %2617
    %v2619 = vsel %vm194, %v2616, %v2618
    %v2620 = vsel %vm194, %v2618, %v2616
    %v2621 = vmul.f32 %v2619, %v201
    %v2622 = vmul.f32 %v2620, %v205
    %2623 = vrot.lane.b32.xlu0 %v2581, 113
    %v2624 = vpop.permute.xlu0 %2623
    %2625 = vrot.lane.b32.xlu0 %v2582, 113
    %v2626 = vpop.permute.xlu0 %2625
    %v2627 = vsel %vm214, %v2624, %v2626
    %v2628 = vsel %vm214, %v2626, %v2624
    %v2629 = vmul.f32 %v2627, %v221
    %v2630 = vmul.f32 %v2628, %v225
    %2631 = vrot.lane.b32.xlu0 %v2581, 112
    %v2632 = vpop.permute.xlu0 %2631
    %2633 = vrot.lane.b32.xlu0 %v2582, 112
    %v2634 = vpop.permute.xlu0 %2633
    %v2635 = vsel %vm234, %v2632, %v2634
    %v2636 = vsel %vm234, %v2634, %v2632
    %v2637 = vmul.f32 %v2635, %v241
    %v2638 = vmul.f32 %v2636, %v245
    %2639 = vrot.lane.b32.xlu0 %v2581, 111
    %v2640 = vpop.permute.xlu0 %2639
    %2641 = vrot.lane.b32.xlu0 %v2582, 111
    %v2642 = vpop.permute.xlu0 %2641
    %v2643 = vsel %vm254, %v2640, %v2642
    %v2644 = vsel %vm254, %v2642, %v2640
    %v2645 = vmul.f32 %v2643, %v261
    %v2646 = vmul.f32 %v2644, %v265
    %2647 = vmatprep.subr.mxu0 0.0
    %2648 = vmatpush1.msra.mxu0 0.0
    %2649 = vmatprep.subr.mxu0 0.0
    %2650 = vmatpush1.msra.mxu0 0.0
    %2651 = vmatprep.subr.mxu0 0.0
    %2652 = vmatpush1.msra.mxu0 0.0
    %2653 = vmatprep.subr.mxu0 0.0
    %2654 = vmatpush1.msra.mxu0 0.0
    %2655 = vmatprep.subr.mxu0 0.0
    %2656 = vmatpush1.msra.mxu0 0.0
    %2657 = vmatprep.subr.mxu0 0.0
    %2658 = vmatpush1.msra.mxu0 0.0
    %2659 = vmatprep.subr.mxu0 0.0
    %2660 = vmatpush1.msra.mxu0 0.0
    %2661 = vmatprep.subr.mxu0 %v2646
    %2662 = vmatpush1.msra.mxu0 %v2645
    %2663 = vmatprep.subr.mxu0 %v2638
    %2664 = vmatpush1.msra.mxu0 %v2637
    %2665 = vmatprep.subr.mxu0 %v2630
    %2666 = vmatpush1.msra.mxu0 %v2629
    %2667 = vmatprep.subr.mxu0 %v2622
    %2668 = vmatpush1.msra.mxu0 %v2621
    %2669 = vmatprep.subr.mxu0 %v2582
    %2670 = vmatpush1.msra.mxu0 %v2581
    %2671 = vmatprep.subr.mxu0 %v2614
    %2672 = vmatpush1.msra.mxu0 %v2613
    %2673 = vmatprep.subr.mxu0 %v2606
    %2674 = vmatpush1.msra.mxu0 %v2605
    %2675 = vmatprep.subr.mxu0 %v2598
    %2676 = vmatpush1.msra.mxu0 %v2597
    %2677 = vmatprep.subr.mxu0 %v2590
    %2678 = vmatpush1.msra.mxu0 %v2589
    %2679 = vmatprep.subr.mxu0 0.0
    %2680 = vmatpush2.msra.mxu0 0.0
    %2681 = vmatprep.subr.mxu0 0.0
    %2682 = vmatpush2.msra.mxu0 0.0
    %2683 = vmatprep.subr.mxu0 0.0
    %2684 = vmatpush2.msra.mxu0 0.0
    %2685 = vmatprep.subr.mxu0 0.0
    %2686 = vmatpush2.msra.mxu0 0.0
    %2687 = vmatprep.subr.mxu0 0.0
    %2688 = vmatpush2.msra.mxu0 0.0
    %2689 = vmatprep.subr.mxu0 0.0
    %2690 = vmatpush2.msra.mxu0 0.0
    %2691 = vmatprep.subr.mxu0 0.0
    %2692 = vmatpush2.msra.mxu0 0.0
    %2693 = vmatprep.subr.mxu0 0.0
    %2694 = vmatpush2.msra.mxu0 0.0
    %2695 = vmatprep.subr.mxu0 0.0
    %2696 = vmatpush2.msra.mxu0 0.0
    %2697 = vmatprep.subr.mxu0 0.0
    %2698 = vmatpush2.msra.mxu0 0.0
    %2699 = vmatprep.subr.mxu0 0.0
    %2700 = vmatpush2.msra.mxu0 0.0
    %2701 = vmatprep.subr.mxu0 0.0
    %2702 = vmatpush2.msra.mxu0 0.0
    %2703 = vmatprep.subr.mxu0 0.0
    %2704 = vmatpush2.msra.mxu0 0.0
    %2705 = vmatprep.subr.mxu0 0.0
    %2706 = vmatpush2.msra.mxu0 0.0
    %2707 = vmatprep.subr.mxu0 0.0
    %2708 = vmatpush2.msra.mxu0 0.0
    %2709 = vmatprep.subr.mxu0 0.0
    %2710 = vmatpush2.msra.mxu0 0.0
    %2711 = vmatprep.mubr.f32.mxu0 0.0
    %2712 = vmatmul.mubr.f32.gmra.mxu0 %v501
    %v2713 = vpop.f32.mrf.mxu0
    %v2714 = vadd.f32 %v499, %v2713
    %v2715 = vpop.f32.mrf.mxu0
    %v2716 = vadd.f32 %v499, %v2715
    %2717 = vdwg.mxu0
    %v2718 = vadd.f32 %v2714, 2.0
    %v2719 = vadd.f32 %v2716, 2.0
    %v2720 = vsub.f32 0.0, %v2718
    %v2721 = vsub.f32 0.0, %v2719
    %v2722 = vmul.f32 %v2720, 1.442695
    %v2723 = vpow.pop %v2722
    %v2724 = vmul.f32 %v2721, 1.442695
    %v2725 = vpow.pop %v2724
    %v2726 = vadd.f32 %v2723, 1.0
    %v2727 = vadd.f32 %v2725, 1.0
    %v2728 = vrcp.pop %v2726
    %v2729 = vmul.f32 1.0, %v2728
    %v2730 = vrcp.pop %v2727
    %v2731 = vmul.f32 1.0, %v2730
    %v2732 = vadd.f32 %v2729, 0.0001
    %v2733 = vadd.f32 %v2731, 0.0001
    %v2736 = vcombine.low %v2714, %v2716
    %v2738 = vadd.f32 %v2372, %v2736
    %v2741 = vcombine.low %v2732, %v2733
    %v2742 = vrot.slane %v2741, 6
    %v2743 = vrot.slane %v2742, 4
    %v2745 = vmul.f32 %v2738, %v2743
    %v2747 = vcombine.high %v2745, %v2745
    %2749 = vrot.lane.b32.xlu0 %v2745, 17
    %v2750 = vpop.permute.xlu0 %2749
    %2751 = vrot.lane.b32.xlu0 %v2747, 17
    %v2752 = vpop.permute.xlu0 %2751
    %v2753 = vsel %vm114, %v2750, %v2752
    %v2754 = vsel %vm114, %v2752, %v2750
    %v2755 = vmul.f32 %v2754, %v121
    %v2756 = vmul.f32 %v2753, %v125
    %2757 = vrot.lane.b32.xlu0 %v2745, 16
    %v2758 = vpop.permute.xlu0 %2757
    %2759 = vrot.lane.b32.xlu0 %v2747, 16
    %v2760 = vpop.permute.xlu0 %2759
    %v2761 = vsel %vm134, %v2758, %v2760
    %v2762 = vsel %vm134, %v2760, %v2758
    %v2763 = vmul.f32 %v2762, %v141
    %v2764 = vmul.f32 %v2761, %v145
    %2765 = vrot.lane.b32.xlu0 %v2745, 15
    %v2766 = vpop.permute.xlu0 %2765
    %2767 = vrot.lane.b32.xlu0 %v2747, 15
    %v2768 = vpop.permute.xlu0 %2767
    %v2769 = vsel %vm154, %v2766, %v2768
    %v2770 = vsel %vm154, %v2768, %v2766
    %v2771 = vmul.f32 %v2770, %v161
    %v2772 = vmul.f32 %v2769, %v165
    %2773 = vrot.lane.b32.xlu0 %v2745, 1
    %v2774 = vpop.permute.xlu0 %2773
    %2775 = vrot.lane.b32.xlu0 %v2747, 1
    %v2776 = vpop.permute.xlu0 %2775
    %v2777 = vsel %vm174, %v2774, %v2776
    %v2778 = vsel %vm174, %v2776, %v2774
    %v2779 = vmul.f32 %v2778, %v181
    %v2780 = vmul.f32 %v2777, %v185
    %2781 = vrot.lane.b32.xlu0 %v2745, 127
    %v2782 = vpop.permute.xlu0 %2781
    %2783 = vrot.lane.b32.xlu0 %v2747, 127
    %v2784 = vpop.permute.xlu0 %2783
    %v2785 = vsel %vm194, %v2782, %v2784
    %v2786 = vsel %vm194, %v2784, %v2782
    %v2787 = vmul.f32 %v2785, %v201
    %v2788 = vmul.f32 %v2786, %v205
    %2789 = vrot.lane.b32.xlu0 %v2745, 113
    %v2790 = vpop.permute.xlu0 %2789
    %2791 = vrot.lane.b32.xlu0 %v2747, 113
    %v2792 = vpop.permute.xlu0 %2791
    %v2793 = vsel %vm214, %v2790, %v2792
    %v2794 = vsel %vm214, %v2792, %v2790
    %v2795 = vmul.f32 %v2793, %v221
    %v2796 = vmul.f32 %v2794, %v225
    %2797 = vrot.lane.b32.xlu0 %v2745, 112
    %v2798 = vpop.permute.xlu0 %2797
    %2799 = vrot.lane.b32.xlu0 %v2747, 112
    %v2800 = vpop.permute.xlu0 %2799
    %v2801 = vsel %vm234, %v2798, %v2800
    %v2802 = vsel %vm234, %v2800, %v2798
    %v2803 = vmul.f32 %v2801, %v241
    %v2804 = vmul.f32 %v2802, %v245
    %2805 = vrot.lane.b32.xlu0 %v2745, 111
    %v2806 = vpop.permute.xlu0 %2805
    %2807 = vrot.lane.b32.xlu0 %v2747, 111
    %v2808 = vpop.permute.xlu0 %2807
    %v2809 = vsel %vm254, %v2806, %v2808
    %v2810 = vsel %vm254, %v2808, %v2806
    %v2811 = vmul.f32 %v2809, %v261
    %v2812 = vmul.f32 %v2810, %v265
    %v2814 = vsel %vm690, %v2763, 0
    %v2817 = vsel %vm690, %v2764, 0
    %2819 = vmatprep.subr.mxu0 0.0
    %2820 = vmatpush1.msra.mxu0 0.0
    %2821 = vmatprep.subr.mxu0 0.0
    %2822 = vmatpush1.msra.mxu0 0.0
    %2823 = vmatprep.subr.mxu0 0.0
    %2824 = vmatpush1.msra.mxu0 0.0
    %2825 = vmatprep.subr.mxu0 0.0
    %2826 = vmatpush1.msra.mxu0 0.0
    %2827 = vmatprep.subr.mxu0 0.0
    %2828 = vmatpush1.msra.mxu0 0.0
    %2829 = vmatprep.subr.mxu0 0.0
    %2830 = vmatpush1.msra.mxu0 0.0
    %2831 = vmatprep.subr.mxu0 0.0
    %2832 = vmatpush1.msra.mxu0 0.0
    %2833 = vmatprep.subr.mxu0 0.0
    %2834 = vmatpush1.msra.mxu0 0.0
    %2835 = vmatprep.subr.mxu0 0.0
    %2836 = vmatpush1.msra.mxu0 0.0
    %2837 = vmatprep.subr.mxu0 0.0
    %2838 = vmatpush1.msra.mxu0 0.0
    %2839 = vmatprep.subr.mxu0 0.0
    %2840 = vmatpush1.msra.mxu0 0.0
    %2841 = vmatprep.subr.mxu0 0.0
    %2842 = vmatpush1.msra.mxu0 0.0
    %2843 = vmatprep.subr.mxu0 0.0
    %2844 = vmatpush1.msra.mxu0 0.0
    %2845 = vmatprep.subr.mxu0 0.0
    %2846 = vmatpush1.msra.mxu0 0.0
    %2847 = vmatprep.subr.mxu0 0.0
    %2848 = vmatpush1.msra.mxu0 0.0
    %2849 = vmatprep.subr.mxu0 %v2817
    %2850 = vmatpush1.msra.mxu0 %v2814
    %2851 = vmatprep.subr.mxu0 0.0
    %2852 = vmatpush2.msra.mxu0 0.0
    %2853 = vmatprep.subr.mxu0 0.0
    %2854 = vmatpush2.msra.mxu0 0.0
    %2855 = vmatprep.subr.mxu0 0.0
    %2856 = vmatpush2.msra.mxu0 0.0
    %2857 = vmatprep.subr.mxu0 0.0
    %2858 = vmatpush2.msra.mxu0 0.0
    %2859 = vmatprep.subr.mxu0 0.0
    %2860 = vmatpush2.msra.mxu0 0.0
    %2861 = vmatprep.subr.mxu0 0.0
    %2862 = vmatpush2.msra.mxu0 0.0
    %2863 = vmatprep.subr.mxu0 0.0
    %2864 = vmatpush2.msra.mxu0 0.0
    %2865 = vmatprep.subr.mxu0 0.0
    %2866 = vmatpush2.msra.mxu0 0.0
    %2867 = vmatprep.subr.mxu0 0.0
    %2868 = vmatpush2.msra.mxu0 0.0
    %2869 = vmatprep.subr.mxu0 0.0
    %2870 = vmatpush2.msra.mxu0 0.0
    %2871 = vmatprep.subr.mxu0 0.0
    %2872 = vmatpush2.msra.mxu0 0.0
    %2873 = vmatprep.subr.mxu0 0.0
    %2874 = vmatpush2.msra.mxu0 0.0
    %2875 = vmatprep.subr.mxu0 0.0
    %2876 = vmatpush2.msra.mxu0 0.0
    %2877 = vmatprep.subr.mxu0 0.0
    %2878 = vmatpush2.msra.mxu0 0.0
    %2879 = vmatprep.subr.mxu0 0.0
    %2880 = vmatpush2.msra.mxu0 0.0
    %2881 = vmatprep.subr.mxu0 0.0
    %2882 = vmatpush2.msra.mxu0 0.0
    %2883 = vmatprep.mubr.f32.mxu0 0.0
    %2884 = vmatmul.mubr.f32.gmra.mxu0 %v682
    %v2885 = vpop.f32.mrf.mxu0
    %v2886 = vadd.f32 0.0, %v2885
    %v2887 = vpop.f32.mrf.mxu0
    %v2888 = vadd.f32 0.0, %v2887
    %2889 = vmatprep.mubr.f32.mxu0 0.0
    %2890 = vmatmul.mubr.f32.gmra.mxu0 %v684
    %v2891 = vpop.f32.mrf.mxu0
    %v2892 = vadd.f32 0.0, %v2891
    %v2893 = vpop.f32.mrf.mxu0
    %v2894 = vadd.f32 0.0, %v2893
    %2895 = vmatprep.mubr.f32.mxu0 0.0
    %2896 = vmatmul.mubr.f32.gmra.mxu0 %v686
    %v2897 = vpop.f32.mrf.mxu0
    %v2898 = vadd.f32 0.0, %v2897
    %v2899 = vpop.f32.mrf.mxu0
    %v2900 = vadd.f32 0.0, %v2899
    %2901 = vmatprep.mubr.f32.mxu0 0.0
    %2902 = vmatmul.mubr.f32.gmra.mxu0 %v688
    %v2903 = vpop.f32.mrf.mxu0
    %v2904 = vadd.f32 0.0, %v2903
    %v2905 = vpop.f32.mrf.mxu0
    %v2906 = vadd.f32 0.0, %v2905
    %2907 = vdwg.mxu0
    %v2909 = vsel %vm690, %v2755, 0
    %v2912 = vsel %vm690, %v2756, 0
    %2914 = vmatprep.subr.mxu0 0.0
    %2915 = vmatpush1.msra.mxu0 0.0
    %2916 = vmatprep.subr.mxu0 0.0
    %2917 = vmatpush1.msra.mxu0 0.0
    %2918 = vmatprep.subr.mxu0 0.0
    %2919 = vmatpush1.msra.mxu0 0.0
    %2920 = vmatprep.subr.mxu0 0.0
    %2921 = vmatpush1.msra.mxu0 0.0
    %2922 = vmatprep.subr.mxu0 0.0
    %2923 = vmatpush1.msra.mxu0 0.0
    %2924 = vmatprep.subr.mxu0 0.0
    %2925 = vmatpush1.msra.mxu0 0.0
    %2926 = vmatprep.subr.mxu0 0.0
    %2927 = vmatpush1.msra.mxu0 0.0
    %2928 = vmatprep.subr.mxu0 0.0
    %2929 = vmatpush1.msra.mxu0 0.0
    %2930 = vmatprep.subr.mxu0 0.0
    %2931 = vmatpush1.msra.mxu0 0.0
    %2932 = vmatprep.subr.mxu0 0.0
    %2933 = vmatpush1.msra.mxu0 0.0
    %2934 = vmatprep.subr.mxu0 0.0
    %2935 = vmatpush1.msra.mxu0 0.0
    %2936 = vmatprep.subr.mxu0 0.0
    %2937 = vmatpush1.msra.mxu0 0.0
    %2938 = vmatprep.subr.mxu0 0.0
    %2939 = vmatpush1.msra.mxu0 0.0
    %2940 = vmatprep.subr.mxu0 0.0
    %2941 = vmatpush1.msra.mxu0 0.0
    %2942 = vmatprep.subr.mxu0 0.0
    %2943 = vmatpush1.msra.mxu0 0.0
    %2944 = vmatprep.subr.mxu0 %v2912
    %2945 = vmatpush1.msra.mxu0 %v2909
    %2946 = vmatprep.subr.mxu0 0.0
    %2947 = vmatpush2.msra.mxu0 0.0
    %2948 = vmatprep.subr.mxu0 0.0
    %2949 = vmatpush2.msra.mxu0 0.0
    %2950 = vmatprep.subr.mxu0 0.0
    %2951 = vmatpush2.msra.mxu0 0.0
    %2952 = vmatprep.subr.mxu0 0.0
    %2953 = vmatpush2.msra.mxu0 0.0
    %2954 = vmatprep.subr.mxu0 0.0
    %2955 = vmatpush2.msra.mxu0 0.0
    %2956 = vmatprep.subr.mxu0 0.0
    %2957 = vmatpush2.msra.mxu0 0.0
    %2958 = vmatprep.subr.mxu0 0.0
    %2959 = vmatpush2.msra.mxu0 0.0
    %2960 = vmatprep.subr.mxu0 0.0
    %2961 = vmatpush2.msra.mxu0 0.0
    %2962 = vmatprep.subr.mxu0 0.0
    %2963 = vmatpush2.msra.mxu0 0.0
    %2964 = vmatprep.subr.mxu0 0.0
    %2965 = vmatpush2.msra.mxu0 0.0
    %2966 = vmatprep.subr.mxu0 0.0
    %2967 = vmatpush2.msra.mxu0 0.0
    %2968 = vmatprep.subr.mxu0 0.0
    %2969 = vmatpush2.msra.mxu0 0.0
    %2970 = vmatprep.subr.mxu0 0.0
    %2971 = vmatpush2.msra.mxu0 0.0
    %2972 = vmatprep.subr.mxu0 0.0
    %2973 = vmatpush2.msra.mxu0 0.0
    %2974 = vmatprep.subr.mxu0 0.0
    %2975 = vmatpush2.msra.mxu0 0.0
    %2976 = vmatprep.subr.mxu0 0.0
    %2977 = vmatpush2.msra.mxu0 0.0
    %2978 = vmatprep.mubr.f32.mxu0 0.0
    %2979 = vmatmul.mubr.f32.gmra.mxu0 %v786
    %v2980 = vpop.f32.mrf.mxu0
    %v2981 = vadd.f32 %v2886, %v2980
    %v2982 = vpop.f32.mrf.mxu0
    %v2983 = vadd.f32 %v2888, %v2982
    %2984 = vmatprep.mubr.f32.mxu0 0.0
    %2985 = vmatmul.mubr.f32.gmra.mxu0 %v788
    %v2986 = vpop.f32.mrf.mxu0
    %v2987 = vadd.f32 %v2892, %v2986
    %v2988 = vpop.f32.mrf.mxu0
    %v2989 = vadd.f32 %v2894, %v2988
    %2990 = vmatprep.mubr.f32.mxu0 0.0
    %2991 = vmatmul.mubr.f32.gmra.mxu0 %v790
    %v2992 = vpop.f32.mrf.mxu0
    %v2993 = vadd.f32 %v2898, %v2992
    %v2994 = vpop.f32.mrf.mxu0
    %v2995 = vadd.f32 %v2900, %v2994
    %2996 = vmatprep.mubr.f32.mxu0 0.0
    %2997 = vmatmul.mubr.f32.gmra.mxu0 %v792
    %v2998 = vpop.f32.mrf.mxu0
    %v2999 = vadd.f32 %v2904, %v2998
    %v3000 = vpop.f32.mrf.mxu0
    %v3001 = vadd.f32 %v2906, %v3000
    %3002 = vdwg.mxu0
    %v3004 = vsel %vm690, %v2771, 0
    %v3007 = vsel %vm690, %v2772, 0
    %3009 = vmatprep.subr.mxu0 0.0
    %3010 = vmatpush1.msra.mxu0 0.0
    %3011 = vmatprep.subr.mxu0 0.0
    %3012 = vmatpush1.msra.mxu0 0.0
    %3013 = vmatprep.subr.mxu0 0.0
    %3014 = vmatpush1.msra.mxu0 0.0
    %3015 = vmatprep.subr.mxu0 0.0
    %3016 = vmatpush1.msra.mxu0 0.0
    %3017 = vmatprep.subr.mxu0 0.0
    %3018 = vmatpush1.msra.mxu0 0.0
    %3019 = vmatprep.subr.mxu0 0.0
    %3020 = vmatpush1.msra.mxu0 0.0
    %3021 = vmatprep.subr.mxu0 0.0
    %3022 = vmatpush1.msra.mxu0 0.0
    %3023 = vmatprep.subr.mxu0 0.0
    %3024 = vmatpush1.msra.mxu0 0.0
    %3025 = vmatprep.subr.mxu0 0.0
    %3026 = vmatpush1.msra.mxu0 0.0
    %3027 = vmatprep.subr.mxu0 0.0
    %3028 = vmatpush1.msra.mxu0 0.0
    %3029 = vmatprep.subr.mxu0 0.0
    %3030 = vmatpush1.msra.mxu0 0.0
    %3031 = vmatprep.subr.mxu0 0.0
    %3032 = vmatpush1.msra.mxu0 0.0
    %3033 = vmatprep.subr.mxu0 0.0
    %3034 = vmatpush1.msra.mxu0 0.0
    %3035 = vmatprep.subr.mxu0 0.0
    %3036 = vmatpush1.msra.mxu0 0.0
    %3037 = vmatprep.subr.mxu0 0.0
    %3038 = vmatpush1.msra.mxu0 0.0
    %3039 = vmatprep.subr.mxu0 %v3007
    %3040 = vmatpush1.msra.mxu0 %v3004
    %3041 = vmatprep.subr.mxu0 0.0
    %3042 = vmatpush2.msra.mxu0 0.0
    %3043 = vmatprep.subr.mxu0 0.0
    %3044 = vmatpush2.msra.mxu0 0.0
    %3045 = vmatprep.subr.mxu0 0.0
    %3046 = vmatpush2.msra.mxu0 0.0
    %3047 = vmatprep.subr.mxu0 0.0
    %3048 = vmatpush2.msra.mxu0 0.0
    %3049 = vmatprep.subr.mxu0 0.0
    %3050 = vmatpush2.msra.mxu0 0.0
    %3051 = vmatprep.subr.mxu0 0.0
    %3052 = vmatpush2.msra.mxu0 0.0
    %3053 = vmatprep.subr.mxu0 0.0
    %3054 = vmatpush2.msra.mxu0 0.0
    %3055 = vmatprep.subr.mxu0 0.0
    %3056 = vmatpush2.msra.mxu0 0.0
    %3057 = vmatprep.subr.mxu0 0.0
    %3058 = vmatpush2.msra.mxu0 0.0
    %3059 = vmatprep.subr.mxu0 0.0
    %3060 = vmatpush2.msra.mxu0 0.0
    %3061 = vmatprep.subr.mxu0 0.0
    %3062 = vmatpush2.msra.mxu0 0.0
    %3063 = vmatprep.subr.mxu0 0.0
    %3064 = vmatpush2.msra.mxu0 0.0
    %3065 = vmatprep.subr.mxu0 0.0
    %3066 = vmatpush2.msra.mxu0 0.0
    %3067 = vmatprep.subr.mxu0 0.0
    %3068 = vmatpush2.msra.mxu0 0.0
    %3069 = vmatprep.subr.mxu0 0.0
    %3070 = vmatpush2.msra.mxu0 0.0
    %3071 = vmatprep.subr.mxu0 0.0
    %3072 = vmatpush2.msra.mxu0 0.0
    %3073 = vmatprep.mubr.f32.mxu0 0.0
    %3074 = vmatmul.mubr.f32.gmra.mxu0 %v897
    %v3075 = vpop.f32.mrf.mxu0
    %v3076 = vadd.f32 0.0, %v3075
    %v3077 = vpop.f32.mrf.mxu0
    %v3078 = vadd.f32 0.0, %v3077
    %3079 = vmatprep.mubr.f32.mxu0 0.0
    %3080 = vmatmul.mubr.f32.gmra.mxu0 %v899
    %v3081 = vpop.f32.mrf.mxu0
    %v3082 = vadd.f32 0.0, %v3081
    %v3083 = vpop.f32.mrf.mxu0
    %v3084 = vadd.f32 0.0, %v3083
    %3085 = vmatprep.mubr.f32.mxu0 0.0
    %3086 = vmatmul.mubr.f32.gmra.mxu0 %v901
    %v3087 = vpop.f32.mrf.mxu0
    %v3088 = vadd.f32 0.0, %v3087
    %v3089 = vpop.f32.mrf.mxu0
    %v3090 = vadd.f32 0.0, %v3089
    %3091 = vmatprep.mubr.f32.mxu0 0.0
    %3092 = vmatmul.mubr.f32.gmra.mxu0 %v903
    %v3093 = vpop.f32.mrf.mxu0
    %v3094 = vadd.f32 0.0, %v3093
    %v3095 = vpop.f32.mrf.mxu0
    %v3096 = vadd.f32 0.0, %v3095
    %3097 = vdwg.mxu0
    %v3098 = vadd.f32 %v2981, %v3076
    %v3099 = vadd.f32 %v2983, %v3078
    %v3100 = vadd.f32 %v2987, %v3082
    %v3101 = vadd.f32 %v2989, %v3084
    %v3102 = vadd.f32 %v2993, %v3088
    %v3103 = vadd.f32 %v2995, %v3090
    %v3104 = vadd.f32 %v2999, %v3094
    %v3105 = vadd.f32 %v3001, %v3096
    %v3107 = vsel %vm690, %v2779, 0
    %v3110 = vsel %vm690, %v2780, 0
    %3112 = vmatprep.subr.mxu0 0.0
    %3113 = vmatpush1.msra.mxu0 0.0
    %3114 = vmatprep.subr.mxu0 0.0
    %3115 = vmatpush1.msra.mxu0 0.0
    %3116 = vmatprep.subr.mxu0 0.0
    %3117 = vmatpush1.msra.mxu0 0.0
    %3118 = vmatprep.subr.mxu0 0.0
    %3119 = vmatpush1.msra.mxu0 0.0
    %3120 = vmatprep.subr.mxu0 0.0
    %3121 = vmatpush1.msra.mxu0 0.0
    %3122 = vmatprep.subr.mxu0 0.0
    %3123 = vmatpush1.msra.mxu0 0.0
    %3124 = vmatprep.subr.mxu0 0.0
    %3125 = vmatpush1.msra.mxu0 0.0
    %3126 = vmatprep.subr.mxu0 0.0
    %3127 = vmatpush1.msra.mxu0 0.0
    %3128 = vmatprep.subr.mxu0 0.0
    %3129 = vmatpush1.msra.mxu0 0.0
    %3130 = vmatprep.subr.mxu0 0.0
    %3131 = vmatpush1.msra.mxu0 0.0
    %3132 = vmatprep.subr.mxu0 0.0
    %3133 = vmatpush1.msra.mxu0 0.0
    %3134 = vmatprep.subr.mxu0 0.0
    %3135 = vmatpush1.msra.mxu0 0.0
    %3136 = vmatprep.subr.mxu0 0.0
    %3137 = vmatpush1.msra.mxu0 0.0
    %3138 = vmatprep.subr.mxu0 0.0
    %3139 = vmatpush1.msra.mxu0 0.0
    %3140 = vmatprep.subr.mxu0 0.0
    %3141 = vmatpush1.msra.mxu0 0.0
    %3142 = vmatprep.subr.mxu0 %v3110
    %3143 = vmatpush1.msra.mxu0 %v3107
    %3144 = vmatprep.subr.mxu0 0.0
    %3145 = vmatpush2.msra.mxu0 0.0
    %3146 = vmatprep.subr.mxu0 0.0
    %3147 = vmatpush2.msra.mxu0 0.0
    %3148 = vmatprep.subr.mxu0 0.0
    %3149 = vmatpush2.msra.mxu0 0.0
    %3150 = vmatprep.subr.mxu0 0.0
    %3151 = vmatpush2.msra.mxu0 0.0
    %3152 = vmatprep.subr.mxu0 0.0
    %3153 = vmatpush2.msra.mxu0 0.0
    %3154 = vmatprep.subr.mxu0 0.0
    %3155 = vmatpush2.msra.mxu0 0.0
    %3156 = vmatprep.subr.mxu0 0.0
    %3157 = vmatpush2.msra.mxu0 0.0
    %3158 = vmatprep.subr.mxu0 0.0
    %3159 = vmatpush2.msra.mxu0 0.0
    %3160 = vmatprep.subr.mxu0 0.0
    %3161 = vmatpush2.msra.mxu0 0.0
    %3162 = vmatprep.subr.mxu0 0.0
    %3163 = vmatpush2.msra.mxu0 0.0
    %3164 = vmatprep.subr.mxu0 0.0
    %3165 = vmatpush2.msra.mxu0 0.0
    %3166 = vmatprep.subr.mxu0 0.0
    %3167 = vmatpush2.msra.mxu0 0.0
    %3168 = vmatprep.subr.mxu0 0.0
    %3169 = vmatpush2.msra.mxu0 0.0
    %3170 = vmatprep.subr.mxu0 0.0
    %3171 = vmatpush2.msra.mxu0 0.0
    %3172 = vmatprep.subr.mxu0 0.0
    %3173 = vmatpush2.msra.mxu0 0.0
    %3174 = vmatprep.subr.mxu0 0.0
    %3175 = vmatpush2.msra.mxu0 0.0
    %3176 = vmatprep.mubr.f32.mxu0 0.0
    %3177 = vmatmul.mubr.f32.gmra.mxu0 %v1016
    %v3178 = vpop.f32.mrf.mxu0
    %v3179 = vadd.f32 0.0, %v3178
    %v3180 = vpop.f32.mrf.mxu0
    %v3181 = vadd.f32 0.0, %v3180
    %3182 = vmatprep.mubr.f32.mxu0 0.0
    %3183 = vmatmul.mubr.f32.gmra.mxu0 %v1018
    %v3184 = vpop.f32.mrf.mxu0
    %v3185 = vadd.f32 0.0, %v3184
    %v3186 = vpop.f32.mrf.mxu0
    %v3187 = vadd.f32 0.0, %v3186
    %3188 = vmatprep.mubr.f32.mxu0 0.0
    %3189 = vmatmul.mubr.f32.gmra.mxu0 %v1020
    %v3190 = vpop.f32.mrf.mxu0
    %v3191 = vadd.f32 0.0, %v3190
    %v3192 = vpop.f32.mrf.mxu0
    %v3193 = vadd.f32 0.0, %v3192
    %3194 = vmatprep.mubr.f32.mxu0 0.0
    %3195 = vmatmul.mubr.f32.gmra.mxu0 %v1022
    %v3196 = vpop.f32.mrf.mxu0
    %v3197 = vadd.f32 0.0, %v3196
    %v3198 = vpop.f32.mrf.mxu0
    %v3199 = vadd.f32 0.0, %v3198
    %3200 = vdwg.mxu0
    %v3201 = vadd.f32 %v3098, %v3179
    %v3202 = vadd.f32 %v3099, %v3181
    %v3203 = vadd.f32 %v3100, %v3185
    %v3204 = vadd.f32 %v3101, %v3187
    %v3205 = vadd.f32 %v3102, %v3191
    %v3206 = vadd.f32 %v3103, %v3193
    %v3207 = vadd.f32 %v3104, %v3197
    %v3208 = vadd.f32 %v3105, %v3199
    %v3209 = vsel %vm690, %v2745, 0
    %v3211 = vsel %vm690, %v2747, 0
    %3213 = vmatprep.subr.mxu0 0.0
    %3214 = vmatpush1.msra.mxu0 0.0
    %3215 = vmatprep.subr.mxu0 0.0
    %3216 = vmatpush1.msra.mxu0 0.0
    %3217 = vmatprep.subr.mxu0 0.0
    %3218 = vmatpush1.msra.mxu0 0.0
    %3219 = vmatprep.subr.mxu0 0.0
    %3220 = vmatpush1.msra.mxu0 0.0
    %3221 = vmatprep.subr.mxu0 0.0
    %3222 = vmatpush1.msra.mxu0 0.0
    %3223 = vmatprep.subr.mxu0 0.0
    %3224 = vmatpush1.msra.mxu0 0.0
    %3225 = vmatprep.subr.mxu0 0.0
    %3226 = vmatpush1.msra.mxu0 0.0
    %3227 = vmatprep.subr.mxu0 0.0
    %3228 = vmatpush1.msra.mxu0 0.0
    %3229 = vmatprep.subr.mxu0 0.0
    %3230 = vmatpush1.msra.mxu0 0.0
    %3231 = vmatprep.subr.mxu0 0.0
    %3232 = vmatpush1.msra.mxu0 0.0
    %3233 = vmatprep.subr.mxu0 0.0
    %3234 = vmatpush1.msra.mxu0 0.0
    %3235 = vmatprep.subr.mxu0 0.0
    %3236 = vmatpush1.msra.mxu0 0.0
    %3237 = vmatprep.subr.mxu0 0.0
    %3238 = vmatpush1.msra.mxu0 0.0
    %3239 = vmatprep.subr.mxu0 0.0
    %3240 = vmatpush1.msra.mxu0 0.0
    %3241 = vmatprep.subr.mxu0 0.0
    %3242 = vmatpush1.msra.mxu0 0.0
    %3243 = vmatprep.subr.mxu0 %v3211
    %3244 = vmatpush1.msra.mxu0 %v3209
    %3245 = vmatprep.subr.mxu0 0.0
    %3246 = vmatpush2.msra.mxu0 0.0
    %3247 = vmatprep.subr.mxu0 0.0
    %3248 = vmatpush2.msra.mxu0 0.0
    %3249 = vmatprep.subr.mxu0 0.0
    %3250 = vmatpush2.msra.mxu0 0.0
    %3251 = vmatprep.subr.mxu0 0.0
    %3252 = vmatpush2.msra.mxu0 0.0
    %3253 = vmatprep.subr.mxu0 0.0
    %3254 = vmatpush2.msra.mxu0 0.0
    %3255 = vmatprep.subr.mxu0 0.0
    %3256 = vmatpush2.msra.mxu0 0.0
    %3257 = vmatprep.subr.mxu0 0.0
    %3258 = vmatpush2.msra.mxu0 0.0
    %3259 = vmatprep.subr.mxu0 0.0
    %3260 = vmatpush2.msra.mxu0 0.0
    %3261 = vmatprep.subr.mxu0 0.0
    %3262 = vmatpush2.msra.mxu0 0.0
    %3263 = vmatprep.subr.mxu0 0.0
    %3264 = vmatpush2.msra.mxu0 0.0
    %3265 = vmatprep.subr.mxu0 0.0
    %3266 = vmatpush2.msra.mxu0 0.0
    %3267 = vmatprep.subr.mxu0 0.0
    %3268 = vmatpush2.msra.mxu0 0.0
    %3269 = vmatprep.subr.mxu0 0.0
    %3270 = vmatpush2.msra.mxu0 0.0
    %3271 = vmatprep.subr.mxu0 0.0
    %3272 = vmatpush2.msra.mxu0 0.0
    %3273 = vmatprep.subr.mxu0 0.0
    %3274 = vmatpush2.msra.mxu0 0.0
    %3275 = vmatprep.subr.mxu0 0.0
    %3276 = vmatpush2.msra.mxu0 0.0
    %3277 = vmatprep.mubr.f32.mxu0 0.0
    %3278 = vmatmul.mubr.f32.gmra.mxu0 %v1135
    %v3279 = vpop.f32.mrf.mxu0
    %v3280 = vadd.f32 0.0, %v3279
    %v3281 = vpop.f32.mrf.mxu0
    %v3282 = vadd.f32 0.0, %v3281
    %3283 = vmatprep.mubr.f32.mxu0 0.0
    %3284 = vmatmul.mubr.f32.gmra.mxu0 %v1137
    %v3285 = vpop.f32.mrf.mxu0
    %v3286 = vadd.f32 0.0, %v3285
    %v3287 = vpop.f32.mrf.mxu0
    %v3288 = vadd.f32 0.0, %v3287
    %3289 = vmatprep.mubr.f32.mxu0 0.0
    %3290 = vmatmul.mubr.f32.gmra.mxu0 %v1139
    %v3291 = vpop.f32.mrf.mxu0
    %v3292 = vadd.f32 0.0, %v3291
    %v3293 = vpop.f32.mrf.mxu0
    %v3294 = vadd.f32 0.0, %v3293
    %3295 = vmatprep.mubr.f32.mxu0 0.0
    %3296 = vmatmul.mubr.f32.gmra.mxu0 %v1141
    %v3297 = vpop.f32.mrf.mxu0
    %v3298 = vadd.f32 0.0, %v3297
    %v3299 = vpop.f32.mrf.mxu0
    %v3300 = vadd.f32 0.0, %v3299
    %3301 = vdwg.mxu0
    %v3302 = vadd.f32 %v3201, %v3280
    %v3303 = vadd.f32 %v3202, %v3282
    %v3304 = vadd.f32 %v3203, %v3286
    %v3305 = vadd.f32 %v3204, %v3288
    %v3306 = vadd.f32 %v3205, %v3292
    %v3307 = vadd.f32 %v3206, %v3294
    %v3308 = vadd.f32 %v3207, %v3298
    %v3309 = vadd.f32 %v3208, %v3300
    %v3311 = vsel %vm690, %v2787, 0
    %v3314 = vsel %vm690, %v2788, 0
    %3316 = vmatprep.subr.mxu0 0.0
    %3317 = vmatpush1.msra.mxu0 0.0
    %3318 = vmatprep.subr.mxu0 0.0
    %3319 = vmatpush1.msra.mxu0 0.0
    %3320 = vmatprep.subr.mxu0 0.0
    %3321 = vmatpush1.msra.mxu0 0.0
    %3322 = vmatprep.subr.mxu0 0.0
    %3323 = vmatpush1.msra.mxu0 0.0
    %3324 = vmatprep.subr.mxu0 0.0
    %3325 = vmatpush1.msra.mxu0 0.0
    %3326 = vmatprep.subr.mxu0 0.0
    %3327 = vmatpush1.msra.mxu0 0.0
    %3328 = vmatprep.subr.mxu0 0.0
    %3329 = vmatpush1.msra.mxu0 0.0
    %3330 = vmatprep.subr.mxu0 0.0
    %3331 = vmatpush1.msra.mxu0 0.0
    %3332 = vmatprep.subr.mxu0 0.0
    %3333 = vmatpush1.msra.mxu0 0.0
    %3334 = vmatprep.subr.mxu0 0.0
    %3335 = vmatpush1.msra.mxu0 0.0
    %3336 = vmatprep.subr.mxu0 0.0
    %3337 = vmatpush1.msra.mxu0 0.0
    %3338 = vmatprep.subr.mxu0 0.0
    %3339 = vmatpush1.msra.mxu0 0.0
    %3340 = vmatprep.subr.mxu0 0.0
    %3341 = vmatpush1.msra.mxu0 0.0
    %3342 = vmatprep.subr.mxu0 0.0
    %3343 = vmatpush1.msra.mxu0 0.0
    %3344 = vmatprep.subr.mxu0 0.0
    %3345 = vmatpush1.msra.mxu0 0.0
    %3346 = vmatprep.subr.mxu0 %v3314
    %3347 = vmatpush1.msra.mxu0 %v3311
    %3348 = vmatprep.subr.mxu0 0.0
    %3349 = vmatpush2.msra.mxu0 0.0
    %3350 = vmatprep.subr.mxu0 0.0
    %3351 = vmatpush2.msra.mxu0 0.0
    %3352 = vmatprep.subr.mxu0 0.0
    %3353 = vmatpush2.msra.mxu0 0.0
    %3354 = vmatprep.subr.mxu0 0.0
    %3355 = vmatpush2.msra.mxu0 0.0
    %3356 = vmatprep.subr.mxu0 0.0
    %3357 = vmatpush2.msra.mxu0 0.0
    %3358 = vmatprep.subr.mxu0 0.0
    %3359 = vmatpush2.msra.mxu0 0.0
    %3360 = vmatprep.subr.mxu0 0.0
    %3361 = vmatpush2.msra.mxu0 0.0
    %3362 = vmatprep.subr.mxu0 0.0
    %3363 = vmatpush2.msra.mxu0 0.0
    %3364 = vmatprep.subr.mxu0 0.0
    %3365 = vmatpush2.msra.mxu0 0.0
    %3366 = vmatprep.subr.mxu0 0.0
    %3367 = vmatpush2.msra.mxu0 0.0
    %3368 = vmatprep.subr.mxu0 0.0
    %3369 = vmatpush2.msra.mxu0 0.0
    %3370 = vmatprep.subr.mxu0 0.0
    %3371 = vmatpush2.msra.mxu0 0.0
    %3372 = vmatprep.subr.mxu0 0.0
    %3373 = vmatpush2.msra.mxu0 0.0
    %3374 = vmatprep.subr.mxu0 0.0
    %3375 = vmatpush2.msra.mxu0 0.0
    %3376 = vmatprep.subr.mxu0 0.0
    %3377 = vmatpush2.msra.mxu0 0.0
    %3378 = vmatprep.subr.mxu0 0.0
    %3379 = vmatpush2.msra.mxu0 0.0
    %3380 = vmatprep.mubr.f32.mxu0 0.0
    %3381 = vmatmul.mubr.f32.gmra.mxu0 %v1252
    %v3382 = vpop.f32.mrf.mxu0
    %v3383 = vadd.f32 0.0, %v3382
    %v3384 = vpop.f32.mrf.mxu0
    %v3385 = vadd.f32 0.0, %v3384
    %3386 = vmatprep.mubr.f32.mxu0 0.0
    %3387 = vmatmul.mubr.f32.gmra.mxu0 %v1254
    %v3388 = vpop.f32.mrf.mxu0
    %v3389 = vadd.f32 0.0, %v3388
    %v3390 = vpop.f32.mrf.mxu0
    %v3391 = vadd.f32 0.0, %v3390
    %3392 = vmatprep.mubr.f32.mxu0 0.0
    %3393 = vmatmul.mubr.f32.gmra.mxu0 %v1256
    %v3394 = vpop.f32.mrf.mxu0
    %v3395 = vadd.f32 0.0, %v3394
    %v3396 = vpop.f32.mrf.mxu0
    %v3397 = vadd.f32 0.0, %v3396
    %3398 = vmatprep.mubr.f32.mxu0 0.0
    %3399 = vmatmul.mubr.f32.gmra.mxu0 %v1258
    %v3400 = vpop.f32.mrf.mxu0
    %v3401 = vadd.f32 0.0, %v3400
    %v3402 = vpop.f32.mrf.mxu0
    %v3403 = vadd.f32 0.0, %v3402
    %3404 = vdwg.mxu0
    %v3405 = vadd.f32 %v3302, %v3383
    %v3406 = vadd.f32 %v3303, %v3385
    %v3407 = vadd.f32 %v3304, %v3389
    %v3408 = vadd.f32 %v3305, %v3391
    %v3409 = vadd.f32 %v3306, %v3395
    %v3410 = vadd.f32 %v3307, %v3397
    %v3411 = vadd.f32 %v3308, %v3401
    %v3412 = vadd.f32 %v3309, %v3403
    %v3414 = vsel %vm690, %v2795, 0
    %v3417 = vsel %vm690, %v2796, 0
    %3419 = vmatprep.subr.mxu0 0.0
    %3420 = vmatpush1.msra.mxu0 0.0
    %3421 = vmatprep.subr.mxu0 0.0
    %3422 = vmatpush1.msra.mxu0 0.0
    %3423 = vmatprep.subr.mxu0 0.0
    %3424 = vmatpush1.msra.mxu0 0.0
    %3425 = vmatprep.subr.mxu0 0.0
    %3426 = vmatpush1.msra.mxu0 0.0
    %3427 = vmatprep.subr.mxu0 0.0
    %3428 = vmatpush1.msra.mxu0 0.0
    %3429 = vmatprep.subr.mxu0 0.0
    %3430 = vmatpush1.msra.mxu0 0.0
    %3431 = vmatprep.subr.mxu0 0.0
    %3432 = vmatpush1.msra.mxu0 0.0
    %3433 = vmatprep.subr.mxu0 0.0
    %3434 = vmatpush1.msra.mxu0 0.0
    %3435 = vmatprep.subr.mxu0 0.0
    %3436 = vmatpush1.msra.mxu0 0.0
    %3437 = vmatprep.subr.mxu0 0.0
    %3438 = vmatpush1.msra.mxu0 0.0
    %3439 = vmatprep.subr.mxu0 0.0
    %3440 = vmatpush1.msra.mxu0 0.0
    %3441 = vmatprep.subr.mxu0 0.0
    %3442 = vmatpush1.msra.mxu0 0.0
    %3443 = vmatprep.subr.mxu0 0.0
    %3444 = vmatpush1.msra.mxu0 0.0
    %3445 = vmatprep.subr.mxu0 0.0
    %3446 = vmatpush1.msra.mxu0 0.0
    %3447 = vmatprep.subr.mxu0 0.0
    %3448 = vmatpush1.msra.mxu0 0.0
    %3449 = vmatprep.subr.mxu0 %v3417
    %3450 = vmatpush1.msra.mxu0 %v3414
    %3451 = vmatprep.subr.mxu0 0.0
    %3452 = vmatpush2.msra.mxu0 0.0
    %3453 = vmatprep.subr.mxu0 0.0
    %3454 = vmatpush2.msra.mxu0 0.0
    %3455 = vmatprep.subr.mxu0 0.0
    %3456 = vmatpush2.msra.mxu0 0.0
    %3457 = vmatprep.subr.mxu0 0.0
    %3458 = vmatpush2.msra.mxu0 0.0
    %3459 = vmatprep.subr.mxu0 0.0
    %3460 = vmatpush2.msra.mxu0 0.0
    %3461 = vmatprep.subr.mxu0 0.0
    %3462 = vmatpush2.msra.mxu0 0.0
    %3463 = vmatprep.subr.mxu0 0.0
    %3464 = vmatpush2.msra.mxu0 0.0
    %3465 = vmatprep.subr.mxu0 0.0
    %3466 = vmatpush2.msra.mxu0 0.0
    %3467 = vmatprep.subr.mxu0 0.0
    %3468 = vmatpush2.msra.mxu0 0.0
    %3469 = vmatprep.subr.mxu0 0.0
    %3470 = vmatpush2.msra.mxu0 0.0
    %3471 = vmatprep.subr.mxu0 0.0
    %3472 = vmatpush2.msra.mxu0 0.0
    %3473 = vmatprep.subr.mxu0 0.0
    %3474 = vmatpush2.msra.mxu0 0.0
    %3475 = vmatprep.subr.mxu0 0.0
    %3476 = vmatpush2.msra.mxu0 0.0
    %3477 = vmatprep.subr.mxu0 0.0
    %3478 = vmatpush2.msra.mxu0 0.0
    %3479 = vmatprep.subr.mxu0 0.0
    %3480 = vmatpush2.msra.mxu0 0.0
    %3481 = vmatprep.subr.mxu0 0.0
    %3482 = vmatpush2.msra.mxu0 0.0
    %3483 = vmatprep.mubr.f32.mxu0 0.0
    %3484 = vmatmul.mubr.f32.gmra.mxu0 %v1371
    %v3485 = vpop.f32.mrf.mxu0
    %v3486 = vadd.f32 0.0, %v3485
    %v3487 = vpop.f32.mrf.mxu0
    %v3488 = vadd.f32 0.0, %v3487
    %3489 = vmatprep.mubr.f32.mxu0 0.0
    %3490 = vmatmul.mubr.f32.gmra.mxu0 %v1373
    %v3491 = vpop.f32.mrf.mxu0
    %v3492 = vadd.f32 0.0, %v3491
    %v3493 = vpop.f32.mrf.mxu0
    %v3494 = vadd.f32 0.0, %v3493
    %3495 = vmatprep.mubr.f32.mxu0 0.0
    %3496 = vmatmul.mubr.f32.gmra.mxu0 %v1375
    %v3497 = vpop.f32.mrf.mxu0
    %v3498 = vadd.f32 0.0, %v3497
    %v3499 = vpop.f32.mrf.mxu0
    %v3500 = vadd.f32 0.0, %v3499
    %3501 = vmatprep.mubr.f32.mxu0 0.0
    %3502 = vmatmul.mubr.f32.gmra.mxu0 %v1377
    %v3503 = vpop.f32.mrf.mxu0
    %v3504 = vadd.f32 0.0, %v3503
    %v3505 = vpop.f32.mrf.mxu0
    %v3506 = vadd.f32 0.0, %v3505
    %3507 = vdwg.mxu0
    %v3508 = vadd.f32 %v3405, %v3486
    %v3509 = vadd.f32 %v3406, %v3488
    %v3510 = vadd.f32 %v3407, %v3492
    %v3511 = vadd.f32 %v3408, %v3494
    %v3512 = vadd.f32 %v3409, %v3498
    %v3513 = vadd.f32 %v3410, %v3500
    %v3514 = vadd.f32 %v3411, %v3504
    %v3515 = vadd.f32 %v3412, %v3506
    %v3517 = vsel %vm690, %v2803, 0
    %v3520 = vsel %vm690, %v2804, 0
    %3522 = vmatprep.subr.mxu0 0.0
    %3523 = vmatpush1.msra.mxu0 0.0
    %3524 = vmatprep.subr.mxu0 0.0
    %3525 = vmatpush1.msra.mxu0 0.0
    %3526 = vmatprep.subr.mxu0 0.0
    %3527 = vmatpush1.msra.mxu0 0.0
    %3528 = vmatprep.subr.mxu0 0.0
    %3529 = vmatpush1.msra.mxu0 0.0
    %3530 = vmatprep.subr.mxu0 0.0
    %3531 = vmatpush1.msra.mxu0 0.0
    %3532 = vmatprep.subr.mxu0 0.0
    %3533 = vmatpush1.msra.mxu0 0.0
    %3534 = vmatprep.subr.mxu0 0.0
    %3535 = vmatpush1.msra.mxu0 0.0
    %3536 = vmatprep.subr.mxu0 0.0
    %3537 = vmatpush1.msra.mxu0 0.0
    %3538 = vmatprep.subr.mxu0 0.0
    %3539 = vmatpush1.msra.mxu0 0.0
    %3540 = vmatprep.subr.mxu0 0.0
    %3541 = vmatpush1.msra.mxu0 0.0
    %3542 = vmatprep.subr.mxu0 0.0
    %3543 = vmatpush1.msra.mxu0 0.0
    %3544 = vmatprep.subr.mxu0 0.0
    %3545 = vmatpush1.msra.mxu0 0.0
    %3546 = vmatprep.subr.mxu0 0.0
    %3547 = vmatpush1.msra.mxu0 0.0
    %3548 = vmatprep.subr.mxu0 0.0
    %3549 = vmatpush1.msra.mxu0 0.0
    %3550 = vmatprep.subr.mxu0 0.0
    %3551 = vmatpush1.msra.mxu0 0.0
    %3552 = vmatprep.subr.mxu0 %v3520
    %3553 = vmatpush1.msra.mxu0 %v3517
    %3554 = vmatprep.subr.mxu0 0.0
    %3555 = vmatpush2.msra.mxu0 0.0
    %3556 = vmatprep.subr.mxu0 0.0
    %3557 = vmatpush2.msra.mxu0 0.0
    %3558 = vmatprep.subr.mxu0 0.0
    %3559 = vmatpush2.msra.mxu0 0.0
    %3560 = vmatprep.subr.mxu0 0.0
    %3561 = vmatpush2.msra.mxu0 0.0
    %3562 = vmatprep.subr.mxu0 0.0
    %3563 = vmatpush2.msra.mxu0 0.0
    %3564 = vmatprep.subr.mxu0 0.0
    %3565 = vmatpush2.msra.mxu0 0.0
    %3566 = vmatprep.subr.mxu0 0.0
    %3567 = vmatpush2.msra.mxu0 0.0
    %3568 = vmatprep.subr.mxu0 0.0
    %3569 = vmatpush2.msra.mxu0 0.0
    %3570 = vmatprep.subr.mxu0 0.0
    %3571 = vmatpush2.msra.mxu0 0.0
    %3572 = vmatprep.subr.mxu0 0.0
    %3573 = vmatpush2.msra.mxu0 0.0
    %3574 = vmatprep.subr.mxu0 0.0
    %3575 = vmatpush2.msra.mxu0 0.0
    %3576 = vmatprep.subr.mxu0 0.0
    %3577 = vmatpush2.msra.mxu0 0.0
    %3578 = vmatprep.subr.mxu0 0.0
    %3579 = vmatpush2.msra.mxu0 0.0
    %3580 = vmatprep.subr.mxu0 0.0
    %3581 = vmatpush2.msra.mxu0 0.0
    %3582 = vmatprep.subr.mxu0 0.0
    %3583 = vmatpush2.msra.mxu0 0.0
    %3584 = vmatprep.subr.mxu0 0.0
    %3585 = vmatpush2.msra.mxu0 0.0
    %3586 = vmatprep.mubr.f32.mxu0 0.0
    %3587 = vmatmul.mubr.f32.gmra.mxu0 %v1490
    %v3588 = vpop.f32.mrf.mxu0
    %v3589 = vadd.f32 0.0, %v3588
    %v3590 = vpop.f32.mrf.mxu0
    %v3591 = vadd.f32 0.0, %v3590
    %3592 = vmatprep.mubr.f32.mxu0 0.0
    %3593 = vmatmul.mubr.f32.gmra.mxu0 %v1492
    %v3594 = vpop.f32.mrf.mxu0
    %v3595 = vadd.f32 0.0, %v3594
    %v3596 = vpop.f32.mrf.mxu0
    %v3597 = vadd.f32 0.0, %v3596
    %3598 = vmatprep.mubr.f32.mxu0 0.0
    %3599 = vmatmul.mubr.f32.gmra.mxu0 %v1494
    %v3600 = vpop.f32.mrf.mxu0
    %v3601 = vadd.f32 0.0, %v3600
    %v3602 = vpop.f32.mrf.mxu0
    %v3603 = vadd.f32 0.0, %v3602
    %3604 = vmatprep.mubr.f32.mxu0 0.0
    %3605 = vmatmul.mubr.f32.gmra.mxu0 %v1496
    %v3606 = vpop.f32.mrf.mxu0
    %v3607 = vadd.f32 0.0, %v3606
    %v3608 = vpop.f32.mrf.mxu0
    %v3609 = vadd.f32 0.0, %v3608
    %3610 = vdwg.mxu0
    %v3611 = vadd.f32 %v3508, %v3589
    %v3612 = vadd.f32 %v3509, %v3591
    %v3613 = vadd.f32 %v3510, %v3595
    %v3614 = vadd.f32 %v3511, %v3597
    %v3615 = vadd.f32 %v3512, %v3601
    %v3616 = vadd.f32 %v3513, %v3603
    %v3617 = vadd.f32 %v3514, %v3607
    %v3618 = vadd.f32 %v3515, %v3609
    %v3620 = vsel %vm690, %v2811, 0
    %v3623 = vsel %vm690, %v2812, 0
    %3625 = vmatprep.subr.mxu0 0.0
    %3626 = vmatpush1.msra.mxu0 0.0
    %3627 = vmatprep.subr.mxu0 0.0
    %3628 = vmatpush1.msra.mxu0 0.0
    %3629 = vmatprep.subr.mxu0 0.0
    %3630 = vmatpush1.msra.mxu0 0.0
    %3631 = vmatprep.subr.mxu0 0.0
    %3632 = vmatpush1.msra.mxu0 0.0
    %3633 = vmatprep.subr.mxu0 0.0
    %3634 = vmatpush1.msra.mxu0 0.0
    %3635 = vmatprep.subr.mxu0 0.0
    %3636 = vmatpush1.msra.mxu0 0.0
    %3637 = vmatprep.subr.mxu0 0.0
    %3638 = vmatpush1.msra.mxu0 0.0
    %3639 = vmatprep.subr.mxu0 0.0
    %3640 = vmatpush1.msra.mxu0 0.0
    %3641 = vmatprep.subr.mxu0 0.0
    %3642 = vmatpush1.msra.mxu0 0.0
    %3643 = vmatprep.subr.mxu0 0.0
    %3644 = vmatpush1.msra.mxu0 0.0
    %3645 = vmatprep.subr.mxu0 0.0
    %3646 = vmatpush1.msra.mxu0 0.0
    %3647 = vmatprep.subr.mxu0 0.0
    %3648 = vmatpush1.msra.mxu0 0.0
    %3649 = vmatprep.subr.mxu0 0.0
    %3650 = vmatpush1.msra.mxu0 0.0
    %3651 = vmatprep.subr.mxu0 0.0
    %3652 = vmatpush1.msra.mxu0 0.0
    %3653 = vmatprep.subr.mxu0 0.0
    %3654 = vmatpush1.msra.mxu0 0.0
    %3655 = vmatprep.subr.mxu0 %v3623
    %3656 = vmatpush1.msra.mxu0 %v3620
    %3657 = vmatprep.subr.mxu0 0.0
    %3658 = vmatpush2.msra.mxu0 0.0
    %3659 = vmatprep.subr.mxu0 0.0
    %3660 = vmatpush2.msra.mxu0 0.0
    %3661 = vmatprep.subr.mxu0 0.0
    %3662 = vmatpush2.msra.mxu0 0.0
    %3663 = vmatprep.subr.mxu0 0.0
    %3664 = vmatpush2.msra.mxu0 0.0
    %3665 = vmatprep.subr.mxu0 0.0
    %3666 = vmatpush2.msra.mxu0 0.0
    %3667 = vmatprep.subr.mxu0 0.0
    %3668 = vmatpush2.msra.mxu0 0.0
    %3669 = vmatprep.subr.mxu0 0.0
    %3670 = vmatpush2.msra.mxu0 0.0
    %3671 = vmatprep.subr.mxu0 0.0
    %3672 = vmatpush2.msra.mxu0 0.0
    %3673 = vmatprep.subr.mxu0 0.0
    %3674 = vmatpush2.msra.mxu0 0.0
    %3675 = vmatprep.subr.mxu0 0.0
    %3676 = vmatpush2.msra.mxu0 0.0
    %3677 = vmatprep.subr.mxu0 0.0
    %3678 = vmatpush2.msra.mxu0 0.0
    %3679 = vmatprep.subr.mxu0 0.0
    %3680 = vmatpush2.msra.mxu0 0.0
    %3681 = vmatprep.subr.mxu0 0.0
    %3682 = vmatpush2.msra.mxu0 0.0
    %3683 = vmatprep.subr.mxu0 0.0
    %3684 = vmatpush2.msra.mxu0 0.0
    %3685 = vmatprep.subr.mxu0 0.0
    %3686 = vmatpush2.msra.mxu0 0.0
    %3687 = vmatprep.subr.mxu0 0.0
    %3688 = vmatpush2.msra.mxu0 0.0
    %3689 = vmatprep.mubr.f32.mxu0 0.0
    %3690 = vmatmul.mubr.f32.gmra.mxu0 %v1609
    %v3691 = vpop.f32.mrf.mxu0
    %v3692 = vadd.f32 0.0, %v3691
    %v3693 = vpop.f32.mrf.mxu0
    %v3694 = vadd.f32 0.0, %v3693
    %3695 = vmatprep.mubr.f32.mxu0 0.0
    %3696 = vmatmul.mubr.f32.gmra.mxu0 %v1611
    %v3697 = vpop.f32.mrf.mxu0
    %v3698 = vadd.f32 0.0, %v3697
    %v3699 = vpop.f32.mrf.mxu0
    %v3700 = vadd.f32 0.0, %v3699
    %3701 = vmatprep.mubr.f32.mxu0 0.0
    %3702 = vmatmul.mubr.f32.gmra.mxu0 %v1613
    %v3703 = vpop.f32.mrf.mxu0
    %v3704 = vadd.f32 0.0, %v3703
    %v3705 = vpop.f32.mrf.mxu0
    %v3706 = vadd.f32 0.0, %v3705
    %3707 = vmatprep.mubr.f32.mxu0 0.0
    %3708 = vmatmul.mubr.f32.gmra.mxu0 %v1615
    %v3709 = vpop.f32.mrf.mxu0
    %v3710 = vadd.f32 0.0, %v3709
    %v3711 = vpop.f32.mrf.mxu0
    %v3712 = vadd.f32 0.0, %v3711
    %3713 = vdwg.mxu0
    %v3714 = vadd.f32 %v3611, %v3692
    %v3715 = vadd.f32 %v3612, %v3694
    %v3716 = vadd.f32 %v3613, %v3698
    %v3717 = vadd.f32 %v3614, %v3700
    %v3718 = vadd.f32 %v3615, %v3704
    %v3719 = vadd.f32 %v3616, %v3706
    %v3720 = vadd.f32 %v3617, %v3710
    %v3721 = vadd.f32 %v3618, %v3712
    %v3722 = vadd.f32 %v3714, %v1722
    %v3723 = vadd.f32 %v3715, %v1722
    %v3724 = vadd.f32 %v3716, %v1726
    %v3725 = vadd.f32 %v3717, %v1726
    %v3726 = vadd.f32 %v3718, %v1730
    %v3727 = vadd.f32 %v3719, %v1730
    %v3728 = vadd.f32 %v3720, %v1734
    %v3729 = vadd.f32 %v3721, %v1734
    %v3730 = vmax.f32 %v3722, 0.0
    %v3731 = vmax.f32 %v3723, 0.0
    %v3732 = vmax.f32 %v3724, 0.0
    %v3733 = vmax.f32 %v3725, 0.0
    %v3734 = vmax.f32 %v3726, 0.0
    %v3735 = vmax.f32 %v3727, 0.0
    %v3736 = vmax.f32 %v3728, 0.0
    %v3737 = vmax.f32 %v3729, 0.0
    %3738 = vmatprep.subr.mxu0 0.0
    %3739 = vmatpush1.msra.mxu0 0.0
    %3740 = vmatprep.subr.mxu0 0.0
    %3741 = vmatpush1.msra.mxu0 0.0
    %3742 = vmatprep.subr.mxu0 0.0
    %3743 = vmatpush1.msra.mxu0 0.0
    %3744 = vmatprep.subr.mxu0 0.0
    %3745 = vmatpush1.msra.mxu0 0.0
    %3746 = vmatprep.subr.mxu0 0.0
    %3747 = vmatpush1.msra.mxu0 0.0
    %3748 = vmatprep.subr.mxu0 0.0
    %3749 = vmatpush1.msra.mxu0 0.0
    %3750 = vmatprep.subr.mxu0 0.0
    %3751 = vmatpush1.msra.mxu0 0.0
    %3752 = vmatprep.subr.mxu0 0.0
    %3753 = vmatpush1.msra.mxu0 0.0
    %3754 = vmatprep.subr.mxu0 0.0
    %3755 = vmatpush1.msra.mxu0 0.0
    %3756 = vmatprep.subr.mxu0 0.0
    %3757 = vmatpush1.msra.mxu0 0.0
    %3758 = vmatprep.subr.mxu0 0.0
    %3759 = vmatpush1.msra.mxu0 0.0
    %3760 = vmatprep.subr.mxu0 0.0
    %3761 = vmatpush1.msra.mxu0 0.0
    %3762 = vmatprep.subr.mxu0 %v3737
    %3763 = vmatpush1.msra.mxu0 %v3736
    %3764 = vmatprep.subr.mxu0 %v3735
    %3765 = vmatpush1.msra.mxu0 %v3734
    %3766 = vmatprep.subr.mxu0 %v3733
    %3767 = vmatpush1.msra.mxu0 %v3732
    %3768 = vmatprep.subr.mxu0 %v3731
    %3769 = vmatpush1.msra.mxu0 %v3730
    %3770 = vmatprep.subr.mxu0 0.0
    %3771 = vmatpush2.msra.mxu0 0.0
    %3772 = vmatprep.subr.mxu0 0.0
    %3773 = vmatpush2.msra.mxu0 0.0
    %3774 = vmatprep.subr.mxu0 0.0
    %3775 = vmatpush2.msra.mxu0 0.0
    %3776 = vmatprep.subr.mxu0 0.0
    %3777 = vmatpush2.msra.mxu0 0.0
    %3778 = vmatprep.subr.mxu0 0.0
    %3779 = vmatpush2.msra.mxu0 0.0
    %3780 = vmatprep.subr.mxu0 0.0
    %3781 = vmatpush2.msra.mxu0 0.0
    %3782 = vmatprep.subr.mxu0 0.0
    %3783 = vmatpush2.msra.mxu0 0.0
    %3784 = vmatprep.subr.mxu0 0.0
    %3785 = vmatpush2.msra.mxu0 0.0
    %3786 = vmatprep.subr.mxu0 0.0
    %3787 = vmatpush2.msra.mxu0 0.0
    %3788 = vmatprep.subr.mxu0 0.0
    %3789 = vmatpush2.msra.mxu0 0.0
    %3790 = vmatprep.subr.mxu0 0.0
    %3791 = vmatpush2.msra.mxu0 0.0
    %3792 = vmatprep.subr.mxu0 0.0
    %3793 = vmatpush2.msra.mxu0 0.0
    %3794 = vmatprep.subr.mxu0 0.0
    %3795 = vmatpush2.msra.mxu0 0.0
    %3796 = vmatprep.subr.mxu0 0.0
    %3797 = vmatpush2.msra.mxu0 0.0
    %3798 = vmatprep.subr.mxu0 0.0
    %3799 = vmatpush2.msra.mxu0 0.0
    %3800 = vmatprep.subr.mxu0 0.0
    %3801 = vmatpush2.msra.mxu0 0.0
    %3802 = vmatprep.mubr.f32.mxu0 0.0
    %3803 = vmatmul.mubr.f32.gmra.mxu0 %v1773
    %v3804 = vpop.f32.mrf.mxu0
    %v3805 = vadd.f32 %v1755, %v3804
    %v3806 = vpop.f32.mrf.mxu0
    %v3807 = vadd.f32 %v1755, %v3806
    %3808 = vmatprep.mubr.f32.mxu0 0.0
    %3809 = vmatmul.mubr.f32.gmra.mxu0 %v1775
    %v3810 = vpop.f32.mrf.mxu0
    %v3811 = vadd.f32 %v1760, %v3810
    %v3812 = vpop.f32.mrf.mxu0
    %v3813 = vadd.f32 %v1760, %v3812
    %3814 = vmatprep.mubr.f32.mxu0 0.0
    %3815 = vmatmul.mubr.f32.gmra.mxu0 %v1777
    %v3816 = vpop.f32.mrf.mxu0
    %v3817 = vadd.f32 %v1765, %v3816
    %v3818 = vpop.f32.mrf.mxu0
    %v3819 = vadd.f32 %v1765, %v3818
    %3820 = vmatprep.mubr.f32.mxu0 0.0
    %3821 = vmatmul.mubr.f32.gmra.mxu0 %v1779
    %v3822 = vpop.f32.mrf.mxu0
    %v3823 = vadd.f32 %v1770, %v3822
    %v3824 = vpop.f32.mrf.mxu0
    %v3825 = vadd.f32 %v1770, %v3824
    %3826 = vdwg.mxu0
    %v3827 = vmax.f32 %v3805, 0.0
    %v3828 = vmax.f32 %v3807, 0.0
    %v3829 = vmax.f32 %v3811, 0.0
    %v3830 = vmax.f32 %v3813, 0.0
    %v3831 = vmax.f32 %v3817, 0.0
    %v3832 = vmax.f32 %v3819, 0.0
    %v3833 = vmax.f32 %v3823, 0.0
    %v3834 = vmax.f32 %v3825, 0.0
    %3835 = vrot.lane.b32.xlu0 %v3827, 17
    %v3836 = vpop.permute.xlu0 %3835
    %3837 = vrot.lane.b32.xlu0 %v3829, 17
    %v3838 = vpop.permute.xlu0 %3837
    %3839 = vrot.lane.b32.xlu0 %v3831, 17
    %v3840 = vpop.permute.xlu0 %3839
    %3841 = vrot.lane.b32.xlu0 %v3833, 17
    %v3842 = vpop.permute.xlu0 %3841
    %3843 = vrot.lane.b32.xlu0 %v3828, 17
    %v3844 = vpop.permute.xlu0 %3843
    %3845 = vrot.lane.b32.xlu0 %v3830, 17
    %v3846 = vpop.permute.xlu0 %3845
    %3847 = vrot.lane.b32.xlu0 %v3832, 17
    %v3848 = vpop.permute.xlu0 %3847
    %3849 = vrot.lane.b32.xlu0 %v3834, 17
    %v3850 = vpop.permute.xlu0 %3849
    %v3851 = vsel %vm114, %v3836, %v3844
    %v3852 = vsel %vm114, %v3838, %v3846
    %v3853 = vsel %vm114, %v3840, %v3848
    %v3854 = vsel %vm114, %v3842, %v3850
    %v3855 = vsel %vm114, %v3844, %v3836
    %v3856 = vsel %vm114, %v3846, %v3838
    %v3857 = vsel %vm114, %v3848, %v3840
    %v3858 = vsel %vm114, %v3850, %v3842
    %v3859 = vmul.f32 %v3855, %v121
    %v3860 = vmul.f32 %v3851, %v125
    %v3861 = vmul.f32 %v3856, %v121
    %v3862 = vmul.f32 %v3852, %v125
    %v3863 = vmul.f32 %v3857, %v121
    %v3864 = vmul.f32 %v3853, %v125
    %v3865 = vmul.f32 %v3858, %v121
    %v3866 = vmul.f32 %v3854, %v125
    %3867 = vrot.lane.b32.xlu0 %v3827, 16
    %v3868 = vpop.permute.xlu0 %3867
    %3869 = vrot.lane.b32.xlu0 %v3829, 16
    %v3870 = vpop.permute.xlu0 %3869
    %3871 = vrot.lane.b32.xlu0 %v3831, 16
    %v3872 = vpop.permute.xlu0 %3871
    %3873 = vrot.lane.b32.xlu0 %v3833, 16
    %v3874 = vpop.permute.xlu0 %3873
    %3875 = vrot.lane.b32.xlu0 %v3828, 16
    %v3876 = vpop.permute.xlu0 %3875
    %3877 = vrot.lane.b32.xlu0 %v3830, 16
    %v3878 = vpop.permute.xlu0 %3877
    %3879 = vrot.lane.b32.xlu0 %v3832, 16
    %v3880 = vpop.permute.xlu0 %3879
    %3881 = vrot.lane.b32.xlu0 %v3834, 16
    %v3882 = vpop.permute.xlu0 %3881
    %v3883 = vsel %vm134, %v3868, %v3876
    %v3884 = vsel %vm134, %v3870, %v3878
    %v3885 = vsel %vm134, %v3872, %v3880
    %v3886 = vsel %vm134, %v3874, %v3882
    %v3887 = vsel %vm134, %v3876, %v3868
    %v3888 = vsel %vm134, %v3878, %v3870
    %v3889 = vsel %vm134, %v3880, %v3872
    %v3890 = vsel %vm134, %v3882, %v3874
    %v3891 = vmul.f32 %v3887, %v141
    %v3892 = vmul.f32 %v3883, %v145
    %v3893 = vmul.f32 %v3888, %v141
    %v3894 = vmul.f32 %v3884, %v145
    %v3895 = vmul.f32 %v3889, %v141
    %v3896 = vmul.f32 %v3885, %v145
    %v3897 = vmul.f32 %v3890, %v141
    %v3898 = vmul.f32 %v3886, %v145
    %3899 = vrot.lane.b32.xlu0 %v3827, 15
    %v3900 = vpop.permute.xlu0 %3899
    %3901 = vrot.lane.b32.xlu0 %v3829, 15
    %v3902 = vpop.permute.xlu0 %3901
    %3903 = vrot.lane.b32.xlu0 %v3831, 15
    %v3904 = vpop.permute.xlu0 %3903
    %3905 = vrot.lane.b32.xlu0 %v3833, 15
    %v3906 = vpop.permute.xlu0 %3905
    %3907 = vrot.lane.b32.xlu0 %v3828, 15
    %v3908 = vpop.permute.xlu0 %3907
    %3909 = vrot.lane.b32.xlu0 %v3830, 15
    %v3910 = vpop.permute.xlu0 %3909
    %3911 = vrot.lane.b32.xlu0 %v3832, 15
    %v3912 = vpop.permute.xlu0 %3911
    %3913 = vrot.lane.b32.xlu0 %v3834, 15
    %v3914 = vpop.permute.xlu0 %3913
    %v3915 = vsel %vm154, %v3900, %v3908
    %v3916 = vsel %vm154, %v3902, %v3910
    %v3917 = vsel %vm154, %v3904, %v3912
    %v3918 = vsel %vm154, %v3906, %v3914
    %v3919 = vsel %vm154, %v3908, %v3900
    %v3920 = vsel %vm154, %v3910, %v3902
    %v3921 = vsel %vm154, %v3912, %v3904
    %v3922 = vsel %vm154, %v3914, %v3906
    %v3923 = vmul.f32 %v3919, %v161
    %v3924 = vmul.f32 %v3915, %v165
    %v3925 = vmul.f32 %v3920, %v161
    %v3926 = vmul.f32 %v3916, %v165
    %v3927 = vmul.f32 %v3921, %v161
    %v3928 = vmul.f32 %v3917, %v165
    %v3929 = vmul.f32 %v3922, %v161
    %v3930 = vmul.f32 %v3918, %v165
    %3931 = vrot.lane.b32.xlu0 %v3827, 1
    %v3932 = vpop.permute.xlu0 %3931
    %3933 = vrot.lane.b32.xlu0 %v3829, 1
    %v3934 = vpop.permute.xlu0 %3933
    %3935 = vrot.lane.b32.xlu0 %v3831, 1
    %v3936 = vpop.permute.xlu0 %3935
    %3937 = vrot.lane.b32.xlu0 %v3833, 1
    %v3938 = vpop.permute.xlu0 %3937
    %3939 = vrot.lane.b32.xlu0 %v3828, 1
    %v3940 = vpop.permute.xlu0 %3939
    %3941 = vrot.lane.b32.xlu0 %v3830, 1
    %v3942 = vpop.permute.xlu0 %3941
    %3943 = vrot.lane.b32.xlu0 %v3832, 1
    %v3944 = vpop.permute.xlu0 %3943
    %3945 = vrot.lane.b32.xlu0 %v3834, 1
    %v3946 = vpop.permute.xlu0 %3945
    %v3947 = vsel %vm174, %v3932, %v3940
    %v3948 = vsel %vm174, %v3934, %v3942
    %v3949 = vsel %vm174, %v3936, %v3944
    %v3950 = vsel %vm174, %v3938, %v3946
    %v3951 = vsel %vm174, %v3940, %v3932
    %v3952 = vsel %vm174, %v3942, %v3934
    %v3953 = vsel %vm174, %v3944, %v3936
    %v3954 = vsel %vm174, %v3946, %v3938
    %v3955 = vmul.f32 %v3951, %v181
    %v3956 = vmul.f32 %v3947, %v185
    %v3957 = vmul.f32 %v3952, %v181
    %v3958 = vmul.f32 %v3948, %v185
    %v3959 = vmul.f32 %v3953, %v181
    %v3960 = vmul.f32 %v3949, %v185
    %v3961 = vmul.f32 %v3954, %v181
    %v3962 = vmul.f32 %v3950, %v185
    %3963 = vrot.lane.b32.xlu0 %v3827, 127
    %v3964 = vpop.permute.xlu0 %3963
    %3965 = vrot.lane.b32.xlu0 %v3829, 127
    %v3966 = vpop.permute.xlu0 %3965
    %3967 = vrot.lane.b32.xlu0 %v3831, 127
    %v3968 = vpop.permute.xlu0 %3967
    %3969 = vrot.lane.b32.xlu0 %v3833, 127
    %v3970 = vpop.permute.xlu0 %3969
    %3971 = vrot.lane.b32.xlu0 %v3828, 127
    %v3972 = vpop.permute.xlu0 %3971
    %3973 = vrot.lane.b32.xlu0 %v3830, 127
    %v3974 = vpop.permute.xlu0 %3973
    %3975 = vrot.lane.b32.xlu0 %v3832, 127
    %v3976 = vpop.permute.xlu0 %3975
    %3977 = vrot.lane.b32.xlu0 %v3834, 127
    %v3978 = vpop.permute.xlu0 %3977
    %v3979 = vsel %vm194, %v3964, %v3972
    %v3980 = vsel %vm194, %v3966, %v3974
    %v3981 = vsel %vm194, %v3968, %v3976
    %v3982 = vsel %vm194, %v3970, %v3978
    %v3983 = vsel %vm194, %v3972, %v3964
    %v3984 = vsel %vm194, %v3974, %v3966
    %v3985 = vsel %vm194, %v3976, %v3968
    %v3986 = vsel %vm194, %v3978, %v3970
    %v3987 = vmul.f32 %v3979, %v201
    %v3988 = vmul.f32 %v3983, %v205
    %v3989 = vmul.f32 %v3980, %v201
    %v3990 = vmul.f32 %v3984, %v205
    %v3991 = vmul.f32 %v3981, %v201
    %v3992 = vmul.f32 %v3985, %v205
    %v3993 = vmul.f32 %v3982, %v201
    %v3994 = vmul.f32 %v3986, %v205
    %3995 = vrot.lane.b32.xlu0 %v3827, 113
    %v3996 = vpop.permute.xlu0 %3995
    %3997 = vrot.lane.b32.xlu0 %v3829, 113
    %v3998 = vpop.permute.xlu0 %3997
    %3999 = vrot.lane.b32.xlu0 %v3831, 113
    %v4000 = vpop.permute.xlu0 %3999
    %4001 = vrot.lane.b32.xlu0 %v3833, 113
    %v4002 = vpop.permute.xlu0 %4001
    %4003 = vrot.lane.b32.xlu0 %v3828, 113
    %v4004 = vpop.permute.xlu0 %4003
    %4005 = vrot.lane.b32.xlu0 %v3830, 113
    %v4006 = vpop.permute.xlu0 %4005
    %4007 = vrot.lane.b32.xlu0 %v3832, 113
    %v4008 = vpop.permute.xlu0 %4007
    %4009 = vrot.lane.b32.xlu0 %v3834, 113
    %v4010 = vpop.permute.xlu0 %4009
    %v4011 = vsel %vm214, %v3996, %v4004
    %v4012 = vsel %vm214, %v3998, %v4006
    %v4013 = vsel %vm214, %v4000, %v4008
    %v4014 = vsel %vm214, %v4002, %v4010
    %v4015 = vsel %vm214, %v4004, %v3996
    %v4016 = vsel %vm214, %v4006, %v3998
    %v4017 = vsel %vm214, %v4008, %v4000
    %v4018 = vsel %vm214, %v4010, %v4002
    %v4019 = vmul.f32 %v4011, %v221
    %v4020 = vmul.f32 %v4015, %v225
    %v4021 = vmul.f32 %v4012, %v221
    %v4022 = vmul.f32 %v4016, %v225
    %v4023 = vmul.f32 %v4013, %v221
    %v4024 = vmul.f32 %v4017, %v225
    %v4025 = vmul.f32 %v4014, %v221
    %v4026 = vmul.f32 %v4018, %v225
    %4027 = vrot.lane.b32.xlu0 %v3827, 112
    %v4028 = vpop.permute.xlu0 %4027
    %4029 = vrot.lane.b32.xlu0 %v3829, 112
    %v4030 = vpop.permute.xlu0 %4029
    %4031 = vrot.lane.b32.xlu0 %v3831, 112
    %v4032 = vpop.permute.xlu0 %4031
    %4033 = vrot.lane.b32.xlu0 %v3833, 112
    %v4034 = vpop.permute.xlu0 %4033
    %4035 = vrot.lane.b32.xlu0 %v3828, 112
    %v4036 = vpop.permute.xlu0 %4035
    %4037 = vrot.lane.b32.xlu0 %v3830, 112
    %v4038 = vpop.permute.xlu0 %4037
    %4039 = vrot.lane.b32.xlu0 %v3832, 112
    %v4040 = vpop.permute.xlu0 %4039
    %4041 = vrot.lane.b32.xlu0 %v3834, 112
    %v4042 = vpop.permute.xlu0 %4041
    %v4043 = vsel %vm234, %v4028, %v4036
    %v4044 = vsel %vm234, %v4030, %v4038
    %v4045 = vsel %vm234, %v4032, %v4040
    %v4046 = vsel %vm234, %v4034, %v4042
    %v4047 = vsel %vm234, %v4036, %v4028
    %v4048 = vsel %vm234, %v4038, %v4030
    %v4049 = vsel %vm234, %v4040, %v4032
    %v4050 = vsel %vm234, %v4042, %v4034
    %v4051 = vmul.f32 %v4043, %v241
    %v4052 = vmul.f32 %v4047, %v245
    %v4053 = vmul.f32 %v4044, %v241
    %v4054 = vmul.f32 %v4048, %v245
    %v4055 = vmul.f32 %v4045, %v241
    %v4056 = vmul.f32 %v4049, %v245
    %v4057 = vmul.f32 %v4046, %v241
    %v4058 = vmul.f32 %v4050, %v245
    %4059 = vrot.lane.b32.xlu0 %v3827, 111
    %v4060 = vpop.permute.xlu0 %4059
    %4061 = vrot.lane.b32.xlu0 %v3829, 111
    %v4062 = vpop.permute.xlu0 %4061
    %4063 = vrot.lane.b32.xlu0 %v3831, 111
    %v4064 = vpop.permute.xlu0 %4063
    %4065 = vrot.lane.b32.xlu0 %v3833, 111
    %v4066 = vpop.permute.xlu0 %4065
    %4067 = vrot.lane.b32.xlu0 %v3828, 111
    %v4068 = vpop.permute.xlu0 %4067
    %4069 = vrot.lane.b32.xlu0 %v3830, 111
    %v4070 = vpop.permute.xlu0 %4069
    %4071 = vrot.lane.b32.xlu0 %v3832, 111
    %v4072 = vpop.permute.xlu0 %4071
    %4073 = vrot.lane.b32.xlu0 %v3834, 111
    %v4074 = vpop.permute.xlu0 %4073
    %v4075 = vsel %vm254, %v4060, %v4068
    %v4076 = vsel %vm254, %v4062, %v4070
    %v4077 = vsel %vm254, %v4064, %v4072
    %v4078 = vsel %vm254, %v4066, %v4074
    %v4079 = vsel %vm254, %v4068, %v4060
    %v4080 = vsel %vm254, %v4070, %v4062
    %v4081 = vsel %vm254, %v4072, %v4064
    %v4082 = vsel %vm254, %v4074, %v4066
    %v4083 = vmul.f32 %v4075, %v261
    %v4084 = vmul.f32 %v4079, %v265
    %v4085 = vmul.f32 %v4076, %v261
    %v4086 = vmul.f32 %v4080, %v265
    %v4087 = vmul.f32 %v4077, %v261
    %v4088 = vmul.f32 %v4081, %v265
    %v4089 = vmul.f32 %v4078, %v261
    %v4090 = vmul.f32 %v4082, %v265
    %4091 = vmatprep.subr.mxu0 %v3962
    %4092 = vmatpush1.msra.mxu0 %v3961
    %4093 = vmatprep.subr.mxu0 %v3960
    %4094 = vmatpush1.msra.mxu0 %v3959
    %4095 = vmatprep.subr.mxu0 %v3958
    %4096 = vmatpush1.msra.mxu0 %v3957
    %4097 = vmatprep.subr.mxu0 %v3956
    %4098 = vmatpush1.msra.mxu0 %v3955
    %4099 = vmatprep.subr.mxu0 %v3930
    %4100 = vmatpush1.msra.mxu0 %v3929
    %4101 = vmatprep.subr.mxu0 %v3928
    %4102 = vmatpush1.msra.mxu0 %v3927
    %4103 = vmatprep.subr.mxu0 %v3926
    %4104 = vmatpush1.msra.mxu0 %v3925
    %4105 = vmatprep.subr.mxu0 %v3924
    %4106 = vmatpush1.msra.mxu0 %v3923
    %4107 = vmatprep.subr.mxu0 %v3898
    %4108 = vmatpush1.msra.mxu0 %v3897
    %4109 = vmatprep.subr.mxu0 %v3896
    %4110 = vmatpush1.msra.mxu0 %v3895
    %4111 = vmatprep.subr.mxu0 %v3894
    %4112 = vmatpush1.msra.mxu0 %v3893
    %4113 = vmatprep.subr.mxu0 %v3892
    %4114 = vmatpush1.msra.mxu0 %v3891
    %4115 = vmatprep.subr.mxu0 %v3866
    %4116 = vmatpush1.msra.mxu0 %v3865
    %4117 = vmatprep.subr.mxu0 %v3864
    %4118 = vmatpush1.msra.mxu0 %v3863
    %4119 = vmatprep.subr.mxu0 %v3862
    %4120 = vmatpush1.msra.mxu0 %v3861
    %4121 = vmatprep.subr.mxu0 %v3860
    %4122 = vmatpush1.msra.mxu0 %v3859
    %4123 = vmatprep.subr.mxu0 %v4058
    %4124 = vmatpush2.msra.mxu0 %v4057
    %4125 = vmatprep.subr.mxu0 %v4056
    %4126 = vmatpush2.msra.mxu0 %v4055
    %4127 = vmatprep.subr.mxu0 %v4054
    %4128 = vmatpush2.msra.mxu0 %v4053
    %4129 = vmatprep.subr.mxu0 %v4052
    %4130 = vmatpush2.msra.mxu0 %v4051
    %4131 = vmatprep.subr.mxu0 %v4026
    %4132 = vmatpush2.msra.mxu0 %v4025
    %4133 = vmatprep.subr.mxu0 %v4024
    %4134 = vmatpush2.msra.mxu0 %v4023
    %4135 = vmatprep.subr.mxu0 %v4022
    %4136 = vmatpush2.msra.mxu0 %v4021
    %4137 = vmatprep.subr.mxu0 %v4020
    %4138 = vmatpush2.msra.mxu0 %v4019
    %4139 = vmatprep.subr.mxu0 %v3994
    %4140 = vmatpush2.msra.mxu0 %v3993
    %4141 = vmatprep.subr.mxu0 %v3992
    %4142 = vmatpush2.msra.mxu0 %v3991
    %4143 = vmatprep.subr.mxu0 %v3990
    %4144 = vmatpush2.msra.mxu0 %v3989
    %4145 = vmatprep.subr.mxu0 %v3988
    %4146 = vmatpush2.msra.mxu0 %v3987
    %4147 = vmatprep.subr.mxu0 %v3834
    %4148 = vmatpush2.msra.mxu0 %v3833
    %4149 = vmatprep.subr.mxu0 %v3832
    %4150 = vmatpush2.msra.mxu0 %v3831
    %4151 = vmatprep.subr.mxu0 %v3830
    %4152 = vmatpush2.msra.mxu0 %v3829
    %4153 = vmatprep.subr.mxu0 %v3828
    %4154 = vmatpush2.msra.mxu0 %v3827
    %4155 = vmatprep.mubr.f32.mxu0 %v103
    %4156 = vmatmul.mubr.f32.gmra.mxu0 %v102
    %v4157 = vpop.f32.mrf.mxu0
    %v4158 = vadd.f32 %v2137, %v4157
    %v4159 = vpop.f32.mrf.mxu0
    %v4160 = vadd.f32 %v2137, %v4159
    %4161 = vdwg.mxu0
    %4162 = vmatprep.subr.mxu0 0.0
    %4163 = vmatpush1.msra.mxu0 0.0
    %4164 = vmatprep.subr.mxu0 0.0
    %4165 = vmatpush1.msra.mxu0 0.0
    %4166 = vmatprep.subr.mxu0 0.0
    %4167 = vmatpush1.msra.mxu0 0.0
    %4168 = vmatprep.subr.mxu0 0.0
    %4169 = vmatpush1.msra.mxu0 0.0
    %4170 = vmatprep.subr.mxu0 0.0
    %4171 = vmatpush1.msra.mxu0 0.0
    %4172 = vmatprep.subr.mxu0 0.0
    %4173 = vmatpush1.msra.mxu0 0.0
    %4174 = vmatprep.subr.mxu0 0.0
    %4175 = vmatpush1.msra.mxu0 0.0
    %4176 = vmatprep.subr.mxu0 0.0
    %4177 = vmatpush1.msra.mxu0 0.0
    %4178 = vmatprep.subr.mxu0 0.0
    %4179 = vmatpush1.msra.mxu0 0.0
    %4180 = vmatprep.subr.mxu0 0.0
    %4181 = vmatpush1.msra.mxu0 0.0
    %4182 = vmatprep.subr.mxu0 0.0
    %4183 = vmatpush1.msra.mxu0 0.0
    %4184 = vmatprep.subr.mxu0 0.0
    %4185 = vmatpush1.msra.mxu0 0.0
    %4186 = vmatprep.subr.mxu0 %v4090
    %4187 = vmatpush1.msra.mxu0 %v4089
    %4188 = vmatprep.subr.mxu0 %v4088
    %4189 = vmatpush1.msra.mxu0 %v4087
    %4190 = vmatprep.subr.mxu0 %v4086
    %4191 = vmatpush1.msra.mxu0 %v4085
    %4192 = vmatprep.subr.mxu0 %v4084
    %4193 = vmatpush1.msra.mxu0 %v4083
    %4194 = vmatprep.subr.mxu0 0.0
    %4195 = vmatpush2.msra.mxu0 0.0
    %4196 = vmatprep.subr.mxu0 0.0
    %4197 = vmatpush2.msra.mxu0 0.0
    %4198 = vmatprep.subr.mxu0 0.0
    %4199 = vmatpush2.msra.mxu0 0.0
    %4200 = vmatprep.subr.mxu0 0.0
    %4201 = vmatpush2.msra.mxu0 0.0
    %4202 = vmatprep.subr.mxu0 0.0
    %4203 = vmatpush2.msra.mxu0 0.0
    %4204 = vmatprep.subr.mxu0 0.0
    %4205 = vmatpush2.msra.mxu0 0.0
    %4206 = vmatprep.subr.mxu0 0.0
    %4207 = vmatpush2.msra.mxu0 0.0
    %4208 = vmatprep.subr.mxu0 0.0
    %4209 = vmatpush2.msra.mxu0 0.0
    %4210 = vmatprep.subr.mxu0 0.0
    %4211 = vmatpush2.msra.mxu0 0.0
    %4212 = vmatprep.subr.mxu0 0.0
    %4213 = vmatpush2.msra.mxu0 0.0
    %4214 = vmatprep.subr.mxu0 0.0
    %4215 = vmatpush2.msra.mxu0 0.0
    %4216 = vmatprep.subr.mxu0 0.0
    %4217 = vmatpush2.msra.mxu0 0.0
    %4218 = vmatprep.subr.mxu0 0.0
    %4219 = vmatpush2.msra.mxu0 0.0
    %4220 = vmatprep.subr.mxu0 0.0
    %4221 = vmatpush2.msra.mxu0 0.0
    %4222 = vmatprep.subr.mxu0 0.0
    %4223 = vmatpush2.msra.mxu0 0.0
    %4224 = vmatprep.subr.mxu0 0.0
    %4225 = vmatpush2.msra.mxu0 0.0
    %4226 = vmatprep.mubr.f32.mxu0 0.0
    %4227 = vmatmul.mubr.f32.gmra.mxu0 %v2139
    %v4228 = vpop.f32.mrf.mxu0
    %v4229 = vadd.f32 %v4158, %v4228
    %v4230 = vpop.f32.mrf.mxu0
    %v4231 = vadd.f32 %v4160, %v4230
    %4232 = vdwg.mxu0
    %v4233 = vadd.f32 %v4229, 2.0
    %v4234 = vadd.f32 %v4231, 2.0
    %v4235 = vsub.f32 0.0, %v4233
    %v4236 = vsub.f32 0.0, %v4234
    %v4237 = vmul.f32 %v4235, 1.442695
    %v4238 = vpow.pop %v4237
    %v4239 = vmul.f32 %v4236, 1.442695
    %v4240 = vpow.pop %v4239
    %v4241 = vadd.f32 %v4238, 1.0
    %v4242 = vadd.f32 %v4240, 1.0
    %v4243 = vrcp.pop %v4241
    %v4244 = vmul.f32 1.0, %v4243
    %v4245 = vrcp.pop %v4242
    %v4246 = vmul.f32 1.0, %v4245
    %v4247 = vadd.f32 %v4244, 0.0001
    %v4248 = vadd.f32 %v4246, 0.0001
    %v4251 = vcombine.low %v4229, %v4231
    %v4252 = vrot.slane %v4251, 6
    %v4254 = vadd.f32 %v2372, %v4252
    %v4257 = vcombine.low %v4247, %v4248
    %v4259 = vmul.f32 %v4254, %v4257
    %v4262 = vunpack.c.l.s4 1983009808
    %v4263 = vunpack.c.0.s8 %v4262
    %v4264 = vlaneseq
    %v4265 = vshrl.u32 %v4264, 7
    %v4266 = vsub.s32 %v4263, %v4265
    %v4267 = vrot.slane %v4259, %v4266
    %v4268 = vcombine.high %v4267, %v4267
    %s4270 = scalar_lea.vmem [#allocation10], 4
    %4271 = vst [vmem:[%s4270] sm:$0xf] %v4268
    %v4272 = vlog2.pop %v4247
    %v4273 = vmul.f32 %v4272, 0.6931472
    %v4274 = vlog2.pop %v4248
    %v4275 = vmul.f32 %v4274, 0.6931472
    %v4278 = vrot.slane %v4273, 2
    %v4279 = vrot.slane %v4275, 2
    %v4282 = vsel %vm690, %v4278, 0.0
    %v4283 = vrot.slane %v4282, 4
    %v4284 = vadd.f32 %v4282, %v4283
    %v4285 = vrot.slane %v4284, 2
    %v4286 = vadd.f32 %v4284, %v4285
    %v4287 = vrot.slane %v4286, 1
    %v4288 = vadd.f32 %v4286, %v4287
    %v4289 = vsel %vm690, %v4279, 0.0
    %v4290 = vrot.slane %v4289, 4
    %v4291 = vadd.f32 %v4289, %v4290
    %v4292 = vrot.slane %v4291, 2
    %v4293 = vadd.f32 %v4291, %v4292
    %v4294 = vrot.slane %v4293, 1
    %v4295 = vadd.f32 %v4293, %v4294
    %v4298 = vcombine.low %v4288, %v4295
    %v4300 = vunpack.c.l.s4 1966171168
    %v4301 = vunpack.c.0.s8 %v4300
    %v4302 = vlaneseq
    %v4303 = vshrl.u32 %v4302, 7
    %v4304 = vsub.s32 %v4301, %v4303
    %v4305 = vrot.slane %v4298, %v4304
    %v4307 = vunpack.c.l.s4 1966171168
    %v4308 = vunpack.c.0.s8 %v4307
    %v4309 = vlaneseq
    %v4310 = vshrl.u32 %v4309, 7
    %v4311 = vsub.s32 %v4308, %v4310
    %v4312 = vrot.slane %v4305, %v4311
    %s4314 = scalar_lea.vmem [#allocation11], 2
    %4315 = vst.msk [vmem:[%s4314] sm:$0x3] %vm2366, %v4312
    // Predicated region
    $region34: #{tpu_custom_call.1} parent=1 // pred_check
      _
    $region35: #{tpu_custom_call.1} parent=1 // pred_check_branch
      %4317 = sbr.rel (0) target = $region37
    $region36: #{tpu_custom_call.1} parent=1 // pred_region
      %s4319 = ssub.s32 128, 128
      %4320 = vsyncadd [#allocation4], %s4319
      %s4321 = sshll.u32 [#allocation10], 4
      %s4322 = int_to_ptr.vmem [resolvable:$true] %s4321
      %4327 = dma.vmem_to_hbm [thread:$0]  %s4322, 128, %s4, [#allocation4], 64, 64, 4
    $region37: #{tpu_custom_call.1} parent=1 // pred_fallthru
      _
    // Predicated region
    $region38: #{tpu_custom_call.1} parent=1 // pred_check
      _
    $region39: #{tpu_custom_call.1} parent=1 // pred_check_branch
      %4329 = sbr.rel (0) target = $region41
    $region40: #{tpu_custom_call.1} parent=1 // pred_region
      %s4331 = ssub.s32 64, 64
      %4332 = vsyncadd [#allocation12], %s4331
      %s4333 = sshll.u32 [#allocation11], 4
      %s4334 = int_to_ptr.vmem [resolvable:$true] %s4333
      %4339 = dma.vmem_to_hbm [thread:$0]  %s4334, 64, %s5, [#allocation12], 32, 32, 2
    $region41: #{tpu_custom_call.1} parent=1 // pred_fallthru
      _
    // Predicated region
    $region42: #{tpu_custom_call.1} parent=1 // pred_check
      _
    $region43: #{tpu_custom_call.1} parent=1 // pred_check_branch
      %4341 = sbr.rel (0) target = $region45
    $region44: #{tpu_custom_call.1} parent=1 // pred_region
      %4342 = dma.done [#allocation4], 128
    $region45: #{tpu_custom_call.1} parent=1 // pred_fallthru
      _
    // Predicated region
    $region46: #{tpu_custom_call.1} parent=1 // pred_check
      _
    $region47: #{tpu_custom_call.1} parent=1 // pred_check_branch
      %4344 = sbr.rel (0) target = $region49
    $region48: #{tpu_custom_call.1} parent=1 // pred_region
      %4345 = dma.done [#allocation12], 64
    $region49: #{tpu_custom_call.1} parent=1 // pred_fallthru
      _
    %4346 = vsyncpa [#allocation3], 1
    %4347 = vsyncpa [#allocation6], 1
    %4348 = vsyncpa [#allocation9], 1
    %4349 = vsyncpa [#allocation4], 1
    %4350 = vsyncpa [#allocation12], 1

</llo_original>
